<compile_context>
chip_gen: v6e
topology: v6e:2x2x1
jax: 0.10.0
libtpu: 0.0.40
codegen_flags: <defaults>
</compile_context>

<pallas_src>
import math

import numpy as np
import jax
import jax.numpy as jnp
from jax import lax
from jax.experimental import pallas as pl
from jax.experimental.pallas import tpu as pltpu


# ----------------------------------------------------------------------------
# Fused Sinkhorn kernel: one grid step == one batch element.
#   softmin(eps, C, h)[i] = -eps * logsumexp_j( h[j] - C[i, j] / eps )
# ----------------------------------------------------------------------------
def _sinkhorn_kernel(eps_ref, inv_eps_ref, x_ref, y_ref, loss_ref,
                     cxy_ref, cyx_ref, cxx_ref, cyy_ref):
    x = x_ref[0]                                   # (N, D)
    y = y_ref[0]                                   # (M, D)
    N = x.shape[0]
    M = y.shape[0]
    n_steps = eps_ref.shape[0]                     # static

    # --- pairwise cost C = 0.5*||.-.||^2, built ONCE per batch (cold path) ---
    def half_sqdist(p, q):
        pp = jnp.sum(p * p, axis=-1, keepdims=True)            # (n, 1)
        qq = jnp.sum(q * q, axis=-1)[None, :]                  # (1, m)
        pq = lax.dot_general(p, q, (((1,), (1,)), ((), ())),   # (n, m) on MXU
                             preferred_element_type=jnp.float32)
        # clamp tiny negative cancellation noise (true squared dist >= 0)
        return jnp.maximum(0.5 * (pp + qq) - pq, 0.0)

    cxy_ref[...] = half_sqdist(x, y)               # (N, M)
    cyx_ref[...] = half_sqdist(y, x)               # (M, N)
    cxx_ref[...] = half_sqdist(x, x)               # (N, N)  (debias)
    cyy_ref[...] = half_sqdist(y, y)               # (M, M)  (debias)

    # log of uniform weights (constant rows, hoisted out of the loop)
    a_row = jnp.full((1, N), -math.log(N), jnp.float32)
    b_row = jnp.full((1, M), -math.log(M), jnp.float32)

    def softmin(c_ref, h_row, eps, inv_eps):
        # h_row: (1, m) potentials over the reduced index; returns (1, n).
        z = h_row - c_ref[...] * inv_eps                         # (n, m)
        zmax = jnp.max(z, axis=-1, keepdims=True)                # (n, 1)
        lse = zmax + jnp.log(jnp.sum(jnp.exp(z - zmax),
                                     axis=-1, keepdims=True))    # (n, 1)
        return jnp.transpose(-eps * lse)                         # (1, n)

    # --- initialization at the largest epsilon (balanced OT, damping = 1) ---
    eps0 = eps_ref[0]
    inv0 = inv_eps_ref[0]
    f_ba = softmin(cxy_ref, b_row, eps0, inv0)     # (1, N)
    g_ab = softmin(cyx_ref, a_row, eps0, inv0)     # (1, M)
    f_aa = softmin(cxx_ref, a_row, eps0, inv0)     # (1, N)
    g_bb = softmin(cyy_ref, b_row, eps0, inv0)     # (1, M)

    # --- symmetric Sinkhorn loop with epsilon annealing (in-kernel) ---------
    def body(i, carry):
        f_ba, g_ab, f_aa, g_bb = carry
        eps = eps_ref[i]
        inv = inv_eps_ref[i]
        ft_ba = softmin(cxy_ref, b_row + g_ab * inv, eps, inv)
        gt_ab = softmin(cyx_ref, a_row + f_ba * inv, eps, inv)
        ft_aa = softmin(cxx_ref, a_row + f_aa * inv, eps, inv)
        gt_bb = softmin(cyy_ref, b_row + g_bb * inv, eps, inv)
        return (0.5 * (f_ba + ft_ba), 0.5 * (g_ab + gt_ab),
                0.5 * (f_aa + ft_aa), 0.5 * (g_bb + gt_bb))

    f_ba, g_ab, f_aa, g_bb = lax.fori_loop(0, n_steps, body,
                                           (f_ba, g_ab, f_aa, g_bb))

    # --- last extrapolation at eps = blur**p (no averaging) ------------------
    eps_l = eps_ref[n_steps - 1]
    inv_l = inv_eps_ref[n_steps - 1]
    f_ba_x = softmin(cxy_ref, b_row + g_ab * inv_l, eps_l, inv_l)
    g_ab_x = softmin(cyx_ref, a_row + f_ba * inv_l, eps_l, inv_l)
    f_aa_x = softmin(cxx_ref, a_row + f_aa * inv_l, eps_l, inv_l)
    g_bb_x = softmin(cyy_ref, b_row + g_bb * inv_l, eps_l, inv_l)

    # --- debiased Sinkhorn cost: <a, f_ba - f_aa> + <b, g_ab - g_bb> ---------
    loss = (jnp.sum(f_ba_x - f_aa_x, axis=-1, keepdims=True) * (1.0 / N)
            + jnp.sum(g_ab_x - g_bb_x, axis=-1, keepdims=True) * (1.0 / M))
    loss_ref[0] = loss                              # (1, 1) into (1, 1, 1) block


@jax.jit
def _sinkhorn_pallas(eps_arr, inv_eps_arr, x, y):
    B, N, D = x.shape
    M = y.shape[1]
    cost_bytes = 4 * (N * M + M * N + N * N + M * M)
    # explicit scoped-VMEM limit with headroom, capped below v7x's 64 MiB
    vmem_limit = int(min(56 * 2**20, max(16 * 2**20, 4 * cost_bytes)))
    out = pl.pallas_call(
        _sinkhorn_kernel,
        out_shape=jax.ShapeDtypeStruct((B, 1, 1), jnp.float32),
        grid=(B,),
        in_specs=[
            pl.BlockSpec(memory_space=pltpu.MemorySpace.SMEM),   # eps schedule
            pl.BlockSpec(memory_space=pltpu.MemorySpace.SMEM),   # 1/eps schedule
            pl.BlockSpec((1, N, D), lambda b: (b, 0, 0)),        # x points
            pl.BlockSpec((1, M, D), lambda b: (b, 0, 0)),        # y points
        ],
        out_specs=pl.BlockSpec((1, 1, 1), lambda b: (b, 0, 0)),
        scratch_shapes=[
            pltpu.VMEM((N, M), jnp.float32),                     # C(x, y)
            pltpu.VMEM((M, N), jnp.float32),                     # C(y, x)
            pltpu.VMEM((N, N), jnp.float32),                     # C(x, x)
            pltpu.VMEM((M, M), jnp.float32),                     # C(y, y)
        ],
        compiler_params=pltpu.CompilerParams(
            dimension_semantics=("parallel",),
            vmem_limit_bytes=vmem_limit,
        ),
    )(eps_arr, inv_eps_arr, x, y)
    return out.reshape(B)


# ----------------------------------------------------------------------------
# geomloss-style epsilon schedule + host wrapper
# ----------------------------------------------------------------------------
def _epsilon_schedule(p, diameter, blur, scaling):
    return (
        [diameter ** p]
        + [float(np.exp(e)) for e in
           np.arange(p * np.log(diameter), p * np.log(blur), p * np.log(scaling))]
        + [blur ** p]
    )


def emd_loss(x, y, blur=0.05, scaling=0.5, p=2, diameter=None):
    """Debiased Sinkhorn divergence between batched point clouds (B,N,D),(B,M,D)."""
    x = jnp.asarray(x, jnp.float32)
    y = jnp.asarray(y, jnp.float32)
    B, N, D = x.shape
    M = y.shape[1]

    # the fused kernel keeps the 4 cost matrices resident in VMEM
    assert 4 * (N * M + M * N + N * N + M * M) <= 24 * 2**20, (
        "point clouds too large for the cost-resident fused kernel")
    # TODO(synk): add an M-tiled streaming online-LSE variant for very large N/M.

    if diameter is None:
        # geomloss computes the joint diameter host-side (.item()); we do the
        # reduction on device and sync a single scalar.  Pass `diameter=` to
        # stay fully traceable.
        xf = x.reshape(-1, D)
        yf = y.reshape(-1, D)
        mins = jnp.minimum(jnp.min(xf, axis=0), jnp.min(yf, axis=0))
        maxs = jnp.maximum(jnp.max(xf, axis=0), jnp.max(yf, axis=0))
        diameter = float(jnp.sqrt(jnp.sum((maxs - mins) ** 2)))

    eps_np = np.asarray(_epsilon_schedule(p, float(diameter), blur, scaling),
                        np.float64)
    eps_arr = jnp.asarray(eps_np.astype(np.float32))
    inv_eps_arr = jnp.asarray((1.0 / eps_np).astype(np.float32))
    return _sinkhorn_pallas(eps_arr, inv_eps_arr, x, y)


# ----------------------------------------------------------------------------
# Pure-JAX (non-Pallas) reference for a correctness sanity check
# ----------------------------------------------------------------------------
def _softmin_ref(eps, C, h):
    z = h[:, None, :] - C / eps
    zmax = jnp.max(z, axis=-1, keepdims=True)
    return -eps * (zmax[..., 0] + jnp.log(jnp.sum(jnp.exp(z - zmax), axis=-1)))


def _emd_loss_reference(x, y, blur=0.05, scaling=0.5, p=2):
    x = jnp.asarray(x, jnp.float32)
    y = jnp.asarray(y, jnp.float32)
    B, N, D = x.shape
    M = y.shape[1]
    Cxy = 0.5 * jnp.sum((x[:, :, None, :] - y[:, None, :, :]) ** 2, -1)
    Cyx = jnp.swapaxes(Cxy, 1, 2)
    Cxx = 0.5 * jnp.sum((x[:, :, None, :] - x[:, None, :, :]) ** 2, -1)
    Cyy = 0.5 * jnp.sum((y[:, :, None, :] - y[:, None, :, :]) ** 2, -1)
    a_log = jnp.full((B, N), -math.log(N), jnp.float32)
    b_log = jnp.full((B, M), -math.log(M), jnp.float32)

    xf = x.reshape(-1, D)
    yf = y.reshape(-1, D)
    mins = jnp.minimum(jnp.min(xf, 0), jnp.min(yf, 0))
    maxs = jnp.maximum(jnp.max(xf, 0), jnp.max(yf, 0))
    diameter = float(jnp.sqrt(jnp.sum((maxs - mins) ** 2)))
    eps_list = _epsilon_schedule(p, diameter, blur, scaling)

    eps = eps_list[0]
    f_ba = _softmin_ref(eps, Cxy, b_log)
    g_ab = _softmin_ref(eps, Cyx, a_log)
    f_aa = _softmin_ref(eps, Cxx, a_log)
    g_bb = _softmin_ref(eps, Cyy, b_log)
    for eps in eps_list:
        ft_ba = _softmin_ref(eps, Cxy, b_log + g_ab / eps)
        gt_ab = _softmin_ref(eps, Cyx, a_log + f_ba / eps)
        ft_aa = _softmin_ref(eps, Cxx, a_log + f_aa / eps)
        gt_bb = _softmin_ref(eps, Cyy, b_log + g_bb / eps)
        f_ba, g_ab = 0.5 * (f_ba + ft_ba), 0.5 * (g_ab + gt_ab)
        f_aa, g_bb = 0.5 * (f_aa + ft_aa), 0.5 * (g_bb + gt_bb)
    eps = eps_list[-1]
    f_ba, g_ab = (_softmin_ref(eps, Cxy, b_log + g_ab / eps),
                  _softmin_ref(eps, Cyx, a_log + f_ba / eps))
    f_aa = _softmin_ref(eps, Cxx, a_log + f_aa / eps)
    g_bb = _softmin_ref(eps, Cyy, b_log + g_bb / eps)
    return jnp.mean(f_ba - f_aa, axis=-1) + jnp.mean(g_ab - g_bb, axis=-1)


if __name__ == "__main__":
    key = jax.random.PRNGKey(0)
    k1, k2 = jax.random.split(key)
    B, N, M, D = 2, 64, 64, 3            # small batched 3-D point clouds
    x = jax.random.normal(k1, (B, N, D), jnp.float32)
    y = jax.random.normal(k2, (B, M, D), jnp.float32) + 0.5

    loss = jax.block_until_ready(emd_loss(x, y))     # shape (B,)
    assert loss.shape == (B,) and bool(jnp.all(jnp.isfinite(loss)))

    ref = jax.block_until_ready(_emd_loss_reference(x, y))
    assert np.allclose(np.asarray(loss), np.asarray(ref), rtol=1e-2, atol=1e-3), \
        (np.asarray(loss), np.asarray(ref))

    print("KERNEL_OK")
</pallas_src>

<mosaic_0001>
module attributes {stable_mosaic.version = 11 : i64} {
  func.func @_sinkhorn_kernel(%arg0: i32, %arg1: memref<10xf32, #tpu.memory_space<smem>>, %arg2: memref<10xf32, #tpu.memory_space<smem>>, %arg3: memref<1x64x3xf32, #tpu.memory_space<vmem>>, %arg4: memref<1x64x3xf32, #tpu.memory_space<vmem>>, %arg5: memref<1x1x1xf32, #tpu.memory_space<vmem>>, %arg6: memref<64x64xf32, #tpu.memory_space<vmem>>, %arg7: memref<64x64xf32, #tpu.memory_space<vmem>>, %arg8: memref<64x64xf32, #tpu.memory_space<vmem>>, %arg9: memref<64x64xf32, #tpu.memory_space<vmem>>) attributes {dimension_semantics = [#tpu.dimension_semantics<parallel>], iteration_bounds = array<i64: 2>, scalar_prefetch = 0 : i64, scratch_operands = 4 : i64, tpu.core_type = #tpu.core_type<tc>, window_params = [{transform_indices = @transform_0, window_bounds = array<i64: 10>}, {transform_indices = @transform_1, window_bounds = array<i64: 10>}, {transform_indices = @transform_2, window_bounds = array<i64: 1, 64, 3>}, {transform_indices = @transform_3, window_bounds = array<i64: 1, 64, 3>}, {transform_indices = @transform_4, window_bounds = array<i64: 1, 1, 1>}]} {
    %c0 = arith.constant 0 : index
    %c0_0 = arith.constant 0 : index
    %c0_1 = arith.constant 0 : index
    %0 = vector.load %arg3[%c0, %c0_0, %c0_1] : memref<1x64x3xf32, #tpu.memory_space<vmem>>, vector<1x64x3xf32>
    %1 = vector.shape_cast %0 : vector<1x64x3xf32> to vector<64x3xf32>
    %c0_2 = arith.constant 0 : index
    %c0_3 = arith.constant 0 : index
    %c0_4 = arith.constant 0 : index
    %2 = vector.load %arg4[%c0_2, %c0_3, %c0_4] : memref<1x64x3xf32, #tpu.memory_space<vmem>>, vector<1x64x3xf32>
    %3 = vector.shape_cast %2 : vector<1x64x3xf32> to vector<64x3xf32>
    %4 = arith.mulf %1, %1 : vector<64x3xf32>
    %cst = arith.constant dense<0.000000e+00> : vector<64xf32>
    %5 = vector.multi_reduction <add>, %4, %cst [1] : vector<64x3xf32> to vector<64xf32>
    %6 = vector.shape_cast %5 : vector<64xf32> to vector<64x1xf32>
    %7 = arith.mulf %3, %3 : vector<64x3xf32>
    %cst_5 = arith.constant dense<0.000000e+00> : vector<64xf32>
    %8 = vector.multi_reduction <add>, %7, %cst_5 [1] : vector<64x3xf32> to vector<64xf32>
    %9 = vector.shape_cast %8 : vector<64xf32> to vector<1x64xf32>
    %cst_6 = arith.constant dense<0.000000e+00> : vector<64x64xf32>
    %10 = tpu.matmul %1, %3, %cst_6 {dimension_numbers = #tpu.dot_dimension_numbers<[1], [1], [0], [0], [0, 0, 1, 0], [], []>} : vector<64x3xf32>, vector<64x3xf32>, vector<64x64xf32> -> vector<64x64xf32>
    %11 = vector.broadcast %6 : vector<64x1xf32> to vector<64x64xf32>
    %12 = vector.broadcast %9 : vector<1x64xf32> to vector<64x64xf32>
    %13 = arith.addf %11, %12 : vector<64x64xf32>
    %cst_7 = arith.constant 5.000000e-01 : f32
    %14 = vector.broadcast %cst_7 : f32 to vector<64x64xf32>
    %15 = arith.mulf %14, %13 : vector<64x64xf32>
    %16 = arith.subf %15, %10 : vector<64x64xf32>
    %cst_8 = arith.constant 0.000000e+00 : f32
    %17 = vector.broadcast %cst_8 : f32 to vector<64x64xf32>
    %18 = arith.maximumf %16, %17 : vector<64x64xf32>
    %c0_9 = arith.constant 0 : index
    %c0_10 = arith.constant 0 : index
    %19 = vector.load %arg6[%c0_9, %c0_10] : memref<64x64xf32, #tpu.memory_space<vmem>>, vector<64x64xf32>
    tpu.vector_store %arg6[%c0_9, %c0_10], %18 {strides = array<i32>} : memref<64x64xf32, #tpu.memory_space<vmem>>, vector<64x64xf32>,
    %20 = arith.mulf %3, %3 : vector<64x3xf32>
    %cst_11 = arith.constant dense<0.000000e+00> : vector<64xf32>
    %21 = vector.multi_reduction <add>, %20, %cst_11 [1] : vector<64x3xf32> to vector<64xf32>
    %22 = vector.shape_cast %21 : vector<64xf32> to vector<64x1xf32>
    %23 = arith.mulf %1, %1 : vector<64x3xf32>
    %cst_12 = arith.constant dense<0.000000e+00> : vector<64xf32>
    %24 = vector.multi_reduction <add>, %23, %cst_12 [1] : vector<64x3xf32> to vector<64xf32>
    %25 = vector.shape_cast %24 : vector<64xf32> to vector<1x64xf32>
    %cst_13 = arith.constant dense<0.000000e+00> : vector<64x64xf32>
    %26 = tpu.matmul %3, %1, %cst_13 {dimension_numbers = #tpu.dot_dimension_numbers<[1], [1], [0], [0], [0, 0, 1, 0], [], []>} : vector<64x3xf32>, vector<64x3xf32>, vector<64x64xf32> -> vector<64x64xf32>
    %27 = vector.broadcast %22 : vector<64x1xf32> to vector<64x64xf32>
    %28 = vector.broadcast %25 : vector<1x64xf32> to vector<64x64xf32>
    %29 = arith.addf %27, %28 : vector<64x64xf32>
    %cst_14 = arith.constant 5.000000e-01 : f32
    %30 = vector.broadcast %cst_14 : f32 to vector<64x64xf32>
    %31 = arith.mulf %30, %29 : vector<64x64xf32>
    %32 = arith.subf %31, %26 : vector<64x64xf32>
    %cst_15 = arith.constant 0.000000e+00 : f32
    %33 = vector.broadcast %cst_15 : f32 to vector<64x64xf32>
    %34 = arith.maximumf %32, %33 : vector<64x64xf32>
    %c0_16 = arith.constant 0 : index
    %c0_17 = arith.constant 0 : index
    %35 = vector.load %arg7[%c0_16, %c0_17] : memref<64x64xf32, #tpu.memory_space<vmem>>, vector<64x64xf32>
    tpu.vector_store %arg7[%c0_16, %c0_17], %34 {strides = array<i32>} : memref<64x64xf32, #tpu.memory_space<vmem>>, vector<64x64xf32>,
    %36 = arith.mulf %1, %1 : vector<64x3xf32>
    %cst_18 = arith.constant dense<0.000000e+00> : vector<64xf32>
    %37 = vector.multi_reduction <add>, %36, %cst_18 [1] : vector<64x3xf32> to vector<64xf32>
    %38 = vector.shape_cast %37 : vector<64xf32> to vector<64x1xf32>
    %39 = arith.mulf %1, %1 : vector<64x3xf32>
    %cst_19 = arith.constant dense<0.000000e+00> : vector<64xf32>
    %40 = vector.multi_reduction <add>, %39, %cst_19 [1] : vector<64x3xf32> to vector<64xf32>
    %41 = vector.shape_cast %40 : vector<64xf32> to vector<1x64xf32>
    %cst_20 = arith.constant dense<0.000000e+00> : vector<64x64xf32>
    %42 = tpu.matmul %1, %1, %cst_20 {dimension_numbers = #tpu.dot_dimension_numbers<[1], [1], [0], [0], [0, 0, 1, 0], [], []>} : vector<64x3xf32>, vector<64x3xf32>, vector<64x64xf32> -> vector<64x64xf32>
    %43 = vector.broadcast %38 : vector<64x1xf32> to vector<64x64xf32>
    %44 = vector.broadcast %41 : vector<1x64xf32> to vector<64x64xf32>
    %45 = arith.addf %43, %44 : vector<64x64xf32>
    %cst_21 = arith.constant 5.000000e-01 : f32
    %46 = vector.broadcast %cst_21 : f32 to vector<64x64xf32>
    %47 = arith.mulf %46, %45 : vector<64x64xf32>
    %48 = arith.subf %47, %42 : vector<64x64xf32>
    %cst_22 = arith.constant 0.000000e+00 : f32
    %49 = vector.broadcast %cst_22 : f32 to vector<64x64xf32>
    %50 = arith.maximumf %48, %49 : vector<64x64xf32>
    %c0_23 = arith.constant 0 : index
    %c0_24 = arith.constant 0 : index
    %51 = vector.load %arg8[%c0_23, %c0_24] : memref<64x64xf32, #tpu.memory_space<vmem>>, vector<64x64xf32>
    tpu.vector_store %arg8[%c0_23, %c0_24], %50 {strides = array<i32>} : memref<64x64xf32, #tpu.memory_space<vmem>>, vector<64x64xf32>,
    %52 = arith.mulf %3, %3 : vector<64x3xf32>
    %cst_25 = arith.constant dense<0.000000e+00> : vector<64xf32>
    %53 = vector.multi_reduction <add>, %52, %cst_25 [1] : vector<64x3xf32> to vector<64xf32>
    %54 = vector.shape_cast %53 : vector<64xf32> to vector<64x1xf32>
    %55 = arith.mulf %3, %3 : vector<64x3xf32>
    %cst_26 = arith.constant dense<0.000000e+00> : vector<64xf32>
    %56 = vector.multi_reduction <add>, %55, %cst_26 [1] : vector<64x3xf32> to vector<64xf32>
    %57 = vector.shape_cast %56 : vector<64xf32> to vector<1x64xf32>
    %cst_27 = arith.constant dense<0.000000e+00> : vector<64x64xf32>
    %58 = tpu.matmul %3, %3, %cst_27 {dimension_numbers = #tpu.dot_dimension_numbers<[1], [1], [0], [0], [0, 0, 1, 0], [], []>} : vector<64x3xf32>, vector<64x3xf32>, vector<64x64xf32> -> vector<64x64xf32>
    %59 = vector.broadcast %54 : vector<64x1xf32> to vector<64x64xf32>
    %60 = vector.broadcast %57 : vector<1x64xf32> to vector<64x64xf32>
    %61 = arith.addf %59, %60 : vector<64x64xf32>
    %cst_28 = arith.constant 5.000000e-01 : f32
    %62 = vector.broadcast %cst_28 : f32 to vector<64x64xf32>
    %63 = arith.mulf %62, %61 : vector<64x64xf32>
    %64 = arith.subf %63, %58 : vector<64x64xf32>
    %cst_29 = arith.constant 0.000000e+00 : f32
    %65 = vector.broadcast %cst_29 : f32 to vector<64x64xf32>
    %66 = arith.maximumf %64, %65 : vector<64x64xf32>
    %c0_30 = arith.constant 0 : index
    %c0_31 = arith.constant 0 : index
    %67 = vector.load %arg9[%c0_30, %c0_31] : memref<64x64xf32, #tpu.memory_space<vmem>>, vector<64x64xf32>
    tpu.vector_store %arg9[%c0_30, %c0_31], %66 {strides = array<i32>} : memref<64x64xf32, #tpu.memory_space<vmem>>, vector<64x64xf32>,
    %cst_32 = arith.constant -4.15888309 : f32
    %68 = vector.broadcast %cst_32 : f32 to vector<1x64xf32>
    %cst_33 = arith.constant -4.15888309 : f32
    %69 = vector.broadcast %cst_33 : f32 to vector<1x64xf32>
    %c0_34 = arith.constant 0 : index
    %70 = memref.load %arg1[%c0_34] : memref<10xf32, #tpu.memory_space<smem>>
    %c0_35 = arith.constant 0 : index
    %71 = memref.load %arg2[%c0_35] : memref<10xf32, #tpu.memory_space<smem>>
    %c0_36 = arith.constant 0 : index
    %c0_37 = arith.constant 0 : index
    %72 = vector.load %arg6[%c0_36, %c0_37] : memref<64x64xf32, #tpu.memory_space<vmem>>, vector<64x64xf32>
    %73 = vector.broadcast %71 : f32 to vector<64x64xf32>
    %74 = arith.mulf %72, %73 : vector<64x64xf32>
    %75 = vector.broadcast %69 : vector<1x64xf32> to vector<64x64xf32>
    %76 = arith.subf %75, %74 : vector<64x64xf32>
    %cst_38 = arith.constant dense<0xFF800000> : vector<64xf32>
    %77 = vector.multi_reduction <maximumf>, %76, %cst_38 [1] : vector<64x64xf32> to vector<64xf32>
    %78 = vector.shape_cast %77 : vector<64xf32> to vector<64x1xf32>
    %79 = vector.broadcast %78 : vector<64x1xf32> to vector<64x64xf32>
    %80 = arith.subf %76, %79 : vector<64x64xf32>
    %81 = math.exp %80 : vector<64x64xf32>
    %cst_39 = arith.constant dense<0.000000e+00> : vector<64xf32>
    %82 = vector.multi_reduction <add>, %81, %cst_39 [1] : vector<64x64xf32> to vector<64xf32>
    %83 = vector.shape_cast %82 : vector<64xf32> to vector<64x1xf32>
    %84 = math.log %83 : vector<64x1xf32>
    %85 = arith.addf %78, %84 : vector<64x1xf32>
    %cst_40 = arith.constant 0.000000e+00 : f32
    %86 = arith.subf %cst_40, %70 : f32
    %87 = vector.broadcast %86 : f32 to vector<64x1xf32>
    %88 = arith.mulf %87, %85 : vector<64x1xf32>
    %89 = tpu.transpose %88, [1, 0] : vector<64x1xf32> -> vector<1x64xf32>
    %c0_41 = arith.constant 0 : index
    %c0_42 = arith.constant 0 : index
    %90 = vector.load %arg7[%c0_41, %c0_42] : memref<64x64xf32, #tpu.memory_space<vmem>>, vector<64x64xf32>
    %91 = vector.broadcast %71 : f32 to vector<64x64xf32>
    %92 = arith.mulf %90, %91 : vector<64x64xf32>
    %93 = vector.broadcast %68 : vector<1x64xf32> to vector<64x64xf32>
    %94 = arith.subf %93, %92 : vector<64x64xf32>
    %cst_43 = arith.constant dense<0xFF800000> : vector<64xf32>
    %95 = vector.multi_reduction <maximumf>, %94, %cst_43 [1] : vector<64x64xf32> to vector<64xf32>
    %96 = vector.shape_cast %95 : vector<64xf32> to vector<64x1xf32>
    %97 = vector.broadcast %96 : vector<64x1xf32> to vector<64x64xf32>
    %98 = arith.subf %94, %97 : vector<64x64xf32>
    %99 = math.exp %98 : vector<64x64xf32>
    %cst_44 = arith.constant dense<0.000000e+00> : vector<64xf32>
    %100 = vector.multi_reduction <add>, %99, %cst_44 [1] : vector<64x64xf32> to vector<64xf32>
    %101 = vector.shape_cast %100 : vector<64xf32> to vector<64x1xf32>
    %102 = math.log %101 : vector<64x1xf32>
    %103 = arith.addf %96, %102 : vector<64x1xf32>
    %cst_45 = arith.constant 0.000000e+00 : f32
    %104 = arith.subf %cst_45, %70 : f32
    %105 = vector.broadcast %104 : f32 to vector<64x1xf32>
    %106 = arith.mulf %105, %103 : vector<64x1xf32>
    %107 = tpu.transpose %106, [1, 0] : vector<64x1xf32> -> vector<1x64xf32>
    %c0_46 = arith.constant 0 : index
    %c0_47 = arith.constant 0 : index
    %108 = vector.load %arg8[%c0_46, %c0_47] : memref<64x64xf32, #tpu.memory_space<vmem>>, vector<64x64xf32>
    %109 = vector.broadcast %71 : f32 to vector<64x64xf32>
    %110 = arith.mulf %108, %109 : vector<64x64xf32>
    %111 = vector.broadcast %68 : vector<1x64xf32> to vector<64x64xf32>
    %112 = arith.subf %111, %110 : vector<64x64xf32>
    %cst_48 = arith.constant dense<0xFF800000> : vector<64xf32>
    %113 = vector.multi_reduction <maximumf>, %112, %cst_48 [1] : vector<64x64xf32> to vector<64xf32>
    %114 = vector.shape_cast %113 : vector<64xf32> to vector<64x1xf32>
    %115 = vector.broadcast %114 : vector<64x1xf32> to vector<64x64xf32>
    %116 = arith.subf %112, %115 : vector<64x64xf32>
    %117 = math.exp %116 : vector<64x64xf32>
    %cst_49 = arith.constant dense<0.000000e+00> : vector<64xf32>
    %118 = vector.multi_reduction <add>, %117, %cst_49 [1] : vector<64x64xf32> to vector<64xf32>
    %119 = vector.shape_cast %118 : vector<64xf32> to vector<64x1xf32>
    %120 = math.log %119 : vector<64x1xf32>
    %121 = arith.addf %114, %120 : vector<64x1xf32>
    %cst_50 = arith.constant 0.000000e+00 : f32
    %122 = arith.subf %cst_50, %70 : f32
    %123 = vector.broadcast %122 : f32 to vector<64x1xf32>
    %124 = arith.mulf %123, %121 : vector<64x1xf32>
    %125 = tpu.transpose %124, [1, 0] : vector<64x1xf32> -> vector<1x64xf32>
    %c0_51 = arith.constant 0 : index
    %c0_52 = arith.constant 0 : index
    %126 = vector.load %arg9[%c0_51, %c0_52] : memref<64x64xf32, #tpu.memory_space<vmem>>, vector<64x64xf32>
    %127 = vector.broadcast %71 : f32 to vector<64x64xf32>
    %128 = arith.mulf %126, %127 : vector<64x64xf32>
    %129 = vector.broadcast %69 : vector<1x64xf32> to vector<64x64xf32>
    %130 = arith.subf %129, %128 : vector<64x64xf32>
    %cst_53 = arith.constant dense<0xFF800000> : vector<64xf32>
    %131 = vector.multi_reduction <maximumf>, %130, %cst_53 [1] : vector<64x64xf32> to vector<64xf32>
    %132 = vector.shape_cast %131 : vector<64xf32> to vector<64x1xf32>
    %133 = vector.broadcast %132 : vector<64x1xf32> to vector<64x64xf32>
    %134 = arith.subf %130, %133 : vector<64x64xf32>
    %135 = math.exp %134 : vector<64x64xf32>
    %cst_54 = arith.constant dense<0.000000e+00> : vector<64xf32>
    %136 = vector.multi_reduction <add>, %135, %cst_54 [1] : vector<64x64xf32> to vector<64xf32>
    %137 = vector.shape_cast %136 : vector<64xf32> to vector<64x1xf32>
    %138 = math.log %137 : vector<64x1xf32>
    %139 = arith.addf %132, %138 : vector<64x1xf32>
    %cst_55 = arith.constant 0.000000e+00 : f32
    %140 = arith.subf %cst_55, %70 : f32
    %141 = vector.broadcast %140 : f32 to vector<64x1xf32>
    %142 = arith.mulf %141, %139 : vector<64x1xf32>
    %143 = tpu.transpose %142, [1, 0] : vector<64x1xf32> -> vector<1x64xf32>
    %c0_i32 = arith.constant 0 : i32
    %c10_i32 = arith.constant 10 : i32
    %144 = arith.addi %c0_i32, %c10_i32 : i32
    %c1_i32 = arith.constant 1 : i32
    %145:4 = scf.for %arg10 = %c0_i32 to %144 step %c1_i32 iter_args(%arg11 = %89, %arg12 = %107, %arg13 = %125, %arg14 = %143) -> (vector<1x64xf32>, vector<1x64xf32>, vector<1x64xf32>, vector<1x64xf32>)  : i32 {
      %246 = arith.index_cast %arg10 : i32 to index
      %247 = memref.load %arg1[%246] : memref<10xf32, #tpu.memory_space<smem>>
      %248 = arith.index_cast %arg10 : i32 to index
      %249 = memref.load %arg2[%248] : memref<10xf32, #tpu.memory_space<smem>>
      %250 = vector.broadcast %249 : f32 to vector<1x64xf32>
      %251 = arith.mulf %arg12, %250 : vector<1x64xf32>
      %252 = arith.addf %69, %251 : vector<1x64xf32>
      %c0_85 = arith.constant 0 : index
      %c0_86 = arith.constant 0 : index
      %253 = vector.load %arg6[%c0_85, %c0_86] : memref<64x64xf32, #tpu.memory_space<vmem>>, vector<64x64xf32>
      %254 = vector.broadcast %249 : f32 to vector<64x64xf32>
      %255 = arith.mulf %253, %254 : vector<64x64xf32>
      %256 = vector.broadcast %252 : vector<1x64xf32> to vector<64x64xf32>
      %257 = arith.subf %256, %255 : vector<64x64xf32>
      %cst_87 = arith.constant dense<0xFF800000> : vector<64xf32>
      %258 = vector.multi_reduction <maximumf>, %257, %cst_87 [1] : vector<64x64xf32> to vector<64xf32>
      %259 = vector.shape_cast %258 : vector<64xf32> to vector<64x1xf32>
      %260 = vector.broadcast %259 : vector<64x1xf32> to vector<64x64xf32>
      %261 = arith.subf %257, %260 : vector<64x64xf32>
      %262 = math.exp %261 : vector<64x64xf32>
      %cst_88 = arith.constant dense<0.000000e+00> : vector<64xf32>
      %263 = vector.multi_reduction <add>, %262, %cst_88 [1] : vector<64x64xf32> to vector<64xf32>
      %264 = vector.shape_cast %263 : vector<64xf32> to vector<64x1xf32>
      %265 = math.log %264 : vector<64x1xf32>
      %266 = arith.addf %259, %265 : vector<64x1xf32>
      %cst_89 = arith.constant 0.000000e+00 : f32
      %267 = arith.subf %cst_89, %247 : f32
      %268 = vector.broadcast %267 : f32 to vector<64x1xf32>
      %269 = arith.mulf %268, %266 : vector<64x1xf32>
      %270 = tpu.transpose %269, [1, 0] : vector<64x1xf32> -> vector<1x64xf32>
      %271 = vector.broadcast %249 : f32 to vector<1x64xf32>
      %272 = arith.mulf %arg11, %271 : vector<1x64xf32>
      %273 = arith.addf %68, %272 : vector<1x64xf32>
      %c0_90 = arith.constant 0 : index
      %c0_91 = arith.constant 0 : index
      %274 = vector.load %arg7[%c0_90, %c0_91] : memref<64x64xf32, #tpu.memory_space<vmem>>, vector<64x64xf32>
      %275 = vector.broadcast %249 : f32 to vector<64x64xf32>
      %276 = arith.mulf %274, %275 : vector<64x64xf32>
      %277 = vector.broadcast %273 : vector<1x64xf32> to vector<64x64xf32>
      %278 = arith.subf %277, %276 : vector<64x64xf32>
      %cst_92 = arith.constant dense<0xFF800000> : vector<64xf32>
      %279 = vector.multi_reduction <maximumf>, %278, %cst_92 [1] : vector<64x64xf32> to vector<64xf32>
      %280 = vector.shape_cast %279 : vector<64xf32> to vector<64x1xf32>
      %281 = vector.broadcast %280 : vector<64x1xf32> to vector<64x64xf32>
      %282 = arith.subf %278, %281 : vector<64x64xf32>
      %283 = math.exp %282 : vector<64x64xf32>
      %cst_93 = arith.constant dense<0.000000e+00> : vector<64xf32>
      %284 = vector.multi_reduction <add>, %283, %cst_93 [1] : vector<64x64xf32> to vector<64xf32>
      %285 = vector.shape_cast %284 : vector<64xf32> to vector<64x1xf32>
      %286 = math.log %285 : vector<64x1xf32>
      %287 = arith.addf %280, %286 : vector<64x1xf32>
      %cst_94 = arith.constant 0.000000e+00 : f32
      %288 = arith.subf %cst_94, %247 : f32
      %289 = vector.broadcast %288 : f32 to vector<64x1xf32>
      %290 = arith.mulf %289, %287 : vector<64x1xf32>
      %291 = tpu.transpose %290, [1, 0] : vector<64x1xf32> -> vector<1x64xf32>
      %292 = vector.broadcast %249 : f32 to vector<1x64xf32>
      %293 = arith.mulf %arg13, %292 : vector<1x64xf32>
      %294 = arith.addf %68, %293 : vector<1x64xf32>
      %c0_95 = arith.constant 0 : index
      %c0_96 = arith.constant 0 : index
      %295 = vector.load %arg8[%c0_95, %c0_96] : memref<64x64xf32, #tpu.memory_space<vmem>>, vector<64x64xf32>
      %296 = vector.broadcast %249 : f32 to vector<64x64xf32>
      %297 = arith.mulf %295, %296 : vector<64x64xf32>
      %298 = vector.broadcast %294 : vector<1x64xf32> to vector<64x64xf32>
      %299 = arith.subf %298, %297 : vector<64x64xf32>
      %cst_97 = arith.constant dense<0xFF800000> : vector<64xf32>
      %300 = vector.multi_reduction <maximumf>, %299, %cst_97 [1] : vector<64x64xf32> to vector<64xf32>
      %301 = vector.shape_cast %300 : vector<64xf32> to vector<64x1xf32>
      %302 = vector.broadcast %301 : vector<64x1xf32> to vector<64x64xf32>
      %303 = arith.subf %299, %302 : vector<64x64xf32>
      %304 = math.exp %303 : vector<64x64xf32>
      %cst_98 = arith.constant dense<0.000000e+00> : vector<64xf32>
      %305 = vector.multi_reduction <add>, %304, %cst_98 [1] : vector<64x64xf32> to vector<64xf32>
      %306 = vector.shape_cast %305 : vector<64xf32> to vector<64x1xf32>
      %307 = math.log %306 : vector<64x1xf32>
      %308 = arith.addf %301, %307 : vector<64x1xf32>
      %cst_99 = arith.constant 0.000000e+00 : f32
      %309 = arith.subf %cst_99, %247 : f32
      %310 = vector.broadcast %309 : f32 to vector<64x1xf32>
      %311 = arith.mulf %310, %308 : vector<64x1xf32>
      %312 = tpu.transpose %311, [1, 0] : vector<64x1xf32> -> vector<1x64xf32>
      %313 = vector.broadcast %249 : f32 to vector<1x64xf32>
      %314 = arith.mulf %arg14, %313 : vector<1x64xf32>
      %315 = arith.addf %69, %314 : vector<1x64xf32>
      %c0_100 = arith.constant 0 : index
      %c0_101 = arith.constant 0 : index
      %316 = vector.load %arg9[%c0_100, %c0_101] : memref<64x64xf32, #tpu.memory_space<vmem>>, vector<64x64xf32>
      %317 = vector.broadcast %249 : f32 to vector<64x64xf32>
      %318 = arith.mulf %316, %317 : vector<64x64xf32>
      %319 = vector.broadcast %315 : vector<1x64xf32> to vector<64x64xf32>
      %320 = arith.subf %319, %318 : vector<64x64xf32>
      %cst_102 = arith.constant dense<0xFF800000> : vector<64xf32>
      %321 = vector.multi_reduction <maximumf>, %320, %cst_102 [1] : vector<64x64xf32> to vector<64xf32>
      %322 = vector.shape_cast %321 : vector<64xf32> to vector<64x1xf32>
      %323 = vector.broadcast %322 : vector<64x1xf32> to vector<64x64xf32>
      %324 = arith.subf %320, %323 : vector<64x64xf32>
      %325 = math.exp %324 : vector<64x64xf32>
      %cst_103 = arith.constant dense<0.000000e+00> : vector<64xf32>
      %326 = vector.multi_reduction <add>, %325, %cst_103 [1] : vector<64x64xf32> to vector<64xf32>
      %327 = vector.shape_cast %326 : vector<64xf32> to vector<64x1xf32>
      %328 = math.log %327 : vector<64x1xf32>
      %329 = arith.addf %322, %328 : vector<64x1xf32>
      %cst_104 = arith.constant 0.000000e+00 : f32
      %330 = arith.subf %cst_104, %247 : f32
      %331 = vector.broadcast %330 : f32 to vector<64x1xf32>
      %332 = arith.mulf %331, %329 : vector<64x1xf32>
      %333 = tpu.transpose %332, [1, 0] : vector<64x1xf32> -> vector<1x64xf32>
      %334 = arith.addf %arg11, %270 : vector<1x64xf32>
      %cst_105 = arith.constant 5.000000e-01 : f32
      %335 = vector.broadcast %cst_105 : f32 to vector<1x64xf32>
      %336 = arith.mulf %335, %334 : vector<1x64xf32>
      %337 = arith.addf %arg12, %291 : vector<1x64xf32>
      %cst_106 = arith.constant 5.000000e-01 : f32
      %338 = vector.broadcast %cst_106 : f32 to vector<1x64xf32>
      %339 = arith.mulf %338, %337 : vector<1x64xf32>
      %340 = arith.addf %arg13, %312 : vector<1x64xf32>
      %cst_107 = arith.constant 5.000000e-01 : f32
      %341 = vector.broadcast %cst_107 : f32 to vector<1x64xf32>
      %342 = arith.mulf %341, %340 : vector<1x64xf32>
      %343 = arith.addf %arg14, %333 : vector<1x64xf32>
      %cst_108 = arith.constant 5.000000e-01 : f32
      %344 = vector.broadcast %cst_108 : f32 to vector<1x64xf32>
      %345 = arith.mulf %344, %343 : vector<1x64xf32>
      scf.yield %336, %339, %342, %345 : vector<1x64xf32>, vector<1x64xf32>, vector<1x64xf32>, vector<1x64xf32>
    }
    %c10_i32_56 = arith.constant 10 : i32
    %c9 = arith.constant 9 : index
    %146 = memref.load %arg1[%c9] : memref<10xf32, #tpu.memory_space<smem>>
    %c9_57 = arith.constant 9 : index
    %147 = memref.load %arg2[%c9_57] : memref<10xf32, #tpu.memory_space<smem>>
    %148 = vector.broadcast %147 : f32 to vector<1x64xf32>
    %149 = arith.mulf %145#1, %148 : vector<1x64xf32>
    %150 = arith.addf %69, %149 : vector<1x64xf32>
    %c0_58 = arith.constant 0 : index
    %c0_59 = arith.constant 0 : index
    %151 = vector.load %arg6[%c0_58, %c0_59] : memref<64x64xf32, #tpu.memory_space<vmem>>, vector<64x64xf32>
    %152 = vector.broadcast %147 : f32 to vector<64x64xf32>
    %153 = arith.mulf %151, %152 : vector<64x64xf32>
    %154 = vector.broadcast %150 : vector<1x64xf32> to vector<64x64xf32>
    %155 = arith.subf %154, %153 : vector<64x64xf32>
    %cst_60 = arith.constant dense<0xFF800000> : vector<64xf32>
    %156 = vector.multi_reduction <maximumf>, %155, %cst_60 [1] : vector<64x64xf32> to vector<64xf32>
    %157 = vector.shape_cast %156 : vector<64xf32> to vector<64x1xf32>
    %158 = vector.broadcast %157 : vector<64x1xf32> to vector<64x64xf32>
    %159 = arith.subf %155, %158 : vector<64x64xf32>
    %160 = math.exp %159 : vector<64x64xf32>
    %cst_61 = arith.constant dense<0.000000e+00> : vector<64xf32>
    %161 = vector.multi_reduction <add>, %160, %cst_61 [1] : vector<64x64xf32> to vector<64xf32>
    %162 = vector.shape_cast %161 : vector<64xf32> to vector<64x1xf32>
    %163 = math.log %162 : vector<64x1xf32>
    %164 = arith.addf %157, %163 : vector<64x1xf32>
    %cst_62 = arith.constant 0.000000e+00 : f32
    %165 = arith.subf %cst_62, %146 : f32
    %166 = vector.broadcast %165 : f32 to vector<64x1xf32>
    %167 = arith.mulf %166, %164 : vector<64x1xf32>
    %168 = tpu.transpose %167, [1, 0] : vector<64x1xf32> -> vector<1x64xf32>
    %169 = vector.broadcast %147 : f32 to vector<1x64xf32>
    %170 = arith.mulf %145#0, %169 : vector<1x64xf32>
    %171 = arith.addf %68, %170 : vector<1x64xf32>
    %c0_63 = arith.constant 0 : index
    %c0_64 = arith.constant 0 : index
    %172 = vector.load %arg7[%c0_63, %c0_64] : memref<64x64xf32, #tpu.memory_space<vmem>>, vector<64x64xf32>
    %173 = vector.broadcast %147 : f32 to vector<64x64xf32>
    %174 = arith.mulf %172, %173 : vector<64x64xf32>
    %175 = vector.broadcast %171 : vector<1x64xf32> to vector<64x64xf32>
    %176 = arith.subf %175, %174 : vector<64x64xf32>
    %cst_65 = arith.constant dense<0xFF800000> : vector<64xf32>
    %177 = vector.multi_reduction <maximumf>, %176, %cst_65 [1] : vector<64x64xf32> to vector<64xf32>
    %178 = vector.shape_cast %177 : vector<64xf32> to vector<64x1xf32>
    %179 = vector.broadcast %178 : vector<64x1xf32> to vector<64x64xf32>
    %180 = arith.subf %176, %179 : vector<64x64xf32>
    %181 = math.exp %180 : vector<64x64xf32>
    %cst_66 = arith.constant dense<0.000000e+00> : vector<64xf32>
    %182 = vector.multi_reduction <add>, %181, %cst_66 [1] : vector<64x64xf32> to vector<64xf32>
    %183 = vector.shape_cast %182 : vector<64xf32> to vector<64x1xf32>
    %184 = math.log %183 : vector<64x1xf32>
    %185 = arith.addf %178, %184 : vector<64x1xf32>
    %cst_67 = arith.constant 0.000000e+00 : f32
    %186 = arith.subf %cst_67, %146 : f32
    %187 = vector.broadcast %186 : f32 to vector<64x1xf32>
    %188 = arith.mulf %187, %185 : vector<64x1xf32>
    %189 = tpu.transpose %188, [1, 0] : vector<64x1xf32> -> vector<1x64xf32>
    %190 = vector.broadcast %147 : f32 to vector<1x64xf32>
    %191 = arith.mulf %145#2, %190 : vector<1x64xf32>
    %192 = arith.addf %68, %191 : vector<1x64xf32>
    %c0_68 = arith.constant 0 : index
    %c0_69 = arith.constant 0 : index
    %193 = vector.load %arg8[%c0_68, %c0_69] : memref<64x64xf32, #tpu.memory_space<vmem>>, vector<64x64xf32>
    %194 = vector.broadcast %147 : f32 to vector<64x64xf32>
    %195 = arith.mulf %193, %194 : vector<64x64xf32>
    %196 = vector.broadcast %192 : vector<1x64xf32> to vector<64x64xf32>
    %197 = arith.subf %196, %195 : vector<64x64xf32>
    %cst_70 = arith.constant dense<0xFF800000> : vector<64xf32>
    %198 = vector.multi_reduction <maximumf>, %197, %cst_70 [1] : vector<64x64xf32> to vector<64xf32>
    %199 = vector.shape_cast %198 : vector<64xf32> to vector<64x1xf32>
    %200 = vector.broadcast %199 : vector<64x1xf32> to vector<64x64xf32>
    %201 = arith.subf %197, %200 : vector<64x64xf32>
    %202 = math.exp %201 : vector<64x64xf32>
    %cst_71 = arith.constant dense<0.000000e+00> : vector<64xf32>
    %203 = vector.multi_reduction <add>, %202, %cst_71 [1] : vector<64x64xf32> to vector<64xf32>
    %204 = vector.shape_cast %203 : vector<64xf32> to vector<64x1xf32>
    %205 = math.log %204 : vector<64x1xf32>
    %206 = arith.addf %199, %205 : vector<64x1xf32>
    %cst_72 = arith.constant 0.000000e+00 : f32
    %207 = arith.subf %cst_72, %146 : f32
    %208 = vector.broadcast %207 : f32 to vector<64x1xf32>
    %209 = arith.mulf %208, %206 : vector<64x1xf32>
    %210 = tpu.transpose %209, [1, 0] : vector<64x1xf32> -> vector<1x64xf32>
    %211 = vector.broadcast %147 : f32 to vector<1x64xf32>
    %212 = arith.mulf %145#3, %211 : vector<1x64xf32>
    %213 = arith.addf %69, %212 : vector<1x64xf32>
    %c0_73 = arith.constant 0 : index
    %c0_74 = arith.constant 0 : index
    %214 = vector.load %arg9[%c0_73, %c0_74] : memref<64x64xf32, #tpu.memory_space<vmem>>, vector<64x64xf32>
    %215 = vector.broadcast %147 : f32 to vector<64x64xf32>
    %216 = arith.mulf %214, %215 : vector<64x64xf32>
    %217 = vector.broadcast %213 : vector<1x64xf32> to vector<64x64xf32>
    %218 = arith.subf %217, %216 : vector<64x64xf32>
    %cst_75 = arith.constant dense<0xFF800000> : vector<64xf32>
    %219 = vector.multi_reduction <maximumf>, %218, %cst_75 [1] : vector<64x64xf32> to vector<64xf32>
    %220 = vector.shape_cast %219 : vector<64xf32> to vector<64x1xf32>
    %221 = vector.broadcast %220 : vector<64x1xf32> to vector<64x64xf32>
    %222 = arith.subf %218, %221 : vector<64x64xf32>
    %223 = math.exp %222 : vector<64x64xf32>
    %cst_76 = arith.constant dense<0.000000e+00> : vector<64xf32>
    %224 = vector.multi_reduction <add>, %223, %cst_76 [1] : vector<64x64xf32> to vector<64xf32>
    %225 = vector.shape_cast %224 : vector<64xf32> to vector<64x1xf32>
    %226 = math.log %225 : vector<64x1xf32>
    %227 = arith.addf %220, %226 : vector<64x1xf32>
    %cst_77 = arith.constant 0.000000e+00 : f32
    %228 = arith.subf %cst_77, %146 : f32
    %229 = vector.broadcast %228 : f32 to vector<64x1xf32>
    %230 = arith.mulf %229, %227 : vector<64x1xf32>
    %231 = tpu.transpose %230, [1, 0] : vector<64x1xf32> -> vector<1x64xf32>
    %232 = arith.subf %168, %210 : vector<1x64xf32>
    %cst_78 = arith.constant dense<0.000000e+00> : vector<1xf32>
    %233 = vector.multi_reduction <add>, %232, %cst_78 [1] : vector<1x64xf32> to vector<1xf32>
    %234 = vector.shape_cast %233 : vector<1xf32> to vector<1x1xf32>
    %cst_79 = arith.constant 1.562500e-02 : f32
    %235 = vector.broadcast %cst_79 : f32 to vector<1x1xf32>
    %236 = arith.mulf %234, %235 : vector<1x1xf32>
    %237 = arith.subf %189, %231 : vector<1x64xf32>
    %cst_80 = arith.constant dense<0.000000e+00> : vector<1xf32>
    %238 = vector.multi_reduction <add>, %237, %cst_80 [1] : vector<1x64xf32> to vector<1xf32>
    %239 = vector.shape_cast %238 : vector<1xf32> to vector<1x1xf32>
    %cst_81 = arith.constant 1.562500e-02 : f32
    %240 = vector.broadcast %cst_81 : f32 to vector<1x1xf32>
    %241 = arith.mulf %239, %240 : vector<1x1xf32>
    %242 = arith.addf %236, %241 : vector<1x1xf32>
    %c0_82 = arith.constant 0 : index
    %c0_83 = arith.constant 0 : index
    %c0_84 = arith.constant 0 : index
    %243 = vector.load %arg5[%c0_82, %c0_83, %c0_84] : memref<1x1x1xf32, #tpu.memory_space<vmem>>, vector<1x1x1xf32>
    %244 = vector.shape_cast %243 : vector<1x1x1xf32> to vector<1x1xf32>
    %245 = vector.shape_cast %242 : vector<1x1xf32> to vector<1x1x1xf32>
    tpu.vector_store %arg5[%c0_82, %c0_83, %c0_84], %245 {strides = array<i32>} : memref<1x1x1xf32, #tpu.memory_space<vmem>>, vector<1x1x1xf32>,
    return
  }
  func.func @transform_0(%arg0: i32) -> i32 {
    %c0_i32 = arith.constant 0 : i32
    %c0_i32_0 = arith.constant 0 : i32
    return %c0_i32 : i32
  }
  func.func @transform_1(%arg0: i32) -> i32 {
    %c0_i32 = arith.constant 0 : i32
    %c0_i32_0 = arith.constant 0 : i32
    return %c0_i32 : i32
  }
  func.func @transform_2(%arg0: i32) -> (i32, i32, i32) {
    %c0_i32 = arith.constant 0 : i32
    %c0_i32_0 = arith.constant 0 : i32
    %c0_i32_1 = arith.constant 0 : i32
    return %arg0, %c0_i32, %c0_i32_0 : i32, i32, i32
  }
  func.func @transform_3(%arg0: i32) -> (i32, i32, i32) {
    %c0_i32 = arith.constant 0 : i32
    %c0_i32_0 = arith.constant 0 : i32
    %c0_i32_1 = arith.constant 0 : i32
    return %arg0, %c0_i32, %c0_i32_0 : i32, i32, i32
  }
  func.func @transform_4(%arg0: i32) -> (i32, i32, i32) {
    %c0_i32 = arith.constant 0 : i32
    %c0_i32_0 = arith.constant 0 : i32
    %c0_i32_1 = arith.constant 0 : i32
    return %arg0, %c0_i32, %c0_i32_0 : i32, i32, i32
  }
}

</mosaic_0001>

<llo_original>
// kernel: _sinkhorn_pallas.1
$region0: #{_sinkhorn_pallas.1}
  #allocation0 [shape = 'u32[]', space=smem, size = 0x4, offset = 0x4, fixed_abs, tag = 'smem constant byte address 0x4 - core index']
  #allocation1 [shape = 'u32[144,128]{1,0:T(1,128)}', space=vmem, size = 0x12000, scoped, tag = 'internal scratch']
  #allocation2 [shape = 'f32[64,64]{1,0:T(8,128)}', space=vmem, size = 0x8000, scoped, tag = 'scratch operand']
  #allocation3 [shape = 'f32[64,64]{1,0:T(8,128)}', space=vmem, size = 0x8000, scoped, tag = 'scratch operand']
  #allocation4 [shape = 'f32[64,64]{1,0:T(8,128)}', space=vmem, size = 0x8000, scoped, tag = 'scratch operand']
  #allocation5 [shape = 'f32[64,64]{1,0:T(8,128)}', space=vmem, size = 0x8000, scoped, tag = 'scratch operand']
  %s0 = inlined_call_operand.vmem [shape: f32[10], index: 0, kind: input, shape index: {}]
  %s1 = inlined_call_operand.vmem [shape: f32[10], index: 1, kind: input, shape index: {}]
  %s2 = inlined_call_operand.vmem [shape: f32[2,64,3], index: 2, kind: input, shape index: {}]
  %s3 = inlined_call_operand.vmem [shape: f32[2,64,3], index: 3, kind: input, shape index: {}]
  %s4 = inlined_call_operand.vmem [shape: f32[2,1,1], index: 4, kind: output, shape index: {}]
  %s5 = sld [smem:[#allocation0]]
  $region64: #{_sinkhorn_pallas.1} parent=0
    _
  %s7 = ssub.s32 1, %s5
  %s8 = scalar_select 0, %s7, %s5
  $region1: #{_sinkhorn_pallas.1} parent=0
    #allocation6 [shape = 'u8[512]{0}', space=smem, size = 0x200, scoped, tag = 'input window, operand 0, single buffered']
    #allocation7 [shape = 's32[2]{0}', space=sflag, size = 0x8, scoped, tag = 'scoped memory for _sinkhorn_pallas.1']
    #allocation8 [shape = 'u8[512]{0}', space=smem, size = 0x200, scoped, tag = 'input window, operand 1, single buffered']
    #allocation9 [shape = 's32[1]{0}', space=sflag, size = 0x4, scoped, tag = 'scoped memory for _sinkhorn_pallas.1']
    %9 = vsyncpa [#allocation7], 0
    %10 = vsyncpa [#allocation9], 0
    loop: start=0, step=1, limit=4
    $region2: #{_sinkhorn_pallas.1} parent=1 // loop_pre_header
      _
    $region3: #{_sinkhorn_pallas.1} parent=1 // loop_header
      %s12 = sphi 0, %s16
      %p13 = scmp.ge.s32.totalorder %s12, 4
      %s20 = sphi 0, %s20
      %s22 = sphi 0, %s20
      %s23 = sphi 0, %s22
      %s37 = sphi 0, %s23
      %s41 = sphi 0, %s41
      %s43 = sphi 0, %s41
      %s44 = sphi 0, %s43
      %s58 = sphi 0, %s44
      %s64 = sphi 0, %s66
      %s67 = sphi 0, %s64
      %s68 = sphi 0, %s67
      %s84 = sphi 0, %s68
      %s90 = sphi 0, %s92
      %s93 = sphi 0, %s90
      %s94 = sphi 0, %s93
      %s110 = sphi 0, %s94
      %s116 = sphi 0, %s118
      %s119 = sphi 0, %s116
      %s120 = sphi 0, %s119
      %s136 = sphi 0, %s120
    $region4: #{_sinkhorn_pallas.1} parent=1 // loop_header_branch
      %15 = sbr.rel (%p13) target = $region8
    $region5: #{_sinkhorn_pallas.1} parent=1 // loop_body
      %s17 = ssub.s32 %s12, 1
      %s18 = ssub.s32 %s12, 2
      %s19 = sadd.s32 %s12, 1
      %s21 = sadd.s32 %s20, 1
      %p24 = scmp.eq.s32.totalorder %s12, 1
      %p25 = scmp.ne.s32.totalorder %s20, %s22
      %p26 = scmp.eq.s32.totalorder %s12, 0
      %p27 = por %p25, %p26
      %p28 = scmp.ne.s32.totalorder %s20, %s22
      %p29 = scmp.eq.s32.totalorder %s17, 1
      %p30 = por %p28, %p29
      %p31 = scmp.ne.s32.totalorder %s22, %s23
      %p32 = scmp.eq.s32.totalorder %s17, 0
      %p33 = por %p31, %p32
      %p34 = scmp.ne.s32.totalorder %s22, %s23
      %p35 = scmp.eq.s32.totalorder %s18, 1
      %p36 = por %p34, %p35
      %p38 = scmp.ne.s32.totalorder %s23, %s37
      %p39 = scmp.eq.s32.totalorder %s18, 0
      %p40 = por %p38, %p39
      %s42 = sadd.s32 %s41, 1
      %p45 = scmp.eq.s32.totalorder %s12, 1
      %p46 = scmp.ne.s32.totalorder %s41, %s43
      %p47 = scmp.eq.s32.totalorder %s12, 0
      %p48 = por %p46, %p47
      %p49 = scmp.ne.s32.totalorder %s41, %s43
      %p50 = scmp.eq.s32.totalorder %s17, 1
      %p51 = por %p49, %p50
      %p52 = scmp.ne.s32.totalorder %s43, %s44
      %p53 = scmp.eq.s32.totalorder %s17, 0
      %p54 = por %p52, %p53
      %p55 = scmp.ne.s32.totalorder %s43, %s44
      %p56 = scmp.eq.s32.totalorder %s18, 1
      %p57 = por %p55, %p56
      %p59 = scmp.ne.s32.totalorder %s44, %s58
      %p60 = scmp.eq.s32.totalorder %s18, 0
      %p61 = por %p59, %p60
      %s62 = ssub.s32 %s12, %s19
      %p63 = scmp.eq.s32.totalorder %s62, 0
      %s65 = sadd.s32 %s64, 1
      %s66 = scalar_select %p63, %s64, %s65
      %p69 = pneg %p63
      %p70 = scmp.eq.s32.totalorder %s12, 1
      %p71 = por %p69, %p70
      %p72 = scmp.ne.s32.totalorder %s64, %s67
      %p73 = scmp.eq.s32.totalorder %s12, 0
      %p74 = por %p72, %p73
      %p75 = scmp.ne.s32.totalorder %s64, %s67
      %p76 = scmp.eq.s32.totalorder %s17, 1
      %p77 = por %p75, %p76
      %p78 = scmp.ne.s32.totalorder %s67, %s68
      %p79 = scmp.eq.s32.totalorder %s17, 0
      %p80 = por %p78, %p79
      %p81 = scmp.ne.s32.totalorder %s67, %s68
      %p82 = scmp.eq.s32.totalorder %s18, 1
      %p83 = por %p81, %p82
      %p85 = scmp.ne.s32.totalorder %s68, %s84
      %p86 = scmp.eq.s32.totalorder %s18, 0
      %p87 = por %p85, %p86
      %s88 = ssub.s32 %s12, %s19
      %p89 = scmp.eq.s32.totalorder %s88, 0
      %s91 = sadd.s32 %s90, 1
      %s92 = scalar_select %p89, %s90, %s91
      %p95 = pneg %p89
      %p96 = scmp.eq.s32.totalorder %s12, 1
      %p97 = por %p95, %p96
      %p98 = scmp.ne.s32.totalorder %s90, %s93
      %p99 = scmp.eq.s32.totalorder %s12, 0
      %p100 = por %p98, %p99
      %p101 = scmp.ne.s32.totalorder %s90, %s93
      %p102 = scmp.eq.s32.totalorder %s17, 1
      %p103 = por %p101, %p102
      %p104 = scmp.ne.s32.totalorder %s93, %s94
      %p105 = scmp.eq.s32.totalorder %s17, 0
      %p106 = por %p104, %p105
      %p107 = scmp.ne.s32.totalorder %s93, %s94
      %p108 = scmp.eq.s32.totalorder %s18, 1
      %p109 = por %p107, %p108
      %p111 = scmp.ne.s32.totalorder %s94, %s110
      %p112 = scmp.eq.s32.totalorder %s18, 0
      %p113 = por %p111, %p112
      %s114 = ssub.s32 %s12, %s19
      %p115 = scmp.eq.s32.totalorder %s114, 0
      %s117 = sadd.s32 %s116, 1
      %s118 = scalar_select %p115, %s116, %s117
      %p121 = pneg %p115
      %p122 = scmp.eq.s32.totalorder %s12, 1
      %p123 = por %p121, %p122
      %p124 = scmp.ne.s32.totalorder %s116, %s119
      %p125 = scmp.eq.s32.totalorder %s12, 0
      %p126 = por %p124, %p125
      %p127 = scmp.ne.s32.totalorder %s116, %s119
      %p128 = scmp.eq.s32.totalorder %s17, 1
      %p129 = por %p127, %p128
      %p130 = scmp.ne.s32.totalorder %s119, %s120
      %p131 = scmp.eq.s32.totalorder %s17, 0
      %p132 = por %p130, %p131
      %p133 = scmp.ne.s32.totalorder %s119, %s120
      %p134 = scmp.eq.s32.totalorder %s18, 1
      %p135 = por %p133, %p134
      %p137 = scmp.ne.s32.totalorder %s120, %s136
      %p138 = scmp.eq.s32.totalorder %s18, 0
      %p139 = por %p137, %p138
      %p140 = scmp.le.s32.totalorder 1, %s12
      %p141 = scmp.lt.s32.totalorder %s12, 3
      %p142 = pnand %p140, %p141
      %p143 = pneg %p142
      // Predicated region
      $region9: #{_sinkhorn_pallas.1} parent=5 // pred_check
        _
      $region10: #{_sinkhorn_pallas.1} parent=5 // pred_check_branch
        %145 = sbr.rel (%p142) target = $region12
      $region11: #{_sinkhorn_pallas.1} parent=5 // pred_region
        %s146 = ssub.s32 %s12, 1
        // Predicated region
        $region13: #{_sinkhorn_pallas.1} parent=11 // pred_check
          %p147 = pneg %p33
        $region14: #{_sinkhorn_pallas.1} parent=11 // pred_check_branch
          %149 = sbr.rel (%p147) target = $region16
        $region15: #{_sinkhorn_pallas.1} parent=11 // pred_region
          %s151 = ssub.s32 16, 16
          %152 = vsyncadd [#allocation7], %s151
          %s154 = sshll.u32 %s0, 4
          %s155 = int_to_ptr.vmem [resolvable:$true] %s154
          %157 = dma.vmem_to_smem %s155, 16, [#allocation6], [#allocation7]
        $region16: #{_sinkhorn_pallas.1} parent=11 // pred_fallthru
          _
        // Predicated region
        $region17: #{_sinkhorn_pallas.1} parent=11 // pred_check
          %p158 = pneg %p54
        $region18: #{_sinkhorn_pallas.1} parent=11 // pred_check_branch
          %160 = sbr.rel (%p158) target = $region20
        $region19: #{_sinkhorn_pallas.1} parent=11 // pred_region
          %s162 = ssub.s32 16, 16
          %163 = vsyncadd [#allocation9], %s162
          %s165 = sshll.u32 %s1, 4
          %s166 = int_to_ptr.vmem [resolvable:$true] %s165
          %168 = dma.vmem_to_smem %s166, 16, [#allocation8], [#allocation9]
        $region20: #{_sinkhorn_pallas.1} parent=11 // pred_fallthru
          _
      $region12: #{_sinkhorn_pallas.1} parent=5 // pred_fallthru
        _
      %p169 = scmp.lt.s32.totalorder %s12, 2
      // Predicated region
      $region21: #{_sinkhorn_pallas.1} parent=5 // pred_check
        %p170 = pneg %p169
      $region22: #{_sinkhorn_pallas.1} parent=5 // pred_check_branch
        %172 = sbr.rel (%p170) target = $region24
      $region23: #{_sinkhorn_pallas.1} parent=5 // pred_region
        // Predicated region
        $region25: #{_sinkhorn_pallas.1} parent=23 // pred_check
          %p173 = pneg %p74
        $region26: #{_sinkhorn_pallas.1} parent=23 // pred_check_branch
          %175 = sbr.rel (%p173) target = $region28
        $region27: #{_sinkhorn_pallas.1} parent=23 // pred_region
          %p176 = scmp.lt.s32.totalorder %s12, 1
          %s177 = scalar_select %p176, %s12, 1
          %s178 = smul.addr %s177, 8
          %s179 = smul.addr %s178, 8
          %s180 = scalar_lea.vmem %s2, %s179
        $region28: #{_sinkhorn_pallas.1} parent=23 // pred_fallthru
          _
        // Predicated region
        $region29: #{_sinkhorn_pallas.1} parent=23 // pred_check
          %p181 = pneg %p100
        $region30: #{_sinkhorn_pallas.1} parent=23 // pred_check_branch
          %183 = sbr.rel (%p181) target = $region32
        $region31: #{_sinkhorn_pallas.1} parent=23 // pred_region
          %p184 = scmp.lt.s32.totalorder %s12, 1
          %s185 = scalar_select %p184, %s12, 1
          %s186 = smul.addr %s185, 8
          %s187 = smul.addr %s186, 8
          %s188 = scalar_lea.vmem %s3, %s187
        $region32: #{_sinkhorn_pallas.1} parent=23 // pred_fallthru
          _
      $region24: #{_sinkhorn_pallas.1} parent=5 // pred_fallthru
        _
      %p189 = scmp.le.s32.totalorder 1, %s12
      %p190 = scmp.lt.s32.totalorder %s12, 3
      %p191 = pnand %p189, %p190
      %p192 = pneg %p191
      // Predicated region
      $region33: #{_sinkhorn_pallas.1} parent=5 // pred_check
        _
      $region34: #{_sinkhorn_pallas.1} parent=5 // pred_check_branch
        %194 = sbr.rel (%p191) target = $region36
      $region35: #{_sinkhorn_pallas.1} parent=5 // pred_region
        %s195 = ssub.s32 %s12, 1
        // Predicated region
        $region37: #{_sinkhorn_pallas.1} parent=35 // pred_check
          %p196 = pneg %p33
        $region38: #{_sinkhorn_pallas.1} parent=35 // pred_check_branch
          %198 = sbr.rel (%p196) target = $region40
        $region39: #{_sinkhorn_pallas.1} parent=35 // pred_region
          %199 = dma.done [#allocation7], 16
        $region40: #{_sinkhorn_pallas.1} parent=35 // pred_fallthru
          _
        // Predicated region
        $region41: #{_sinkhorn_pallas.1} parent=35 // pred_check
          %p200 = pneg %p54
        $region42: #{_sinkhorn_pallas.1} parent=35 // pred_check_branch
          %202 = sbr.rel (%p200) target = $region44
        $region43: #{_sinkhorn_pallas.1} parent=35 // pred_region
          %203 = dma.done [#allocation9], 16
        $region44: #{_sinkhorn_pallas.1} parent=35 // pred_fallthru
          _
        %204 = sfence
        %p205 = pneg %p33
        %p206 = pneg %p30
        %p207 = pneg %p54
        %p208 = pneg %p51
        %p209 = scmp.lt.s32.totalorder %s17, 1
        %s210 = scalar_select %p209, %s17, 1
        %s211 = smul.addr %s210, 8
        %s212 = smul.addr %s211, 8
        %s213 = scalar_lea.vmem %s2, %s212
        %p214 = pneg %p80
        %p215 = pneg %p77
        %p216 = scmp.lt.s32.totalorder %s17, 1
        %s217 = scalar_select %p216, %s17, 1
        %s218 = smul.addr %s217, 8
        %s219 = smul.addr %s218, 8
        %s220 = scalar_lea.vmem %s3, %s219
        %p221 = pneg %p106
        %p222 = pneg %p103
        %p223 = pneg %p132
        %p224 = pneg %p129
        %p225 = scmp.lt.s32.totalorder %s17, 1
        %s226 = scalar_select %p225, %s17, 1
        %s227 = scalar_lea.vmem %s4, %s226
        %p228 = scmp.lt.s32.totalorder %s17, 1
        %s229 = scalar_select %p228, %s17, 1
        %s230 = smul.addr %s229, 8
        %s231 = smul.addr %s230, 8
        %s232 = scalar_lea.vmem %s2, %s231
        %p233 = scmp.lt.s32.totalorder %s17, 1
        %s234 = scalar_select %p233, %s17, 1
        %s235 = smul.addr %s234, 8
        %s236 = smul.addr %s235, 8
        %s237 = scalar_lea.vmem %s3, %s236
        %p238 = scmp.lt.s32.totalorder %s17, 1
        %s239 = scalar_select %p238, %s17, 1
        %s240 = scalar_lea.vmem %s4, %s239
        %v241 = vld [vmem:[%s232] sm:$0xff]
        %v242 = vld [vmem:[%s232 + $0x8] sm:$0xff]
        %v243 = vld [vmem:[%s232 + $0x10] sm:$0xff]
        %v244 = vld [vmem:[%s232 + $0x18] sm:$0xff]
        %v245 = vld [vmem:[%s232 + $0x20] sm:$0xff]
        %v246 = vld [vmem:[%s232 + $0x28] sm:$0xff]
        %v247 = vld [vmem:[%s232 + $0x30] sm:$0xff]
        %v248 = vld [vmem:[%s232 + $0x38] sm:$0xff]
        %v249 = vld [vmem:[%s237] sm:$0xff]
        %v250 = vld [vmem:[%s237 + $0x8] sm:$0xff]
        %v251 = vld [vmem:[%s237 + $0x10] sm:$0xff]
        %v252 = vld [vmem:[%s237 + $0x18] sm:$0xff]
        %v253 = vld [vmem:[%s237 + $0x20] sm:$0xff]
        %v254 = vld [vmem:[%s237 + $0x28] sm:$0xff]
        %v255 = vld [vmem:[%s237 + $0x30] sm:$0xff]
        %v256 = vld [vmem:[%s237 + $0x38] sm:$0xff]
        %v257 = vmul.f32 %v241, %v241
        %v258 = vmul.f32 %v242, %v242
        %v259 = vmul.f32 %v243, %v243
        %v260 = vmul.f32 %v244, %v244
        %v261 = vmul.f32 %v245, %v245
        %v262 = vmul.f32 %v246, %v246
        %v263 = vmul.f32 %v247, %v247
        %v264 = vmul.f32 %v248, %v248
        %vm265 = vcmask 23552
        %v266 = vsel %vm265, %v257, 0.0
        %267 = vadd.xlane.f32.xlu0 %v266
        %v268 = vpop.xlane.xlu0 %267
        %v269 = vsel %vm265, %v258, 0.0
        %270 = vadd.xlane.f32.xlu0 %v269
        %v271 = vpop.xlane.xlu0 %270
        %v272 = vsel %vm265, %v259, 0.0
        %273 = vadd.xlane.f32.xlu0 %v272
        %v274 = vpop.xlane.xlu0 %273
        %v275 = vsel %vm265, %v260, 0.0
        %276 = vadd.xlane.f32.xlu0 %v275
        %v277 = vpop.xlane.xlu0 %276
        %v278 = vsel %vm265, %v261, 0.0
        %279 = vadd.xlane.f32.xlu0 %v278
        %v280 = vpop.xlane.xlu0 %279
        %v281 = vsel %vm265, %v262, 0.0
        %282 = vadd.xlane.f32.xlu0 %v281
        %v283 = vpop.xlane.xlu0 %282
        %v284 = vsel %vm265, %v263, 0.0
        %285 = vadd.xlane.f32.xlu0 %v284
        %v286 = vpop.xlane.xlu0 %285
        %v287 = vsel %vm265, %v264, 0.0
        %288 = vadd.xlane.f32.xlu0 %v287
        %v289 = vpop.xlane.xlu0 %288
        %v290 = vmul.f32 %v249, %v249
        %v291 = vmul.f32 %v250, %v250
        %v292 = vmul.f32 %v251, %v251
        %v293 = vmul.f32 %v252, %v252
        %v294 = vmul.f32 %v253, %v253
        %v295 = vmul.f32 %v254, %v254
        %v296 = vmul.f32 %v255, %v255
        %v297 = vmul.f32 %v256, %v256
        %v298 = vsel %vm265, %v290, 0.0
        %299 = vadd.xlane.f32.xlu0 %v298
        %v300 = vpop.xlane.xlu0 %299
        %v301 = vsel %vm265, %v291, 0.0
        %302 = vadd.xlane.f32.xlu0 %v301
        %v303 = vpop.xlane.xlu0 %302
        %v304 = vsel %vm265, %v292, 0.0
        %305 = vadd.xlane.f32.xlu0 %v304
        %v306 = vpop.xlane.xlu0 %305
        %v307 = vsel %vm265, %v293, 0.0
        %308 = vadd.xlane.f32.xlu0 %v307
        %v309 = vpop.xlane.xlu0 %308
        %v310 = vsel %vm265, %v294, 0.0
        %311 = vadd.xlane.f32.xlu0 %v310
        %v312 = vpop.xlane.xlu0 %311
        %v313 = vsel %vm265, %v295, 0.0
        %314 = vadd.xlane.f32.xlu0 %v313
        %v315 = vpop.xlane.xlu0 %314
        %v316 = vsel %vm265, %v296, 0.0
        %317 = vadd.xlane.f32.xlu0 %v316
        %v318 = vpop.xlane.xlu0 %317
        %v319 = vsel %vm265, %v297, 0.0
        %320 = vadd.xlane.f32.xlu0 %v319
        %v321 = vpop.xlane.xlu0 %320
        %v323 = vsel %vm265, %v241, 0
        %v326 = vsel %vm265, %v242, 0
        %v329 = vsel %vm265, %v243, 0
        %v332 = vsel %vm265, %v244, 0
        %v335 = vsel %vm265, %v245, 0
        %v338 = vsel %vm265, %v246, 0
        %v341 = vsel %vm265, %v247, 0
        %v344 = vsel %vm265, %v248, 0
        %v347 = vsel %vm265, %v249, 0
        %v350 = vsel %vm265, %v250, 0
        %v353 = vsel %vm265, %v251, 0
        %v356 = vsel %vm265, %v252, 0
        %v359 = vsel %vm265, %v253, 0
        %v362 = vsel %vm265, %v254, 0
        %v365 = vsel %vm265, %v255, 0
        %v368 = vsel %vm265, %v256, 0
        %370 = vmatprep.subr.mxu0 0.0
        %371 = vmatpush1.xpose.msra.mxu0 0.0
        %372 = vmatprep.subr.mxu0 0.0
        %373 = vmatpush1.xpose.msra.mxu0 0.0
        %374 = vmatprep.subr.mxu0 0.0
        %375 = vmatpush1.xpose.msra.mxu0 0.0
        %376 = vmatprep.subr.mxu0 0.0
        %377 = vmatpush1.xpose.msra.mxu0 0.0
        %378 = vmatprep.subr.mxu0 0.0
        %379 = vmatpush1.xpose.msra.mxu0 0.0
        %380 = vmatprep.subr.mxu0 0.0
        %381 = vmatpush1.xpose.msra.mxu0 0.0
        %382 = vmatprep.subr.mxu0 0.0
        %383 = vmatpush1.xpose.msra.mxu0 0.0
        %384 = vmatprep.subr.mxu0 0.0
        %385 = vmatpush1.xpose.msra.mxu0 0.0
        %386 = vmatprep.subr.mxu0 0.0
        %387 = vmatpush1.xpose.msra.mxu0 %v368
        %388 = vmatprep.subr.mxu0 0.0
        %389 = vmatpush1.xpose.msra.mxu0 %v365
        %390 = vmatprep.subr.mxu0 0.0
        %391 = vmatpush1.xpose.msra.mxu0 %v362
        %392 = vmatprep.subr.mxu0 0.0
        %393 = vmatpush1.xpose.msra.mxu0 %v359
        %394 = vmatprep.subr.mxu0 0.0
        %395 = vmatpush1.xpose.msra.mxu0 %v356
        %396 = vmatprep.subr.mxu0 0.0
        %397 = vmatpush1.xpose.msra.mxu0 %v353
        %398 = vmatprep.subr.mxu0 0.0
        %399 = vmatpush1.xpose.msra.mxu0 %v350
        %400 = vmatprep.subr.mxu0 0.0
        %401 = vmatpush1.xpose.msra.mxu0 %v347
        %402 = vmatprep.subr.mxu0 0.0
        %403 = vmatpush2.xpose.msra.mxu0 0.0
        %404 = vmatprep.subr.mxu0 0.0
        %405 = vmatpush2.xpose.msra.mxu0 0.0
        %406 = vmatprep.subr.mxu0 0.0
        %407 = vmatpush2.xpose.msra.mxu0 0.0
        %408 = vmatprep.subr.mxu0 0.0
        %409 = vmatpush2.xpose.msra.mxu0 0.0
        %410 = vmatprep.subr.mxu0 0.0
        %411 = vmatpush2.xpose.msra.mxu0 0.0
        %412 = vmatprep.subr.mxu0 0.0
        %413 = vmatpush2.xpose.msra.mxu0 0.0
        %414 = vmatprep.subr.mxu0 0.0
        %415 = vmatpush2.xpose.msra.mxu0 0.0
        %416 = vmatprep.subr.mxu0 0.0
        %417 = vmatpush2.xpose.msra.mxu0 0.0
        %418 = vmatprep.subr.mxu0 0.0
        %419 = vmatpush2.xpose.msra.mxu0 0.0
        %420 = vmatprep.subr.mxu0 0.0
        %421 = vmatpush2.xpose.msra.mxu0 0.0
        %422 = vmatprep.subr.mxu0 0.0
        %423 = vmatpush2.xpose.msra.mxu0 0.0
        %424 = vmatprep.subr.mxu0 0.0
        %425 = vmatpush2.xpose.msra.mxu0 0.0
        %426 = vmatprep.subr.mxu0 0.0
        %427 = vmatpush2.xpose.msra.mxu0 0.0
        %428 = vmatprep.subr.mxu0 0.0
        %429 = vmatpush2.xpose.msra.mxu0 0.0
        %430 = vmatprep.subr.mxu0 0.0
        %431 = vmatpush2.xpose.msra.mxu0 0.0
        %432 = vmatprep.subr.mxu0 0.0
        %433 = vmatpush2.xpose.msra.mxu0 0.0
        %434 = vmatprep.mubr.f32.mxu0 0.0
        %435 = vmatmul.mubr.f32.gmra.mxu0 %v323
        %v436 = vpop.f32.mrf.mxu0
        %v437 = vadd.f32 0.0, %v436
        %v438 = vpop.f32.mrf.mxu0
        %439 = vmatprep.mubr.f32.mxu0 0.0
        %440 = vmatmul.mubr.f32.gmra.mxu0 %v326
        %v441 = vpop.f32.mrf.mxu0
        %v442 = vadd.f32 0.0, %v441
        %v443 = vpop.f32.mrf.mxu0
        %444 = vmatprep.mubr.f32.mxu0 0.0
        %445 = vmatmul.mubr.f32.gmra.mxu0 %v329
        %v446 = vpop.f32.mrf.mxu0
        %v447 = vadd.f32 0.0, %v446
        %v448 = vpop.f32.mrf.mxu0
        %449 = vmatprep.mubr.f32.mxu0 0.0
        %450 = vmatmul.mubr.f32.gmra.mxu0 %v332
        %v451 = vpop.f32.mrf.mxu0
        %v452 = vadd.f32 0.0, %v451
        %v453 = vpop.f32.mrf.mxu0
        %454 = vmatprep.mubr.f32.mxu0 0.0
        %455 = vmatmul.mubr.f32.gmra.mxu0 %v335
        %v456 = vpop.f32.mrf.mxu0
        %v457 = vadd.f32 0.0, %v456
        %v458 = vpop.f32.mrf.mxu0
        %459 = vmatprep.mubr.f32.mxu0 0.0
        %460 = vmatmul.mubr.f32.gmra.mxu0 %v338
        %v461 = vpop.f32.mrf.mxu0
        %v462 = vadd.f32 0.0, %v461
        %v463 = vpop.f32.mrf.mxu0
        %464 = vmatprep.mubr.f32.mxu0 0.0
        %465 = vmatmul.mubr.f32.gmra.mxu0 %v341
        %v466 = vpop.f32.mrf.mxu0
        %v467 = vadd.f32 0.0, %v466
        %v468 = vpop.f32.mrf.mxu0
        %469 = vmatprep.mubr.f32.mxu0 0.0
        %470 = vmatmul.mubr.f32.gmra.mxu0 %v344
        %v471 = vpop.f32.mrf.mxu0
        %v472 = vadd.f32 0.0, %v471
        %v473 = vpop.f32.mrf.mxu0
        %474 = vdwg.mxu0
        %v483 = vlaneseq
        %v484 = vand.u32 %v483, 127
        %v485 = vlaneseq
        %v486 = vshrl.u32 %v485, 7
        %v487 = vsub.s32 %v484, %v486
        %v488 = vrot.slane %v300, %v487
        %v489 = vadd.s32 %v484, 4294967288
        %v490 = vlaneseq
        %v491 = vshrl.u32 %v490, 7
        %v492 = vsub.s32 %v489, %v491
        %v493 = vrot.slane %v303, %v492
        %vm494 = vcmask 130112
        %v495 = vsel %vm494, %v493, %v488
        %v496 = vadd.s32 %v484, 4294967280
        %v497 = vlaneseq
        %v498 = vshrl.u32 %v497, 7
        %v499 = vsub.s32 %v496, %v498
        %v500 = vrot.slane %v306, %v499
        %vm501 = vcmask 195712
        %v502 = vsel %vm501, %v500, %v495
        %v503 = vadd.s32 %v484, 4294967272
        %v504 = vlaneseq
        %v505 = vshrl.u32 %v504, 7
        %v506 = vsub.s32 %v503, %v505
        %v507 = vrot.slane %v309, %v506
        %vm508 = vcmask 261312
        %v509 = vsel %vm508, %v507, %v502
        %v510 = vadd.s32 %v484, 4294967264
        %v511 = vlaneseq
        %v512 = vshrl.u32 %v511, 7
        %v513 = vsub.s32 %v510, %v512
        %v514 = vrot.slane %v312, %v513
        %vm515 = vcmask 326912
        %v516 = vsel %vm515, %v514, %v509
        %v517 = vadd.s32 %v484, 4294967256
        %v518 = vlaneseq
        %v519 = vshrl.u32 %v518, 7
        %v520 = vsub.s32 %v517, %v519
        %v521 = vrot.slane %v315, %v520
        %vm522 = vcmask 392512
        %v523 = vsel %vm522, %v521, %v516
        %v524 = vadd.s32 %v484, 4294967248
        %v525 = vlaneseq
        %v526 = vshrl.u32 %v525, 7
        %v527 = vsub.s32 %v524, %v526
        %v528 = vrot.slane %v318, %v527
        %vm529 = vcmask 458112
        %v530 = vsel %vm529, %v528, %v523
        %v531 = vadd.s32 %v484, 4294967240
        %v532 = vlaneseq
        %v533 = vshrl.u32 %v532, 7
        %v534 = vsub.s32 %v531, %v533
        %v535 = vrot.slane %v321, %v534
        %vm536 = vcmask 523712
        %v537 = vsel %vm536, %v535, %v530
        %vm538 = vcmask 1042434
        %v539 = vsel %vm538, %v537, %v537
        %vm540 = vcmask 1043459
        %v541 = vsel %vm540, %v537, %v539
        %vm542 = vcmask 1044484
        %v543 = vsel %vm542, %v537, %v541
        %vm544 = vcmask 1045509
        %v545 = vsel %vm544, %v537, %v543
        %vm546 = vcmask 1046534
        %v547 = vsel %vm546, %v537, %v545
        %vm548 = vcmask 1047559
        %v549 = vsel %vm548, %v537, %v547
        %v551 = vadd.f32 %v268, %v549
        %v552 = vadd.f32 %v271, %v549
        %v553 = vadd.f32 %v274, %v549
        %v554 = vadd.f32 %v277, %v549
        %v555 = vadd.f32 %v280, %v549
        %v556 = vadd.f32 %v283, %v549
        %v557 = vadd.f32 %v286, %v549
        %v558 = vadd.f32 %v289, %v549
        %v559 = vmul.f32 %v551, 0.5
        %v560 = vmul.f32 %v552, 0.5
        %v561 = vmul.f32 %v553, 0.5
        %v562 = vmul.f32 %v554, 0.5
        %v563 = vmul.f32 %v555, 0.5
        %v564 = vmul.f32 %v556, 0.5
        %v565 = vmul.f32 %v557, 0.5
        %v566 = vmul.f32 %v558, 0.5
        %v567 = vsub.f32 %v559, %v437
        %v568 = vsub.f32 %v560, %v442
        %v569 = vsub.f32 %v561, %v447
        %v570 = vsub.f32 %v562, %v452
        %v571 = vsub.f32 %v563, %v457
        %v572 = vsub.f32 %v564, %v462
        %v573 = vsub.f32 %v565, %v467
        %v574 = vsub.f32 %v566, %v472
        %v575 = vmax.f32 %v567, 0.0
        %v576 = vmax.f32 %v568, 0.0
        %v577 = vmax.f32 %v569, 0.0
        %v578 = vmax.f32 %v570, 0.0
        %v579 = vmax.f32 %v571, 0.0
        %v580 = vmax.f32 %v572, 0.0
        %v581 = vmax.f32 %v573, 0.0
        %v582 = vmax.f32 %v574, 0.0
        %vm583 = vcmask 523264
        %584 = vst.msk [vmem:[#allocation2] sm:$0xff] %vm583, %v575
        %585 = vst.msk [vmem:[#allocation2 + $0x8] sm:$0xff] %vm583, %v576
        %586 = vst.msk [vmem:[#allocation2 + $0x10] sm:$0xff] %vm583, %v577
        %587 = vst.msk [vmem:[#allocation2 + $0x18] sm:$0xff] %vm583, %v578
        %588 = vst.msk [vmem:[#allocation2 + $0x20] sm:$0xff] %vm583, %v579
        %589 = vst.msk [vmem:[#allocation2 + $0x28] sm:$0xff] %vm583, %v580
        %590 = vst.msk [vmem:[#allocation2 + $0x30] sm:$0xff] %vm583, %v581
        %591 = vst.msk [vmem:[#allocation2 + $0x38] sm:$0xff] %vm583, %v582
        %592 = vmatprep.subr.mxu0 0.0
        %593 = vmatpush1.xpose.msra.mxu0 0.0
        %594 = vmatprep.subr.mxu0 0.0
        %595 = vmatpush1.xpose.msra.mxu0 0.0
        %596 = vmatprep.subr.mxu0 0.0
        %597 = vmatpush1.xpose.msra.mxu0 0.0
        %598 = vmatprep.subr.mxu0 0.0
        %599 = vmatpush1.xpose.msra.mxu0 0.0
        %600 = vmatprep.subr.mxu0 0.0
        %601 = vmatpush1.xpose.msra.mxu0 0.0
        %602 = vmatprep.subr.mxu0 0.0
        %603 = vmatpush1.xpose.msra.mxu0 0.0
        %604 = vmatprep.subr.mxu0 0.0
        %605 = vmatpush1.xpose.msra.mxu0 0.0
        %606 = vmatprep.subr.mxu0 0.0
        %607 = vmatpush1.xpose.msra.mxu0 0.0
        %608 = vmatprep.subr.mxu0 0.0
        %609 = vmatpush1.xpose.msra.mxu0 %v344
        %610 = vmatprep.subr.mxu0 0.0
        %611 = vmatpush1.xpose.msra.mxu0 %v341
        %612 = vmatprep.subr.mxu0 0.0
        %613 = vmatpush1.xpose.msra.mxu0 %v338
        %614 = vmatprep.subr.mxu0 0.0
        %615 = vmatpush1.xpose.msra.mxu0 %v335
        %616 = vmatprep.subr.mxu0 0.0
        %617 = vmatpush1.xpose.msra.mxu0 %v332
        %618 = vmatprep.subr.mxu0 0.0
        %619 = vmatpush1.xpose.msra.mxu0 %v329
        %620 = vmatprep.subr.mxu0 0.0
        %621 = vmatpush1.xpose.msra.mxu0 %v326
        %622 = vmatprep.subr.mxu0 0.0
        %623 = vmatpush1.xpose.msra.mxu0 %v323
        %624 = vmatprep.subr.mxu0 0.0
        %625 = vmatpush2.xpose.msra.mxu0 0.0
        %626 = vmatprep.subr.mxu0 0.0
        %627 = vmatpush2.xpose.msra.mxu0 0.0
        %628 = vmatprep.subr.mxu0 0.0
        %629 = vmatpush2.xpose.msra.mxu0 0.0
        %630 = vmatprep.subr.mxu0 0.0
        %631 = vmatpush2.xpose.msra.mxu0 0.0
        %632 = vmatprep.subr.mxu0 0.0
        %633 = vmatpush2.xpose.msra.mxu0 0.0
        %634 = vmatprep.subr.mxu0 0.0
        %635 = vmatpush2.xpose.msra.mxu0 0.0
        %636 = vmatprep.subr.mxu0 0.0
        %637 = vmatpush2.xpose.msra.mxu0 0.0
        %638 = vmatprep.subr.mxu0 0.0
        %639 = vmatpush2.xpose.msra.mxu0 0.0
        %640 = vmatprep.subr.mxu0 0.0
        %641 = vmatpush2.xpose.msra.mxu0 0.0
        %642 = vmatprep.subr.mxu0 0.0
        %643 = vmatpush2.xpose.msra.mxu0 0.0
        %644 = vmatprep.subr.mxu0 0.0
        %645 = vmatpush2.xpose.msra.mxu0 0.0
        %646 = vmatprep.subr.mxu0 0.0
        %647 = vmatpush2.xpose.msra.mxu0 0.0
        %648 = vmatprep.subr.mxu0 0.0
        %649 = vmatpush2.xpose.msra.mxu0 0.0
        %650 = vmatprep.subr.mxu0 0.0
        %651 = vmatpush2.xpose.msra.mxu0 0.0
        %652 = vmatprep.subr.mxu0 0.0
        %653 = vmatpush2.xpose.msra.mxu0 0.0
        %654 = vmatprep.subr.mxu0 0.0
        %655 = vmatpush2.xpose.msra.mxu0 0.0
        %656 = vmatprep.mubr.f32.mxu0 0.0
        %657 = vmatmul.mubr.f32.gmra.mxu0 %v347
        %v658 = vpop.f32.mrf.mxu0
        %v659 = vadd.f32 0.0, %v658
        %v660 = vpop.f32.mrf.mxu0
        %661 = vmatprep.mubr.f32.mxu0 0.0
        %662 = vmatmul.mubr.f32.gmra.mxu0 %v350
        %v663 = vpop.f32.mrf.mxu0
        %v664 = vadd.f32 0.0, %v663
        %v665 = vpop.f32.mrf.mxu0
        %666 = vmatprep.mubr.f32.mxu0 0.0
        %667 = vmatmul.mubr.f32.gmra.mxu0 %v353
        %v668 = vpop.f32.mrf.mxu0
        %v669 = vadd.f32 0.0, %v668
        %v670 = vpop.f32.mrf.mxu0
        %671 = vmatprep.mubr.f32.mxu0 0.0
        %672 = vmatmul.mubr.f32.gmra.mxu0 %v356
        %v673 = vpop.f32.mrf.mxu0
        %v674 = vadd.f32 0.0, %v673
        %v675 = vpop.f32.mrf.mxu0
        %676 = vmatprep.mubr.f32.mxu0 0.0
        %677 = vmatmul.mubr.f32.gmra.mxu0 %v359
        %v678 = vpop.f32.mrf.mxu0
        %v679 = vadd.f32 0.0, %v678
        %v680 = vpop.f32.mrf.mxu0
        %681 = vmatprep.mubr.f32.mxu0 0.0
        %682 = vmatmul.mubr.f32.gmra.mxu0 %v362
        %v683 = vpop.f32.mrf.mxu0
        %v684 = vadd.f32 0.0, %v683
        %v685 = vpop.f32.mrf.mxu0
        %686 = vmatprep.mubr.f32.mxu0 0.0
        %687 = vmatmul.mubr.f32.gmra.mxu0 %v365
        %v688 = vpop.f32.mrf.mxu0
        %v689 = vadd.f32 0.0, %v688
        %v690 = vpop.f32.mrf.mxu0
        %691 = vmatprep.mubr.f32.mxu0 0.0
        %692 = vmatmul.mubr.f32.gmra.mxu0 %v368
        %v693 = vpop.f32.mrf.mxu0
        %v694 = vadd.f32 0.0, %v693
        %v695 = vpop.f32.mrf.mxu0
        %696 = vdwg.mxu0
        %v705 = vlaneseq
        %v706 = vshrl.u32 %v705, 7
        %v707 = vsub.s32 %v484, %v706
        %v708 = vrot.slane %v268, %v707
        %v709 = vlaneseq
        %v710 = vshrl.u32 %v709, 7
        %v711 = vsub.s32 %v489, %v710
        %v712 = vrot.slane %v271, %v711
        %v713 = vsel %vm494, %v712, %v708
        %v714 = vlaneseq
        %v715 = vshrl.u32 %v714, 7
        %v716 = vsub.s32 %v496, %v715
        %v717 = vrot.slane %v274, %v716
        %v718 = vsel %vm501, %v717, %v713
        %v719 = vlaneseq
        %v720 = vshrl.u32 %v719, 7
        %v721 = vsub.s32 %v503, %v720
        %v722 = vrot.slane %v277, %v721
        %v723 = vsel %vm508, %v722, %v718
        %v724 = vlaneseq
        %v725 = vshrl.u32 %v724, 7
        %v726 = vsub.s32 %v510, %v725
        %v727 = vrot.slane %v280, %v726
        %v728 = vsel %vm515, %v727, %v723
        %v729 = vlaneseq
        %v730 = vshrl.u32 %v729, 7
        %v731 = vsub.s32 %v517, %v730
        %v732 = vrot.slane %v283, %v731
        %v733 = vsel %vm522, %v732, %v728
        %v734 = vlaneseq
        %v735 = vshrl.u32 %v734, 7
        %v736 = vsub.s32 %v524, %v735
        %v737 = vrot.slane %v286, %v736
        %v738 = vsel %vm529, %v737, %v733
        %v739 = vlaneseq
        %v740 = vshrl.u32 %v739, 7
        %v741 = vsub.s32 %v531, %v740
        %v742 = vrot.slane %v289, %v741
        %v743 = vsel %vm536, %v742, %v738
        %v744 = vsel %vm538, %v743, %v743
        %v745 = vsel %vm540, %v743, %v744
        %v746 = vsel %vm542, %v743, %v745
        %v747 = vsel %vm544, %v743, %v746
        %v748 = vsel %vm546, %v743, %v747
        %v749 = vsel %vm548, %v743, %v748
        %v751 = vadd.f32 %v300, %v749
        %v752 = vadd.f32 %v303, %v749
        %v753 = vadd.f32 %v306, %v749
        %v754 = vadd.f32 %v309, %v749
        %v755 = vadd.f32 %v312, %v749
        %v756 = vadd.f32 %v315, %v749
        %v757 = vadd.f32 %v318, %v749
        %v758 = vadd.f32 %v321, %v749
        %v759 = vmul.f32 %v751, 0.5
        %v760 = vmul.f32 %v752, 0.5
        %v761 = vmul.f32 %v753, 0.5
        %v762 = vmul.f32 %v754, 0.5
        %v763 = vmul.f32 %v755, 0.5
        %v764 = vmul.f32 %v756, 0.5
        %v765 = vmul.f32 %v757, 0.5
        %v766 = vmul.f32 %v758, 0.5
        %v767 = vsub.f32 %v759, %v659
        %v768 = vsub.f32 %v760, %v664
        %v769 = vsub.f32 %v761, %v669
        %v770 = vsub.f32 %v762, %v674
        %v771 = vsub.f32 %v763, %v679
        %v772 = vsub.f32 %v764, %v684
        %v773 = vsub.f32 %v765, %v689
        %v774 = vsub.f32 %v766, %v694
        %v775 = vmax.f32 %v767, 0.0
        %v776 = vmax.f32 %v768, 0.0
        %v777 = vmax.f32 %v769, 0.0
        %v778 = vmax.f32 %v770, 0.0
        %v779 = vmax.f32 %v771, 0.0
        %v780 = vmax.f32 %v772, 0.0
        %v781 = vmax.f32 %v773, 0.0
        %v782 = vmax.f32 %v774, 0.0
        %783 = vst.msk [vmem:[#allocation3] sm:$0xff] %vm583, %v775
        %784 = vst.msk [vmem:[#allocation3 + $0x8] sm:$0xff] %vm583, %v776
        %785 = vst.msk [vmem:[#allocation3 + $0x10] sm:$0xff] %vm583, %v777
        %786 = vst.msk [vmem:[#allocation3 + $0x18] sm:$0xff] %vm583, %v778
        %787 = vst.msk [vmem:[#allocation3 + $0x20] sm:$0xff] %vm583, %v779
        %788 = vst.msk [vmem:[#allocation3 + $0x28] sm:$0xff] %vm583, %v780
        %789 = vst.msk [vmem:[#allocation3 + $0x30] sm:$0xff] %vm583, %v781
        %790 = vst.msk [vmem:[#allocation3 + $0x38] sm:$0xff] %vm583, %v782
        %791 = vmatprep.subr.mxu0 0.0
        %792 = vmatpush1.xpose.msra.mxu0 0.0
        %793 = vmatprep.subr.mxu0 0.0
        %794 = vmatpush1.xpose.msra.mxu0 0.0
        %795 = vmatprep.subr.mxu0 0.0
        %796 = vmatpush1.xpose.msra.mxu0 0.0
        %797 = vmatprep.subr.mxu0 0.0
        %798 = vmatpush1.xpose.msra.mxu0 0.0
        %799 = vmatprep.subr.mxu0 0.0
        %800 = vmatpush1.xpose.msra.mxu0 0.0
        %801 = vmatprep.subr.mxu0 0.0
        %802 = vmatpush1.xpose.msra.mxu0 0.0
        %803 = vmatprep.subr.mxu0 0.0
        %804 = vmatpush1.xpose.msra.mxu0 0.0
        %805 = vmatprep.subr.mxu0 0.0
        %806 = vmatpush1.xpose.msra.mxu0 0.0
        %807 = vmatprep.subr.mxu0 0.0
        %808 = vmatpush1.xpose.msra.mxu0 %v344
        %809 = vmatprep.subr.mxu0 0.0
        %810 = vmatpush1.xpose.msra.mxu0 %v341
        %811 = vmatprep.subr.mxu0 0.0
        %812 = vmatpush1.xpose.msra.mxu0 %v338
        %813 = vmatprep.subr.mxu0 0.0
        %814 = vmatpush1.xpose.msra.mxu0 %v335
        %815 = vmatprep.subr.mxu0 0.0
        %816 = vmatpush1.xpose.msra.mxu0 %v332
        %817 = vmatprep.subr.mxu0 0.0
        %818 = vmatpush1.xpose.msra.mxu0 %v329
        %819 = vmatprep.subr.mxu0 0.0
        %820 = vmatpush1.xpose.msra.mxu0 %v326
        %821 = vmatprep.subr.mxu0 0.0
        %822 = vmatpush1.xpose.msra.mxu0 %v323
        %823 = vmatprep.subr.mxu0 0.0
        %824 = vmatpush2.xpose.msra.mxu0 0.0
        %825 = vmatprep.subr.mxu0 0.0
        %826 = vmatpush2.xpose.msra.mxu0 0.0
        %827 = vmatprep.subr.mxu0 0.0
        %828 = vmatpush2.xpose.msra.mxu0 0.0
        %829 = vmatprep.subr.mxu0 0.0
        %830 = vmatpush2.xpose.msra.mxu0 0.0
        %831 = vmatprep.subr.mxu0 0.0
        %832 = vmatpush2.xpose.msra.mxu0 0.0
        %833 = vmatprep.subr.mxu0 0.0
        %834 = vmatpush2.xpose.msra.mxu0 0.0
        %835 = vmatprep.subr.mxu0 0.0
        %836 = vmatpush2.xpose.msra.mxu0 0.0
        %837 = vmatprep.subr.mxu0 0.0
        %838 = vmatpush2.xpose.msra.mxu0 0.0
        %839 = vmatprep.subr.mxu0 0.0
        %840 = vmatpush2.xpose.msra.mxu0 0.0
        %841 = vmatprep.subr.mxu0 0.0
        %842 = vmatpush2.xpose.msra.mxu0 0.0
        %843 = vmatprep.subr.mxu0 0.0
        %844 = vmatpush2.xpose.msra.mxu0 0.0
        %845 = vmatprep.subr.mxu0 0.0
        %846 = vmatpush2.xpose.msra.mxu0 0.0
        %847 = vmatprep.subr.mxu0 0.0
        %848 = vmatpush2.xpose.msra.mxu0 0.0
        %849 = vmatprep.subr.mxu0 0.0
        %850 = vmatpush2.xpose.msra.mxu0 0.0
        %851 = vmatprep.subr.mxu0 0.0
        %852 = vmatpush2.xpose.msra.mxu0 0.0
        %853 = vmatprep.subr.mxu0 0.0
        %854 = vmatpush2.xpose.msra.mxu0 0.0
        %855 = vmatprep.mubr.f32.mxu0 0.0
        %856 = vmatmul.mubr.f32.gmra.mxu0 %v323
        %v857 = vpop.f32.mrf.mxu0
        %v858 = vadd.f32 0.0, %v857
        %v859 = vpop.f32.mrf.mxu0
        %860 = vmatprep.mubr.f32.mxu0 0.0
        %861 = vmatmul.mubr.f32.gmra.mxu0 %v326
        %v862 = vpop.f32.mrf.mxu0
        %v863 = vadd.f32 0.0, %v862
        %v864 = vpop.f32.mrf.mxu0
        %865 = vmatprep.mubr.f32.mxu0 0.0
        %866 = vmatmul.mubr.f32.gmra.mxu0 %v329
        %v867 = vpop.f32.mrf.mxu0
        %v868 = vadd.f32 0.0, %v867
        %v869 = vpop.f32.mrf.mxu0
        %870 = vmatprep.mubr.f32.mxu0 0.0
        %871 = vmatmul.mubr.f32.gmra.mxu0 %v332
        %v872 = vpop.f32.mrf.mxu0
        %v873 = vadd.f32 0.0, %v872
        %v874 = vpop.f32.mrf.mxu0
        %875 = vmatprep.mubr.f32.mxu0 0.0
        %876 = vmatmul.mubr.f32.gmra.mxu0 %v335
        %v877 = vpop.f32.mrf.mxu0
        %v878 = vadd.f32 0.0, %v877
        %v879 = vpop.f32.mrf.mxu0
        %880 = vmatprep.mubr.f32.mxu0 0.0
        %881 = vmatmul.mubr.f32.gmra.mxu0 %v338
        %v882 = vpop.f32.mrf.mxu0
        %v883 = vadd.f32 0.0, %v882
        %v884 = vpop.f32.mrf.mxu0
        %885 = vmatprep.mubr.f32.mxu0 0.0
        %886 = vmatmul.mubr.f32.gmra.mxu0 %v341
        %v887 = vpop.f32.mrf.mxu0
        %v888 = vadd.f32 0.0, %v887
        %v889 = vpop.f32.mrf.mxu0
        %890 = vmatprep.mubr.f32.mxu0 0.0
        %891 = vmatmul.mubr.f32.gmra.mxu0 %v344
        %v892 = vpop.f32.mrf.mxu0
        %v893 = vadd.f32 0.0, %v892
        %v894 = vpop.f32.mrf.mxu0
        %895 = vdwg.mxu0
        %v896 = vadd.f32 %v268, %v749
        %v897 = vadd.f32 %v271, %v749
        %v898 = vadd.f32 %v274, %v749
        %v899 = vadd.f32 %v277, %v749
        %v900 = vadd.f32 %v280, %v749
        %v901 = vadd.f32 %v283, %v749
        %v902 = vadd.f32 %v286, %v749
        %v903 = vadd.f32 %v289, %v749
        %v904 = vmul.f32 %v896, 0.5
        %v905 = vmul.f32 %v897, 0.5
        %v906 = vmul.f32 %v898, 0.5
        %v907 = vmul.f32 %v899, 0.5
        %v908 = vmul.f32 %v900, 0.5
        %v909 = vmul.f32 %v901, 0.5
        %v910 = vmul.f32 %v902, 0.5
        %v911 = vmul.f32 %v903, 0.5
        %v912 = vsub.f32 %v904, %v858
        %v913 = vsub.f32 %v905, %v863
        %v914 = vsub.f32 %v906, %v868
        %v915 = vsub.f32 %v907, %v873
        %v916 = vsub.f32 %v908, %v878
        %v917 = vsub.f32 %v909, %v883
        %v918 = vsub.f32 %v910, %v888
        %v919 = vsub.f32 %v911, %v893
        %v920 = vmax.f32 %v912, 0.0
        %v921 = vmax.f32 %v913, 0.0
        %v922 = vmax.f32 %v914, 0.0
        %v923 = vmax.f32 %v915, 0.0
        %v924 = vmax.f32 %v916, 0.0
        %v925 = vmax.f32 %v917, 0.0
        %v926 = vmax.f32 %v918, 0.0
        %v927 = vmax.f32 %v919, 0.0
        %928 = vst.msk [vmem:[#allocation4] sm:$0xff] %vm583, %v920
        %929 = vst.msk [vmem:[#allocation4 + $0x8] sm:$0xff] %vm583, %v921
        %930 = vst.msk [vmem:[#allocation4 + $0x10] sm:$0xff] %vm583, %v922
        %931 = vst.msk [vmem:[#allocation4 + $0x18] sm:$0xff] %vm583, %v923
        %932 = vst.msk [vmem:[#allocation4 + $0x20] sm:$0xff] %vm583, %v924
        %933 = vst.msk [vmem:[#allocation4 + $0x28] sm:$0xff] %vm583, %v925
        %934 = vst.msk [vmem:[#allocation4 + $0x30] sm:$0xff] %vm583, %v926
        %935 = vst.msk [vmem:[#allocation4 + $0x38] sm:$0xff] %vm583, %v927
        %936 = vmatprep.subr.mxu0 0.0
        %937 = vmatpush1.xpose.msra.mxu0 0.0
        %938 = vmatprep.subr.mxu0 0.0
        %939 = vmatpush1.xpose.msra.mxu0 0.0
        %940 = vmatprep.subr.mxu0 0.0
        %941 = vmatpush1.xpose.msra.mxu0 0.0
        %942 = vmatprep.subr.mxu0 0.0
        %943 = vmatpush1.xpose.msra.mxu0 0.0
        %944 = vmatprep.subr.mxu0 0.0
        %945 = vmatpush1.xpose.msra.mxu0 0.0
        %946 = vmatprep.subr.mxu0 0.0
        %947 = vmatpush1.xpose.msra.mxu0 0.0
        %948 = vmatprep.subr.mxu0 0.0
        %949 = vmatpush1.xpose.msra.mxu0 0.0
        %950 = vmatprep.subr.mxu0 0.0
        %951 = vmatpush1.xpose.msra.mxu0 0.0
        %952 = vmatprep.subr.mxu0 0.0
        %953 = vmatpush1.xpose.msra.mxu0 %v368
        %954 = vmatprep.subr.mxu0 0.0
        %955 = vmatpush1.xpose.msra.mxu0 %v365
        %956 = vmatprep.subr.mxu0 0.0
        %957 = vmatpush1.xpose.msra.mxu0 %v362
        %958 = vmatprep.subr.mxu0 0.0
        %959 = vmatpush1.xpose.msra.mxu0 %v359
        %960 = vmatprep.subr.mxu0 0.0
        %961 = vmatpush1.xpose.msra.mxu0 %v356
        %962 = vmatprep.subr.mxu0 0.0
        %963 = vmatpush1.xpose.msra.mxu0 %v353
        %964 = vmatprep.subr.mxu0 0.0
        %965 = vmatpush1.xpose.msra.mxu0 %v350
        %966 = vmatprep.subr.mxu0 0.0
        %967 = vmatpush1.xpose.msra.mxu0 %v347
        %968 = vmatprep.subr.mxu0 0.0
        %969 = vmatpush2.xpose.msra.mxu0 0.0
        %970 = vmatprep.subr.mxu0 0.0
        %971 = vmatpush2.xpose.msra.mxu0 0.0
        %972 = vmatprep.subr.mxu0 0.0
        %973 = vmatpush2.xpose.msra.mxu0 0.0
        %974 = vmatprep.subr.mxu0 0.0
        %975 = vmatpush2.xpose.msra.mxu0 0.0
        %976 = vmatprep.subr.mxu0 0.0
        %977 = vmatpush2.xpose.msra.mxu0 0.0
        %978 = vmatprep.subr.mxu0 0.0
        %979 = vmatpush2.xpose.msra.mxu0 0.0
        %980 = vmatprep.subr.mxu0 0.0
        %981 = vmatpush2.xpose.msra.mxu0 0.0
        %982 = vmatprep.subr.mxu0 0.0
        %983 = vmatpush2.xpose.msra.mxu0 0.0
        %984 = vmatprep.subr.mxu0 0.0
        %985 = vmatpush2.xpose.msra.mxu0 0.0
        %986 = vmatprep.subr.mxu0 0.0
        %987 = vmatpush2.xpose.msra.mxu0 0.0
        %988 = vmatprep.subr.mxu0 0.0
        %989 = vmatpush2.xpose.msra.mxu0 0.0
        %990 = vmatprep.subr.mxu0 0.0
        %991 = vmatpush2.xpose.msra.mxu0 0.0
        %992 = vmatprep.subr.mxu0 0.0
        %993 = vmatpush2.xpose.msra.mxu0 0.0
        %994 = vmatprep.subr.mxu0 0.0
        %995 = vmatpush2.xpose.msra.mxu0 0.0
        %996 = vmatprep.subr.mxu0 0.0
        %997 = vmatpush2.xpose.msra.mxu0 0.0
        %998 = vmatprep.subr.mxu0 0.0
        %999 = vmatpush2.xpose.msra.mxu0 0.0
        %1000 = vmatprep.mubr.f32.mxu0 0.0
        %1001 = vmatmul.mubr.f32.gmra.mxu0 %v347
        %v1002 = vpop.f32.mrf.mxu0
        %v1003 = vadd.f32 0.0, %v1002
        %v1004 = vpop.f32.mrf.mxu0
        %1005 = vmatprep.mubr.f32.mxu0 0.0
        %1006 = vmatmul.mubr.f32.gmra.mxu0 %v350
        %v1007 = vpop.f32.mrf.mxu0
        %v1008 = vadd.f32 0.0, %v1007
        %v1009 = vpop.f32.mrf.mxu0
        %1010 = vmatprep.mubr.f32.mxu0 0.0
        %1011 = vmatmul.mubr.f32.gmra.mxu0 %v353
        %v1012 = vpop.f32.mrf.mxu0
        %v1013 = vadd.f32 0.0, %v1012
        %v1014 = vpop.f32.mrf.mxu0
        %1015 = vmatprep.mubr.f32.mxu0 0.0
        %1016 = vmatmul.mubr.f32.gmra.mxu0 %v356
        %v1017 = vpop.f32.mrf.mxu0
        %v1018 = vadd.f32 0.0, %v1017
        %v1019 = vpop.f32.mrf.mxu0
        %1020 = vmatprep.mubr.f32.mxu0 0.0
        %1021 = vmatmul.mubr.f32.gmra.mxu0 %v359
        %v1022 = vpop.f32.mrf.mxu0
        %v1023 = vadd.f32 0.0, %v1022
        %v1024 = vpop.f32.mrf.mxu0
        %1025 = vmatprep.mubr.f32.mxu0 0.0
        %1026 = vmatmul.mubr.f32.gmra.mxu0 %v362
        %v1027 = vpop.f32.mrf.mxu0
        %v1028 = vadd.f32 0.0, %v1027
        %v1029 = vpop.f32.mrf.mxu0
        %1030 = vmatprep.mubr.f32.mxu0 0.0
        %1031 = vmatmul.mubr.f32.gmra.mxu0 %v365
        %v1032 = vpop.f32.mrf.mxu0
        %v1033 = vadd.f32 0.0, %v1032
        %v1034 = vpop.f32.mrf.mxu0
        %1035 = vmatprep.mubr.f32.mxu0 0.0
        %1036 = vmatmul.mubr.f32.gmra.mxu0 %v368
        %v1037 = vpop.f32.mrf.mxu0
        %v1038 = vadd.f32 0.0, %v1037
        %v1039 = vpop.f32.mrf.mxu0
        %1040 = vdwg.mxu0
        %v1041 = vadd.f32 %v300, %v549
        %v1042 = vadd.f32 %v303, %v549
        %v1043 = vadd.f32 %v306, %v549
        %v1044 = vadd.f32 %v309, %v549
        %v1045 = vadd.f32 %v312, %v549
        %v1046 = vadd.f32 %v315, %v549
        %v1047 = vadd.f32 %v318, %v549
        %v1048 = vadd.f32 %v321, %v549
        %v1049 = vmul.f32 %v1041, 0.5
        %v1050 = vmul.f32 %v1042, 0.5
        %v1051 = vmul.f32 %v1043, 0.5
        %v1052 = vmul.f32 %v1044, 0.5
        %v1053 = vmul.f32 %v1045, 0.5
        %v1054 = vmul.f32 %v1046, 0.5
        %v1055 = vmul.f32 %v1047, 0.5
        %v1056 = vmul.f32 %v1048, 0.5
        %v1057 = vsub.f32 %v1049, %v1003
        %v1058 = vsub.f32 %v1050, %v1008
        %v1059 = vsub.f32 %v1051, %v1013
        %v1060 = vsub.f32 %v1052, %v1018
        %v1061 = vsub.f32 %v1053, %v1023
        %v1062 = vsub.f32 %v1054, %v1028
        %v1063 = vsub.f32 %v1055, %v1033
        %v1064 = vsub.f32 %v1056, %v1038
        %v1065 = vmax.f32 %v1057, 0.0
        %v1066 = vmax.f32 %v1058, 0.0
        %v1067 = vmax.f32 %v1059, 0.0
        %v1068 = vmax.f32 %v1060, 0.0
        %v1069 = vmax.f32 %v1061, 0.0
        %v1070 = vmax.f32 %v1062, 0.0
        %v1071 = vmax.f32 %v1063, 0.0
        %v1072 = vmax.f32 %v1064, 0.0
        %1073 = vst.msk [vmem:[#allocation5] sm:$0xff] %vm583, %v1065
        %1074 = vst.msk [vmem:[#allocation5 + $0x8] sm:$0xff] %vm583, %v1066
        %1075 = vst.msk [vmem:[#allocation5 + $0x10] sm:$0xff] %vm583, %v1067
        %1076 = vst.msk [vmem:[#allocation5 + $0x18] sm:$0xff] %vm583, %v1068
        %1077 = vst.msk [vmem:[#allocation5 + $0x20] sm:$0xff] %vm583, %v1069
        %1078 = vst.msk [vmem:[#allocation5 + $0x28] sm:$0xff] %vm583, %v1070
        %1079 = vst.msk [vmem:[#allocation5 + $0x30] sm:$0xff] %vm583, %v1071
        %1080 = vst.msk [vmem:[#allocation5 + $0x38] sm:$0xff] %vm583, %v1072
        %s1081 = sld [smem:[#allocation6]]
        %s1082 = sld [smem:[#allocation8]]
        %v1083 = vld [vmem:[#allocation2] sm:$0xff]
        %v1084 = vld [vmem:[#allocation2 + $0x8] sm:$0xff]
        %v1085 = vld [vmem:[#allocation2 + $0x10] sm:$0xff]
        %v1086 = vld [vmem:[#allocation2 + $0x18] sm:$0xff]
        %v1087 = vld [vmem:[#allocation2 + $0x20] sm:$0xff]
        %v1088 = vld [vmem:[#allocation2 + $0x28] sm:$0xff]
        %v1089 = vld [vmem:[#allocation2 + $0x30] sm:$0xff]
        %v1090 = vld [vmem:[#allocation2 + $0x38] sm:$0xff]
        %v1091 = vstv %s1082
        %v1092 = vmul.f32 %v1083, %v1091
        %v1093 = vmul.f32 %v1084, %v1091
        %v1094 = vmul.f32 %v1085, %v1091
        %v1095 = vmul.f32 %v1086, %v1091
        %v1096 = vmul.f32 %v1087, %v1091
        %v1097 = vmul.f32 %v1088, %v1091
        %v1098 = vmul.f32 %v1089, %v1091
        %v1099 = vmul.f32 %v1090, %v1091
        %v1100 = vsub.f32 -4.158883, %v1092
        %v1101 = vsub.f32 -4.158883, %v1093
        %v1102 = vsub.f32 -4.158883, %v1094
        %v1103 = vsub.f32 -4.158883, %v1095
        %v1104 = vsub.f32 -4.158883, %v1096
        %v1105 = vsub.f32 -4.158883, %v1097
        %v1106 = vsub.f32 -4.158883, %v1098
        %v1107 = vsub.f32 -4.158883, %v1099
        %v1108 = vsel %vm583, %v1100, -inf
        %1109 = vmax.xlane.f32.xlu0 %v1108
        %v1110 = vpop.xlane.xlu0 %1109
        %v1111 = vsel %vm583, %v1101, -inf
        %1112 = vmax.xlane.f32.xlu0 %v1111
        %v1113 = vpop.xlane.xlu0 %1112
        %v1114 = vsel %vm583, %v1102, -inf
        %1115 = vmax.xlane.f32.xlu0 %v1114
        %v1116 = vpop.xlane.xlu0 %1115
        %v1117 = vsel %vm583, %v1103, -inf
        %1118 = vmax.xlane.f32.xlu0 %v1117
        %v1119 = vpop.xlane.xlu0 %1118
        %v1120 = vsel %vm583, %v1104, -inf
        %1121 = vmax.xlane.f32.xlu0 %v1120
        %v1122 = vpop.xlane.xlu0 %1121
        %v1123 = vsel %vm583, %v1105, -inf
        %1124 = vmax.xlane.f32.xlu0 %v1123
        %v1125 = vpop.xlane.xlu0 %1124
        %v1126 = vsel %vm583, %v1106, -inf
        %1127 = vmax.xlane.f32.xlu0 %v1126
        %v1128 = vpop.xlane.xlu0 %1127
        %v1129 = vsel %vm583, %v1107, -inf
        %1130 = vmax.xlane.f32.xlu0 %v1129
        %v1131 = vpop.xlane.xlu0 %1130
        %v1132 = vsub.f32 %v1100, %v1110
        %v1133 = vsub.f32 %v1101, %v1113
        %v1134 = vsub.f32 %v1102, %v1116
        %v1135 = vsub.f32 %v1103, %v1119
        %v1136 = vsub.f32 %v1104, %v1122
        %v1137 = vsub.f32 %v1105, %v1125
        %v1138 = vsub.f32 %v1106, %v1128
        %v1139 = vsub.f32 %v1107, %v1131
        %v1140 = vmul.f32 %v1132, 1.442695
        %v1141 = vpow.pop %v1140
        %v1142 = vmul.f32 %v1133, 1.442695
        %v1143 = vpow.pop %v1142
        %v1144 = vmul.f32 %v1134, 1.442695
        %v1145 = vpow.pop %v1144
        %v1146 = vmul.f32 %v1135, 1.442695
        %v1147 = vpow.pop %v1146
        %v1148 = vmul.f32 %v1136, 1.442695
        %v1149 = vpow.pop %v1148
        %v1150 = vmul.f32 %v1137, 1.442695
        %v1151 = vpow.pop %v1150
        %v1152 = vmul.f32 %v1138, 1.442695
        %v1153 = vpow.pop %v1152
        %v1154 = vmul.f32 %v1139, 1.442695
        %v1155 = vpow.pop %v1154
        %v1156 = vsel %vm583, %v1141, 0.0
        %1157 = vadd.xlane.f32.xlu0 %v1156
        %v1158 = vpop.xlane.xlu0 %1157
        %v1159 = vsel %vm583, %v1143, 0.0
        %1160 = vadd.xlane.f32.xlu0 %v1159
        %v1161 = vpop.xlane.xlu0 %1160
        %v1162 = vsel %vm583, %v1145, 0.0
        %1163 = vadd.xlane.f32.xlu0 %v1162
        %v1164 = vpop.xlane.xlu0 %1163
        %v1165 = vsel %vm583, %v1147, 0.0
        %1166 = vadd.xlane.f32.xlu0 %v1165
        %v1167 = vpop.xlane.xlu0 %1166
        %v1168 = vsel %vm583, %v1149, 0.0
        %1169 = vadd.xlane.f32.xlu0 %v1168
        %v1170 = vpop.xlane.xlu0 %1169
        %v1171 = vsel %vm583, %v1151, 0.0
        %1172 = vadd.xlane.f32.xlu0 %v1171
        %v1173 = vpop.xlane.xlu0 %1172
        %v1174 = vsel %vm583, %v1153, 0.0
        %1175 = vadd.xlane.f32.xlu0 %v1174
        %v1176 = vpop.xlane.xlu0 %1175
        %v1177 = vsel %vm583, %v1155, 0.0
        %1178 = vadd.xlane.f32.xlu0 %v1177
        %v1179 = vpop.xlane.xlu0 %1178
        %v1180 = vlog2.pop %v1158
        %v1181 = vmul.f32 %v1180, 0.6931472
        %v1182 = vlog2.pop %v1161
        %v1183 = vmul.f32 %v1182, 0.6931472
        %v1184 = vlog2.pop %v1164
        %v1185 = vmul.f32 %v1184, 0.6931472
        %v1186 = vlog2.pop %v1167
        %v1187 = vmul.f32 %v1186, 0.6931472
        %v1188 = vlog2.pop %v1170
        %v1189 = vmul.f32 %v1188, 0.6931472
        %v1190 = vlog2.pop %v1173
        %v1191 = vmul.f32 %v1190, 0.6931472
        %v1192 = vlog2.pop %v1176
        %v1193 = vmul.f32 %v1192, 0.6931472
        %v1194 = vlog2.pop %v1179
        %v1195 = vmul.f32 %v1194, 0.6931472
        %v1196 = vadd.f32 %v1110, %v1181
        %v1197 = vadd.f32 %v1113, %v1183
        %v1198 = vadd.f32 %v1116, %v1185
        %v1199 = vadd.f32 %v1119, %v1187
        %v1200 = vadd.f32 %v1122, %v1189
        %v1201 = vadd.f32 %v1125, %v1191
        %v1202 = vadd.f32 %v1128, %v1193
        %v1203 = vadd.f32 %v1131, %v1195
        %s1204 = ssub.f32 0.0, %s1081
        %v1205 = vstv %s1204
        %v1206 = vmul.f32 %v1205, %v1196
        %v1207 = vmul.f32 %v1205, %v1197
        %v1208 = vmul.f32 %v1205, %v1198
        %v1209 = vmul.f32 %v1205, %v1199
        %v1210 = vmul.f32 %v1205, %v1200
        %v1211 = vmul.f32 %v1205, %v1201
        %v1212 = vmul.f32 %v1205, %v1202
        %v1213 = vmul.f32 %v1205, %v1203
        %1214 = vxpose.xlu0.b32.start [1/16] %v1206, 128
        %1215 = vxpose.xlu0.b32.cont [2/16] %v1207, 128
        %1216 = vxpose.xlu0.b32.cont [3/16] %v1208, 128
        %1217 = vxpose.xlu0.b32.cont [4/16] %v1209, 128
        %1218 = vxpose.xlu0.b32.cont [5/16] %v1210, 128
        %1219 = vxpose.xlu0.b32.cont [6/16] %v1211, 128
        %1220 = vxpose.xlu0.b32.cont [7/16] %v1212, 128
        %1221 = vxpose.xlu0.b32.cont [8/16] %v1213, 128
        %1222 = vxpose.xlu0.b32.cont [9/16] 0.0, 128
        %1223 = vxpose.xlu0.b32.cont [10/16] 0.0, 128
        %1224 = vxpose.xlu0.b32.cont [11/16] 0.0, 128
        %1225 = vxpose.xlu0.b32.cont [12/16] 0.0, 128
        %1226 = vxpose.xlu0.b32.cont [13/16] 0.0, 128
        %1227 = vxpose.xlu0.b32.cont [14/16] 0.0, 128
        %1228 = vxpose.xlu0.b32.cont [15/16] 0.0, 128
        %1229 = vxpose.xlu0.b32.end [16/16] 0.0, 128
        %v1230 = vpop.trf.xlu0
        %v1231 = vpop.trf.xlu0
        %v1232 = vpop.trf.xlu0
        %v1233 = vpop.trf.xlu0
        %v1234 = vpop.trf.xlu0
        %v1235 = vpop.trf.xlu0
        %v1236 = vpop.trf.xlu0
        %v1237 = vpop.trf.xlu0
        %v1238 = vpop.trf.xlu0
        %v1239 = vpop.trf.xlu0
        %v1240 = vpop.trf.xlu0
        %v1241 = vpop.trf.xlu0
        %v1242 = vpop.trf.xlu0
        %v1243 = vpop.trf.xlu0
        %v1244 = vpop.trf.xlu0
        %v1245 = vpop.trf.xlu0
        %v1246 = vld [vmem:[#allocation3] sm:$0xff]
        %v1247 = vld [vmem:[#allocation3 + $0x8] sm:$0xff]
        %v1248 = vld [vmem:[#allocation3 + $0x10] sm:$0xff]
        %v1249 = vld [vmem:[#allocation3 + $0x18] sm:$0xff]
        %v1250 = vld [vmem:[#allocation3 + $0x20] sm:$0xff]
        %v1251 = vld [vmem:[#allocation3 + $0x28] sm:$0xff]
        %v1252 = vld [vmem:[#allocation3 + $0x30] sm:$0xff]
        %v1253 = vld [vmem:[#allocation3 + $0x38] sm:$0xff]
        %v1254 = vmul.f32 %v1246, %v1091
        %v1255 = vmul.f32 %v1247, %v1091
        %v1256 = vmul.f32 %v1248, %v1091
        %v1257 = vmul.f32 %v1249, %v1091
        %v1258 = vmul.f32 %v1250, %v1091
        %v1259 = vmul.f32 %v1251, %v1091
        %v1260 = vmul.f32 %v1252, %v1091
        %v1261 = vmul.f32 %v1253, %v1091
        %v1262 = vsub.f32 -4.158883, %v1254
        %v1263 = vsub.f32 -4.158883, %v1255
        %v1264 = vsub.f32 -4.158883, %v1256
        %v1265 = vsub.f32 -4.158883, %v1257
        %v1266 = vsub.f32 -4.158883, %v1258
        %v1267 = vsub.f32 -4.158883, %v1259
        %v1268 = vsub.f32 -4.158883, %v1260
        %v1269 = vsub.f32 -4.158883, %v1261
        %v1270 = vsel %vm583, %v1262, -inf
        %1271 = vmax.xlane.f32.xlu0 %v1270
        %v1272 = vpop.xlane.xlu0 %1271
        %v1273 = vsel %vm583, %v1263, -inf
        %1274 = vmax.xlane.f32.xlu0 %v1273
        %v1275 = vpop.xlane.xlu0 %1274
        %v1276 = vsel %vm583, %v1264, -inf
        %1277 = vmax.xlane.f32.xlu0 %v1276
        %v1278 = vpop.xlane.xlu0 %1277
        %v1279 = vsel %vm583, %v1265, -inf
        %1280 = vmax.xlane.f32.xlu0 %v1279
        %v1281 = vpop.xlane.xlu0 %1280
        %v1282 = vsel %vm583, %v1266, -inf
        %1283 = vmax.xlane.f32.xlu0 %v1282
        %v1284 = vpop.xlane.xlu0 %1283
        %v1285 = vsel %vm583, %v1267, -inf
        %1286 = vmax.xlane.f32.xlu0 %v1285
        %v1287 = vpop.xlane.xlu0 %1286
        %v1288 = vsel %vm583, %v1268, -inf
        %1289 = vmax.xlane.f32.xlu0 %v1288
        %v1290 = vpop.xlane.xlu0 %1289
        %v1291 = vsel %vm583, %v1269, -inf
        %1292 = vmax.xlane.f32.xlu0 %v1291
        %v1293 = vpop.xlane.xlu0 %1292
        %v1294 = vsub.f32 %v1262, %v1272
        %v1295 = vsub.f32 %v1263, %v1275
        %v1296 = vsub.f32 %v1264, %v1278
        %v1297 = vsub.f32 %v1265, %v1281
        %v1298 = vsub.f32 %v1266, %v1284
        %v1299 = vsub.f32 %v1267, %v1287
        %v1300 = vsub.f32 %v1268, %v1290
        %v1301 = vsub.f32 %v1269, %v1293
        %v1302 = vmul.f32 %v1294, 1.442695
        %v1303 = vpow.pop %v1302
        %v1304 = vmul.f32 %v1295, 1.442695
        %v1305 = vpow.pop %v1304
        %v1306 = vmul.f32 %v1296, 1.442695
        %v1307 = vpow.pop %v1306
        %v1308 = vmul.f32 %v1297, 1.442695
        %v1309 = vpow.pop %v1308
        %v1310 = vmul.f32 %v1298, 1.442695
        %v1311 = vpow.pop %v1310
        %v1312 = vmul.f32 %v1299, 1.442695
        %v1313 = vpow.pop %v1312
        %v1314 = vmul.f32 %v1300, 1.442695
        %v1315 = vpow.pop %v1314
        %v1316 = vmul.f32 %v1301, 1.442695
        %v1317 = vpow.pop %v1316
        %v1318 = vsel %vm583, %v1303, 0.0
        %1319 = vadd.xlane.f32.xlu0 %v1318
        %v1320 = vpop.xlane.xlu0 %1319
        %v1321 = vsel %vm583, %v1305, 0.0
        %1322 = vadd.xlane.f32.xlu0 %v1321
        %v1323 = vpop.xlane.xlu0 %1322
        %v1324 = vsel %vm583, %v1307, 0.0
        %1325 = vadd.xlane.f32.xlu0 %v1324
        %v1326 = vpop.xlane.xlu0 %1325
        %v1327 = vsel %vm583, %v1309, 0.0
        %1328 = vadd.xlane.f32.xlu0 %v1327
        %v1329 = vpop.xlane.xlu0 %1328
        %v1330 = vsel %vm583, %v1311, 0.0
        %1331 = vadd.xlane.f32.xlu0 %v1330
        %v1332 = vpop.xlane.xlu0 %1331
        %v1333 = vsel %vm583, %v1313, 0.0
        %1334 = vadd.xlane.f32.xlu0 %v1333
        %v1335 = vpop.xlane.xlu0 %1334
        %v1336 = vsel %vm583, %v1315, 0.0
        %1337 = vadd.xlane.f32.xlu0 %v1336
        %v1338 = vpop.xlane.xlu0 %1337
        %v1339 = vsel %vm583, %v1317, 0.0
        %1340 = vadd.xlane.f32.xlu0 %v1339
        %v1341 = vpop.xlane.xlu0 %1340
        %v1342 = vlog2.pop %v1320
        %v1343 = vmul.f32 %v1342, 0.6931472
        %v1344 = vlog2.pop %v1323
        %v1345 = vmul.f32 %v1344, 0.6931472
        %v1346 = vlog2.pop %v1326
        %v1347 = vmul.f32 %v1346, 0.6931472
        %v1348 = vlog2.pop %v1329
        %v1349 = vmul.f32 %v1348, 0.6931472
        %v1350 = vlog2.pop %v1332
        %v1351 = vmul.f32 %v1350, 0.6931472
        %v1352 = vlog2.pop %v1335
        %v1353 = vmul.f32 %v1352, 0.6931472
        %v1354 = vlog2.pop %v1338
        %v1355 = vmul.f32 %v1354, 0.6931472
        %v1356 = vlog2.pop %v1341
        %v1357 = vmul.f32 %v1356, 0.6931472
        %v1358 = vadd.f32 %v1272, %v1343
        %v1359 = vadd.f32 %v1275, %v1345
        %v1360 = vadd.f32 %v1278, %v1347
        %v1361 = vadd.f32 %v1281, %v1349
        %v1362 = vadd.f32 %v1284, %v1351
        %v1363 = vadd.f32 %v1287, %v1353
        %v1364 = vadd.f32 %v1290, %v1355
        %v1365 = vadd.f32 %v1293, %v1357
        %v1366 = vmul.f32 %v1205, %v1358
        %v1367 = vmul.f32 %v1205, %v1359
        %v1368 = vmul.f32 %v1205, %v1360
        %v1369 = vmul.f32 %v1205, %v1361
        %v1370 = vmul.f32 %v1205, %v1362
        %v1371 = vmul.f32 %v1205, %v1363
        %v1372 = vmul.f32 %v1205, %v1364
        %v1373 = vmul.f32 %v1205, %v1365
        %1374 = vxpose.xlu0.b32.start [1/16] %v1366, 128
        %1375 = vxpose.xlu0.b32.cont [2/16] %v1367, 128
        %1376 = vxpose.xlu0.b32.cont [3/16] %v1368, 128
        %1377 = vxpose.xlu0.b32.cont [4/16] %v1369, 128
        %1378 = vxpose.xlu0.b32.cont [5/16] %v1370, 128
        %1379 = vxpose.xlu0.b32.cont [6/16] %v1371, 128
        %1380 = vxpose.xlu0.b32.cont [7/16] %v1372, 128
        %1381 = vxpose.xlu0.b32.cont [8/16] %v1373, 128
        %1382 = vxpose.xlu0.b32.cont [9/16] 0.0, 128
        %1383 = vxpose.xlu0.b32.cont [10/16] 0.0, 128
        %1384 = vxpose.xlu0.b32.cont [11/16] 0.0, 128
        %1385 = vxpose.xlu0.b32.cont [12/16] 0.0, 128
        %1386 = vxpose.xlu0.b32.cont [13/16] 0.0, 128
        %1387 = vxpose.xlu0.b32.cont [14/16] 0.0, 128
        %1388 = vxpose.xlu0.b32.cont [15/16] 0.0, 128
        %1389 = vxpose.xlu0.b32.end [16/16] 0.0, 128
        %v1390 = vpop.trf.xlu0
        %v1391 = vpop.trf.xlu0
        %v1392 = vpop.trf.xlu0
        %v1393 = vpop.trf.xlu0
        %v1394 = vpop.trf.xlu0
        %v1395 = vpop.trf.xlu0
        %v1396 = vpop.trf.xlu0
        %v1397 = vpop.trf.xlu0
        %v1398 = vpop.trf.xlu0
        %v1399 = vpop.trf.xlu0
        %v1400 = vpop.trf.xlu0
        %v1401 = vpop.trf.xlu0
        %v1402 = vpop.trf.xlu0
        %v1403 = vpop.trf.xlu0
        %v1404 = vpop.trf.xlu0
        %v1405 = vpop.trf.xlu0
        %v1406 = vld [vmem:[#allocation4] sm:$0xff]
        %v1407 = vld [vmem:[#allocation4 + $0x8] sm:$0xff]
        %v1408 = vld [vmem:[#allocation4 + $0x10] sm:$0xff]
        %v1409 = vld [vmem:[#allocation4 + $0x18] sm:$0xff]
        %v1410 = vld [vmem:[#allocation4 + $0x20] sm:$0xff]
        %v1411 = vld [vmem:[#allocation4 + $0x28] sm:$0xff]
        %v1412 = vld [vmem:[#allocation4 + $0x30] sm:$0xff]
        %v1413 = vld [vmem:[#allocation4 + $0x38] sm:$0xff]
        %v1414 = vmul.f32 %v1406, %v1091
        %v1415 = vmul.f32 %v1407, %v1091
        %v1416 = vmul.f32 %v1408, %v1091
        %v1417 = vmul.f32 %v1409, %v1091
        %v1418 = vmul.f32 %v1410, %v1091
        %v1419 = vmul.f32 %v1411, %v1091
        %v1420 = vmul.f32 %v1412, %v1091
        %v1421 = vmul.f32 %v1413, %v1091
        %v1422 = vsub.f32 -4.158883, %v1414
        %v1423 = vsub.f32 -4.158883, %v1415
        %v1424 = vsub.f32 -4.158883, %v1416
        %v1425 = vsub.f32 -4.158883, %v1417
        %v1426 = vsub.f32 -4.158883, %v1418
        %v1427 = vsub.f32 -4.158883, %v1419
        %v1428 = vsub.f32 -4.158883, %v1420
        %v1429 = vsub.f32 -4.158883, %v1421
        %v1430 = vsel %vm583, %v1422, -inf
        %1431 = vmax.xlane.f32.xlu0 %v1430
        %v1432 = vpop.xlane.xlu0 %1431
        %v1433 = vsel %vm583, %v1423, -inf
        %1434 = vmax.xlane.f32.xlu0 %v1433
        %v1435 = vpop.xlane.xlu0 %1434
        %v1436 = vsel %vm583, %v1424, -inf
        %1437 = vmax.xlane.f32.xlu0 %v1436
        %v1438 = vpop.xlane.xlu0 %1437
        %v1439 = vsel %vm583, %v1425, -inf
        %1440 = vmax.xlane.f32.xlu0 %v1439
        %v1441 = vpop.xlane.xlu0 %1440
        %v1442 = vsel %vm583, %v1426, -inf
        %1443 = vmax.xlane.f32.xlu0 %v1442
        %v1444 = vpop.xlane.xlu0 %1443
        %v1445 = vsel %vm583, %v1427, -inf
        %1446 = vmax.xlane.f32.xlu0 %v1445
        %v1447 = vpop.xlane.xlu0 %1446
        %v1448 = vsel %vm583, %v1428, -inf
        %1449 = vmax.xlane.f32.xlu0 %v1448
        %v1450 = vpop.xlane.xlu0 %1449
        %v1451 = vsel %vm583, %v1429, -inf
        %1452 = vmax.xlane.f32.xlu0 %v1451
        %v1453 = vpop.xlane.xlu0 %1452
        %v1454 = vsub.f32 %v1422, %v1432
        %v1455 = vsub.f32 %v1423, %v1435
        %v1456 = vsub.f32 %v1424, %v1438
        %v1457 = vsub.f32 %v1425, %v1441
        %v1458 = vsub.f32 %v1426, %v1444
        %v1459 = vsub.f32 %v1427, %v1447
        %v1460 = vsub.f32 %v1428, %v1450
        %v1461 = vsub.f32 %v1429, %v1453
        %v1462 = vmul.f32 %v1454, 1.442695
        %v1463 = vpow.pop %v1462
        %v1464 = vmul.f32 %v1455, 1.442695
        %v1465 = vpow.pop %v1464
        %v1466 = vmul.f32 %v1456, 1.442695
        %v1467 = vpow.pop %v1466
        %v1468 = vmul.f32 %v1457, 1.442695
        %v1469 = vpow.pop %v1468
        %v1470 = vmul.f32 %v1458, 1.442695
        %v1471 = vpow.pop %v1470
        %v1472 = vmul.f32 %v1459, 1.442695
        %v1473 = vpow.pop %v1472
        %v1474 = vmul.f32 %v1460, 1.442695
        %v1475 = vpow.pop %v1474
        %v1476 = vmul.f32 %v1461, 1.442695
        %v1477 = vpow.pop %v1476
        %v1478 = vsel %vm583, %v1463, 0.0
        %1479 = vadd.xlane.f32.xlu0 %v1478
        %v1480 = vpop.xlane.xlu0 %1479
        %v1481 = vsel %vm583, %v1465, 0.0
        %1482 = vadd.xlane.f32.xlu0 %v1481
        %v1483 = vpop.xlane.xlu0 %1482
        %v1484 = vsel %vm583, %v1467, 0.0
        %1485 = vadd.xlane.f32.xlu0 %v1484
        %v1486 = vpop.xlane.xlu0 %1485
        %v1487 = vsel %vm583, %v1469, 0.0
        %1488 = vadd.xlane.f32.xlu0 %v1487
        %v1489 = vpop.xlane.xlu0 %1488
        %v1490 = vsel %vm583, %v1471, 0.0
        %1491 = vadd.xlane.f32.xlu0 %v1490
        %v1492 = vpop.xlane.xlu0 %1491
        %v1493 = vsel %vm583, %v1473, 0.0
        %1494 = vadd.xlane.f32.xlu0 %v1493
        %v1495 = vpop.xlane.xlu0 %1494
        %v1496 = vsel %vm583, %v1475, 0.0
        %1497 = vadd.xlane.f32.xlu0 %v1496
        %v1498 = vpop.xlane.xlu0 %1497
        %v1499 = vsel %vm583, %v1477, 0.0
        %1500 = vadd.xlane.f32.xlu0 %v1499
        %v1501 = vpop.xlane.xlu0 %1500
        %v1502 = vlog2.pop %v1480
        %v1503 = vmul.f32 %v1502, 0.6931472
        %v1504 = vlog2.pop %v1483
        %v1505 = vmul.f32 %v1504, 0.6931472
        %v1506 = vlog2.pop %v1486
        %v1507 = vmul.f32 %v1506, 0.6931472
        %v1508 = vlog2.pop %v1489
        %v1509 = vmul.f32 %v1508, 0.6931472
        %v1510 = vlog2.pop %v1492
        %v1511 = vmul.f32 %v1510, 0.6931472
        %v1512 = vlog2.pop %v1495
        %v1513 = vmul.f32 %v1512, 0.6931472
        %v1514 = vlog2.pop %v1498
        %v1515 = vmul.f32 %v1514, 0.6931472
        %v1516 = vlog2.pop %v1501
        %v1517 = vmul.f32 %v1516, 0.6931472
        %v1518 = vadd.f32 %v1432, %v1503
        %v1519 = vadd.f32 %v1435, %v1505
        %v1520 = vadd.f32 %v1438, %v1507
        %v1521 = vadd.f32 %v1441, %v1509
        %v1522 = vadd.f32 %v1444, %v1511
        %v1523 = vadd.f32 %v1447, %v1513
        %v1524 = vadd.f32 %v1450, %v1515
        %v1525 = vadd.f32 %v1453, %v1517
        %v1526 = vmul.f32 %v1205, %v1518
        %v1527 = vmul.f32 %v1205, %v1519
        %v1528 = vmul.f32 %v1205, %v1520
        %v1529 = vmul.f32 %v1205, %v1521
        %v1530 = vmul.f32 %v1205, %v1522
        %v1531 = vmul.f32 %v1205, %v1523
        %v1532 = vmul.f32 %v1205, %v1524
        %v1533 = vmul.f32 %v1205, %v1525
        %1534 = vxpose.xlu0.b32.start [1/16] %v1526, 128
        %1535 = vxpose.xlu0.b32.cont [2/16] %v1527, 128
        %1536 = vxpose.xlu0.b32.cont [3/16] %v1528, 128
        %1537 = vxpose.xlu0.b32.cont [4/16] %v1529, 128
        %1538 = vxpose.xlu0.b32.cont [5/16] %v1530, 128
        %1539 = vxpose.xlu0.b32.cont [6/16] %v1531, 128
        %1540 = vxpose.xlu0.b32.cont [7/16] %v1532, 128
        %1541 = vxpose.xlu0.b32.cont [8/16] %v1533, 128
        %1542 = vxpose.xlu0.b32.cont [9/16] 0.0, 128
        %1543 = vxpose.xlu0.b32.cont [10/16] 0.0, 128
        %1544 = vxpose.xlu0.b32.cont [11/16] 0.0, 128
        %1545 = vxpose.xlu0.b32.cont [12/16] 0.0, 128
        %1546 = vxpose.xlu0.b32.cont [13/16] 0.0, 128
        %1547 = vxpose.xlu0.b32.cont [14/16] 0.0, 128
        %1548 = vxpose.xlu0.b32.cont [15/16] 0.0, 128
        %1549 = vxpose.xlu0.b32.end [16/16] 0.0, 128
        %v1550 = vpop.trf.xlu0
        %v1551 = vpop.trf.xlu0
        %v1552 = vpop.trf.xlu0
        %v1553 = vpop.trf.xlu0
        %v1554 = vpop.trf.xlu0
        %v1555 = vpop.trf.xlu0
        %v1556 = vpop.trf.xlu0
        %v1557 = vpop.trf.xlu0
        %v1558 = vpop.trf.xlu0
        %v1559 = vpop.trf.xlu0
        %v1560 = vpop.trf.xlu0
        %v1561 = vpop.trf.xlu0
        %v1562 = vpop.trf.xlu0
        %v1563 = vpop.trf.xlu0
        %v1564 = vpop.trf.xlu0
        %v1565 = vpop.trf.xlu0
        %v1566 = vld [vmem:[#allocation5] sm:$0xff]
        %v1567 = vld [vmem:[#allocation5 + $0x8] sm:$0xff]
        %v1568 = vld [vmem:[#allocation5 + $0x10] sm:$0xff]
        %v1569 = vld [vmem:[#allocation5 + $0x18] sm:$0xff]
        %v1570 = vld [vmem:[#allocation5 + $0x20] sm:$0xff]
        %v1571 = vld [vmem:[#allocation5 + $0x28] sm:$0xff]
        %v1572 = vld [vmem:[#allocation5 + $0x30] sm:$0xff]
        %v1573 = vld [vmem:[#allocation5 + $0x38] sm:$0xff]
        %v1574 = vmul.f32 %v1566, %v1091
        %v1575 = vmul.f32 %v1567, %v1091
        %v1576 = vmul.f32 %v1568, %v1091
        %v1577 = vmul.f32 %v1569, %v1091
        %v1578 = vmul.f32 %v1570, %v1091
        %v1579 = vmul.f32 %v1571, %v1091
        %v1580 = vmul.f32 %v1572, %v1091
        %v1581 = vmul.f32 %v1573, %v1091
        %v1582 = vsub.f32 -4.158883, %v1574
        %v1583 = vsub.f32 -4.158883, %v1575
        %v1584 = vsub.f32 -4.158883, %v1576
        %v1585 = vsub.f32 -4.158883, %v1577
        %v1586 = vsub.f32 -4.158883, %v1578
        %v1587 = vsub.f32 -4.158883, %v1579
        %v1588 = vsub.f32 -4.158883, %v1580
        %v1589 = vsub.f32 -4.158883, %v1581
        %v1590 = vsel %vm583, %v1582, -inf
        %1591 = vmax.xlane.f32.xlu0 %v1590
        %v1592 = vpop.xlane.xlu0 %1591
        %v1593 = vsel %vm583, %v1583, -inf
        %1594 = vmax.xlane.f32.xlu0 %v1593
        %v1595 = vpop.xlane.xlu0 %1594
        %v1596 = vsel %vm583, %v1584, -inf
        %1597 = vmax.xlane.f32.xlu0 %v1596
        %v1598 = vpop.xlane.xlu0 %1597
        %v1599 = vsel %vm583, %v1585, -inf
        %1600 = vmax.xlane.f32.xlu0 %v1599
        %v1601 = vpop.xlane.xlu0 %1600
        %v1602 = vsel %vm583, %v1586, -inf
        %1603 = vmax.xlane.f32.xlu0 %v1602
        %v1604 = vpop.xlane.xlu0 %1603
        %v1605 = vsel %vm583, %v1587, -inf
        %1606 = vmax.xlane.f32.xlu0 %v1605
        %v1607 = vpop.xlane.xlu0 %1606
        %v1608 = vsel %vm583, %v1588, -inf
        %1609 = vmax.xlane.f32.xlu0 %v1608
        %v1610 = vpop.xlane.xlu0 %1609
        %v1611 = vsel %vm583, %v1589, -inf
        %1612 = vmax.xlane.f32.xlu0 %v1611
        %v1613 = vpop.xlane.xlu0 %1612
        %v1614 = vsub.f32 %v1582, %v1592
        %v1615 = vsub.f32 %v1583, %v1595
        %v1616 = vsub.f32 %v1584, %v1598
        %v1617 = vsub.f32 %v1585, %v1601
        %v1618 = vsub.f32 %v1586, %v1604
        %v1619 = vsub.f32 %v1587, %v1607
        %v1620 = vsub.f32 %v1588, %v1610
        %v1621 = vsub.f32 %v1589, %v1613
        %v1622 = vmul.f32 %v1614, 1.442695
        %v1623 = vpow.pop %v1622
        %v1624 = vmul.f32 %v1615, 1.442695
        %v1625 = vpow.pop %v1624
        %v1626 = vmul.f32 %v1616, 1.442695
        %v1627 = vpow.pop %v1626
        %v1628 = vmul.f32 %v1617, 1.442695
        %v1629 = vpow.pop %v1628
        %v1630 = vmul.f32 %v1618, 1.442695
        %v1631 = vpow.pop %v1630
        %v1632 = vmul.f32 %v1619, 1.442695
        %v1633 = vpow.pop %v1632
        %v1634 = vmul.f32 %v1620, 1.442695
        %v1635 = vpow.pop %v1634
        %v1636 = vmul.f32 %v1621, 1.442695
        %v1637 = vpow.pop %v1636
        %v1638 = vsel %vm583, %v1623, 0.0
        %1639 = vadd.xlane.f32.xlu0 %v1638
        %v1640 = vpop.xlane.xlu0 %1639
        %v1641 = vsel %vm583, %v1625, 0.0
        %1642 = vadd.xlane.f32.xlu0 %v1641
        %v1643 = vpop.xlane.xlu0 %1642
        %v1644 = vsel %vm583, %v1627, 0.0
        %1645 = vadd.xlane.f32.xlu0 %v1644
        %v1646 = vpop.xlane.xlu0 %1645
        %v1647 = vsel %vm583, %v1629, 0.0
        %1648 = vadd.xlane.f32.xlu0 %v1647
        %v1649 = vpop.xlane.xlu0 %1648
        %v1650 = vsel %vm583, %v1631, 0.0
        %1651 = vadd.xlane.f32.xlu0 %v1650
        %v1652 = vpop.xlane.xlu0 %1651
        %v1653 = vsel %vm583, %v1633, 0.0
        %1654 = vadd.xlane.f32.xlu0 %v1653
        %v1655 = vpop.xlane.xlu0 %1654
        %v1656 = vsel %vm583, %v1635, 0.0
        %1657 = vadd.xlane.f32.xlu0 %v1656
        %v1658 = vpop.xlane.xlu0 %1657
        %v1659 = vsel %vm583, %v1637, 0.0
        %1660 = vadd.xlane.f32.xlu0 %v1659
        %v1661 = vpop.xlane.xlu0 %1660
        %v1662 = vlog2.pop %v1640
        %v1663 = vmul.f32 %v1662, 0.6931472
        %v1664 = vlog2.pop %v1643
        %v1665 = vmul.f32 %v1664, 0.6931472
        %v1666 = vlog2.pop %v1646
        %v1667 = vmul.f32 %v1666, 0.6931472
        %v1668 = vlog2.pop %v1649
        %v1669 = vmul.f32 %v1668, 0.6931472
        %v1670 = vlog2.pop %v1652
        %v1671 = vmul.f32 %v1670, 0.6931472
        %v1672 = vlog2.pop %v1655
        %v1673 = vmul.f32 %v1672, 0.6931472
        %v1674 = vlog2.pop %v1658
        %v1675 = vmul.f32 %v1674, 0.6931472
        %v1676 = vlog2.pop %v1661
        %v1677 = vmul.f32 %v1676, 0.6931472
        %v1678 = vadd.f32 %v1592, %v1663
        %v1679 = vadd.f32 %v1595, %v1665
        %v1680 = vadd.f32 %v1598, %v1667
        %v1681 = vadd.f32 %v1601, %v1669
        %v1682 = vadd.f32 %v1604, %v1671
        %v1683 = vadd.f32 %v1607, %v1673
        %v1684 = vadd.f32 %v1610, %v1675
        %v1685 = vadd.f32 %v1613, %v1677
        %v1686 = vmul.f32 %v1205, %v1678
        %v1687 = vmul.f32 %v1205, %v1679
        %v1688 = vmul.f32 %v1205, %v1680
        %v1689 = vmul.f32 %v1205, %v1681
        %v1690 = vmul.f32 %v1205, %v1682
        %v1691 = vmul.f32 %v1205, %v1683
        %v1692 = vmul.f32 %v1205, %v1684
        %v1693 = vmul.f32 %v1205, %v1685
        %1694 = vxpose.xlu0.b32.start [1/16] %v1686, 128
        %1695 = vxpose.xlu0.b32.cont [2/16] %v1687, 128
        %1696 = vxpose.xlu0.b32.cont [3/16] %v1688, 128
        %1697 = vxpose.xlu0.b32.cont [4/16] %v1689, 128
        %1698 = vxpose.xlu0.b32.cont [5/16] %v1690, 128
        %1699 = vxpose.xlu0.b32.cont [6/16] %v1691, 128
        %1700 = vxpose.xlu0.b32.cont [7/16] %v1692, 128
        %1701 = vxpose.xlu0.b32.cont [8/16] %v1693, 128
        %1702 = vxpose.xlu0.b32.cont [9/16] 0.0, 128
        %1703 = vxpose.xlu0.b32.cont [10/16] 0.0, 128
        %1704 = vxpose.xlu0.b32.cont [11/16] 0.0, 128
        %1705 = vxpose.xlu0.b32.cont [12/16] 0.0, 128
        %1706 = vxpose.xlu0.b32.cont [13/16] 0.0, 128
        %1707 = vxpose.xlu0.b32.cont [14/16] 0.0, 128
        %1708 = vxpose.xlu0.b32.cont [15/16] 0.0, 128
        %1709 = vxpose.xlu0.b32.end [16/16] 0.0, 128
        %v1710 = vpop.trf.xlu0
        %v1711 = vpop.trf.xlu0
        %v1712 = vpop.trf.xlu0
        %v1713 = vpop.trf.xlu0
        %v1714 = vpop.trf.xlu0
        %v1715 = vpop.trf.xlu0
        %v1716 = vpop.trf.xlu0
        %v1717 = vpop.trf.xlu0
        %v1718 = vpop.trf.xlu0
        %v1719 = vpop.trf.xlu0
        %v1720 = vpop.trf.xlu0
        %v1721 = vpop.trf.xlu0
        %v1722 = vpop.trf.xlu0
        %v1723 = vpop.trf.xlu0
        %v1724 = vpop.trf.xlu0
        %v1725 = vpop.trf.xlu0
        loop: start=0, step=1, limit=10
        $region45: #{_sinkhorn_pallas.1} parent=35 // loop_pre_header
          _
        $region46: #{_sinkhorn_pallas.1} parent=35 // loop_header
          %s1727 = sphi 0, %s1731
          %p1728 = scmp.ge.s32.totalorder %s1727, 10
          %v1732 = vphi %v1230, %v2406
          %v1733 = vphi %v1390, %v2408
          %v1734 = vphi %v1550, %v2410
          %v1735 = vphi %v1710, %v2412
        $region47: #{_sinkhorn_pallas.1} parent=35 // loop_header_branch
          %1730 = sbr.rel (%p1728) target = $region51
        $region48: #{_sinkhorn_pallas.1} parent=35 // loop_body
          %s1736 = sld [smem:[#allocation6 + %s1727]]
          %s1737 = sld [smem:[#allocation8 + %s1727]]
          %v1738 = vstv %s1737
          %v1739 = vmul.f32 %v1733, %v1738
          %v1740 = vadd.f32 %v1739, -4.158883
          %v1741 = vld [vmem:[#allocation2] sm:$0xff]
          %v1742 = vld [vmem:[#allocation2 + $0x8] sm:$0xff]
          %v1743 = vld [vmem:[#allocation2 + $0x10] sm:$0xff]
          %v1744 = vld [vmem:[#allocation2 + $0x18] sm:$0xff]
          %v1745 = vld [vmem:[#allocation2 + $0x20] sm:$0xff]
          %v1746 = vld [vmem:[#allocation2 + $0x28] sm:$0xff]
          %v1747 = vld [vmem:[#allocation2 + $0x30] sm:$0xff]
          %v1748 = vld [vmem:[#allocation2 + $0x38] sm:$0xff]
          %v1749 = vmul.f32 %v1741, %v1738
          %v1750 = vmul.f32 %v1742, %v1738
          %v1751 = vmul.f32 %v1743, %v1738
          %v1752 = vmul.f32 %v1744, %v1738
          %v1753 = vmul.f32 %v1745, %v1738
          %v1754 = vmul.f32 %v1746, %v1738
          %v1755 = vmul.f32 %v1747, %v1738
          %v1756 = vmul.f32 %v1748, %v1738
          %v1757 = vlaneseq
          %v1758 = vshrl.u32 %v1757, 7
          %v1759 = vsub.s32 0, %v1758
          %v1760 = vrot.slane %v1740, %v1759
          %v1761 = vsub.f32 %v1760, %v1749
          %v1762 = vsub.f32 %v1760, %v1750
          %v1763 = vsub.f32 %v1760, %v1751
          %v1764 = vsub.f32 %v1760, %v1752
          %v1765 = vsub.f32 %v1760, %v1753
          %v1766 = vsub.f32 %v1760, %v1754
          %v1767 = vsub.f32 %v1760, %v1755
          %v1768 = vsub.f32 %v1760, %v1756
          %v1769 = vsel %vm583, %v1761, -inf
          %1770 = vmax.xlane.f32.xlu0 %v1769
          %v1771 = vpop.xlane.xlu0 %1770
          %v1772 = vsel %vm583, %v1762, -inf
          %1773 = vmax.xlane.f32.xlu0 %v1772
          %v1774 = vpop.xlane.xlu0 %1773
          %v1775 = vsel %vm583, %v1763, -inf
          %1776 = vmax.xlane.f32.xlu0 %v1775
          %v1777 = vpop.xlane.xlu0 %1776
          %v1778 = vsel %vm583, %v1764, -inf
          %1779 = vmax.xlane.f32.xlu0 %v1778
          %v1780 = vpop.xlane.xlu0 %1779
          %v1781 = vsel %vm583, %v1765, -inf
          %1782 = vmax.xlane.f32.xlu0 %v1781
          %v1783 = vpop.xlane.xlu0 %1782
          %v1784 = vsel %vm583, %v1766, -inf
          %1785 = vmax.xlane.f32.xlu0 %v1784
          %v1786 = vpop.xlane.xlu0 %1785
          %v1787 = vsel %vm583, %v1767, -inf
          %1788 = vmax.xlane.f32.xlu0 %v1787
          %v1789 = vpop.xlane.xlu0 %1788
          %v1790 = vsel %vm583, %v1768, -inf
          %1791 = vmax.xlane.f32.xlu0 %v1790
          %v1792 = vpop.xlane.xlu0 %1791
          %v1793 = vsub.f32 %v1761, %v1771
          %v1794 = vsub.f32 %v1762, %v1774
          %v1795 = vsub.f32 %v1763, %v1777
          %v1796 = vsub.f32 %v1764, %v1780
          %v1797 = vsub.f32 %v1765, %v1783
          %v1798 = vsub.f32 %v1766, %v1786
          %v1799 = vsub.f32 %v1767, %v1789
          %v1800 = vsub.f32 %v1768, %v1792
          %v1801 = vmul.f32 %v1793, 1.442695
          %v1802 = vpow.pop %v1801
          %v1803 = vmul.f32 %v1794, 1.442695
          %v1804 = vpow.pop %v1803
          %v1805 = vmul.f32 %v1795, 1.442695
          %v1806 = vpow.pop %v1805
          %v1807 = vmul.f32 %v1796, 1.442695
          %v1808 = vpow.pop %v1807
          %v1809 = vmul.f32 %v1797, 1.442695
          %v1810 = vpow.pop %v1809
          %v1811 = vmul.f32 %v1798, 1.442695
          %v1812 = vpow.pop %v1811
          %v1813 = vmul.f32 %v1799, 1.442695
          %v1814 = vpow.pop %v1813
          %v1815 = vmul.f32 %v1800, 1.442695
          %v1816 = vpow.pop %v1815
          %v1817 = vsel %vm583, %v1802, 0.0
          %1818 = vadd.xlane.f32.xlu0 %v1817
          %v1819 = vpop.xlane.xlu0 %1818
          %v1820 = vsel %vm583, %v1804, 0.0
          %1821 = vadd.xlane.f32.xlu0 %v1820
          %v1822 = vpop.xlane.xlu0 %1821
          %v1823 = vsel %vm583, %v1806, 0.0
          %1824 = vadd.xlane.f32.xlu0 %v1823
          %v1825 = vpop.xlane.xlu0 %1824
          %v1826 = vsel %vm583, %v1808, 0.0
          %1827 = vadd.xlane.f32.xlu0 %v1826
          %v1828 = vpop.xlane.xlu0 %1827
          %v1829 = vsel %vm583, %v1810, 0.0
          %1830 = vadd.xlane.f32.xlu0 %v1829
          %v1831 = vpop.xlane.xlu0 %1830
          %v1832 = vsel %vm583, %v1812, 0.0
          %1833 = vadd.xlane.f32.xlu0 %v1832
          %v1834 = vpop.xlane.xlu0 %1833
          %v1835 = vsel %vm583, %v1814, 0.0
          %1836 = vadd.xlane.f32.xlu0 %v1835
          %v1837 = vpop.xlane.xlu0 %1836
          %v1838 = vsel %vm583, %v1816, 0.0
          %1839 = vadd.xlane.f32.xlu0 %v1838
          %v1840 = vpop.xlane.xlu0 %1839
          %v1841 = vlog2.pop %v1819
          %v1842 = vmul.f32 %v1841, 0.6931472
          %v1843 = vlog2.pop %v1822
          %v1844 = vmul.f32 %v1843, 0.6931472
          %v1845 = vlog2.pop %v1825
          %v1846 = vmul.f32 %v1845, 0.6931472
          %v1847 = vlog2.pop %v1828
          %v1848 = vmul.f32 %v1847, 0.6931472
          %v1849 = vlog2.pop %v1831
          %v1850 = vmul.f32 %v1849, 0.6931472
          %v1851 = vlog2.pop %v1834
          %v1852 = vmul.f32 %v1851, 0.6931472
          %v1853 = vlog2.pop %v1837
          %v1854 = vmul.f32 %v1853, 0.6931472
          %v1855 = vlog2.pop %v1840
          %v1856 = vmul.f32 %v1855, 0.6931472
          %v1857 = vadd.f32 %v1771, %v1842
          %v1858 = vadd.f32 %v1774, %v1844
          %v1859 = vadd.f32 %v1777, %v1846
          %v1860 = vadd.f32 %v1780, %v1848
          %v1861 = vadd.f32 %v1783, %v1850
          %v1862 = vadd.f32 %v1786, %v1852
          %v1863 = vadd.f32 %v1789, %v1854
          %v1864 = vadd.f32 %v1792, %v1856
          %s1865 = ssub.f32 0.0, %s1736
          %v1866 = vstv %s1865
          %v1867 = vmul.f32 %v1866, %v1857
          %v1868 = vmul.f32 %v1866, %v1858
          %v1869 = vmul.f32 %v1866, %v1859
          %v1870 = vmul.f32 %v1866, %v1860
          %v1871 = vmul.f32 %v1866, %v1861
          %v1872 = vmul.f32 %v1866, %v1862
          %v1873 = vmul.f32 %v1866, %v1863
          %v1874 = vmul.f32 %v1866, %v1864
          %1875 = vxpose.xlu0.b32.start [1/16] %v1867, 128
          %1876 = vxpose.xlu0.b32.cont [2/16] %v1868, 128
          %1877 = vxpose.xlu0.b32.cont [3/16] %v1869, 128
          %1878 = vxpose.xlu0.b32.cont [4/16] %v1870, 128
          %1879 = vxpose.xlu0.b32.cont [5/16] %v1871, 128
          %1880 = vxpose.xlu0.b32.cont [6/16] %v1872, 128
          %1881 = vxpose.xlu0.b32.cont [7/16] %v1873, 128
          %1882 = vxpose.xlu0.b32.cont [8/16] %v1874, 128
          %1883 = vxpose.xlu0.b32.cont [9/16] 0.0, 128
          %1884 = vxpose.xlu0.b32.cont [10/16] 0.0, 128
          %1885 = vxpose.xlu0.b32.cont [11/16] 0.0, 128
          %1886 = vxpose.xlu0.b32.cont [12/16] 0.0, 128
          %1887 = vxpose.xlu0.b32.cont [13/16] 0.0, 128
          %1888 = vxpose.xlu0.b32.cont [14/16] 0.0, 128
          %1889 = vxpose.xlu0.b32.cont [15/16] 0.0, 128
          %1890 = vxpose.xlu0.b32.end [16/16] 0.0, 128
          %v1891 = vpop.trf.xlu0
          %v1892 = vpop.trf.xlu0
          %v1893 = vpop.trf.xlu0
          %v1894 = vpop.trf.xlu0
          %v1895 = vpop.trf.xlu0
          %v1896 = vpop.trf.xlu0
          %v1897 = vpop.trf.xlu0
          %v1898 = vpop.trf.xlu0
          %v1899 = vpop.trf.xlu0
          %v1900 = vpop.trf.xlu0
          %v1901 = vpop.trf.xlu0
          %v1902 = vpop.trf.xlu0
          %v1903 = vpop.trf.xlu0
          %v1904 = vpop.trf.xlu0
          %v1905 = vpop.trf.xlu0
          %v1906 = vpop.trf.xlu0
          %v1907 = vmul.f32 %v1732, %v1738
          %v1908 = vadd.f32 %v1907, -4.158883
          %v1909 = vld [vmem:[#allocation3] sm:$0xff]
          %v1910 = vld [vmem:[#allocation3 + $0x8] sm:$0xff]
          %v1911 = vld [vmem:[#allocation3 + $0x10] sm:$0xff]
          %v1912 = vld [vmem:[#allocation3 + $0x18] sm:$0xff]
          %v1913 = vld [vmem:[#allocation3 + $0x20] sm:$0xff]
          %v1914 = vld [vmem:[#allocation3 + $0x28] sm:$0xff]
          %v1915 = vld [vmem:[#allocation3 + $0x30] sm:$0xff]
          %v1916 = vld [vmem:[#allocation3 + $0x38] sm:$0xff]
          %v1917 = vmul.f32 %v1909, %v1738
          %v1918 = vmul.f32 %v1910, %v1738
          %v1919 = vmul.f32 %v1911, %v1738
          %v1920 = vmul.f32 %v1912, %v1738
          %v1921 = vmul.f32 %v1913, %v1738
          %v1922 = vmul.f32 %v1914, %v1738
          %v1923 = vmul.f32 %v1915, %v1738
          %v1924 = vmul.f32 %v1916, %v1738
          %v1925 = vlaneseq
          %v1926 = vshrl.u32 %v1925, 7
          %v1927 = vsub.s32 0, %v1926
          %v1928 = vrot.slane %v1908, %v1927
          %v1929 = vsub.f32 %v1928, %v1917
          %v1930 = vsub.f32 %v1928, %v1918
          %v1931 = vsub.f32 %v1928, %v1919
          %v1932 = vsub.f32 %v1928, %v1920
          %v1933 = vsub.f32 %v1928, %v1921
          %v1934 = vsub.f32 %v1928, %v1922
          %v1935 = vsub.f32 %v1928, %v1923
          %v1936 = vsub.f32 %v1928, %v1924
          %v1937 = vsel %vm583, %v1929, -inf
          %1938 = vmax.xlane.f32.xlu0 %v1937
          %v1939 = vpop.xlane.xlu0 %1938
          %v1940 = vsel %vm583, %v1930, -inf
          %1941 = vmax.xlane.f32.xlu0 %v1940
          %v1942 = vpop.xlane.xlu0 %1941
          %v1943 = vsel %vm583, %v1931, -inf
          %1944 = vmax.xlane.f32.xlu0 %v1943
          %v1945 = vpop.xlane.xlu0 %1944
          %v1946 = vsel %vm583, %v1932, -inf
          %1947 = vmax.xlane.f32.xlu0 %v1946
          %v1948 = vpop.xlane.xlu0 %1947
          %v1949 = vsel %vm583, %v1933, -inf
          %1950 = vmax.xlane.f32.xlu0 %v1949
          %v1951 = vpop.xlane.xlu0 %1950
          %v1952 = vsel %vm583, %v1934, -inf
          %1953 = vmax.xlane.f32.xlu0 %v1952
          %v1954 = vpop.xlane.xlu0 %1953
          %v1955 = vsel %vm583, %v1935, -inf
          %1956 = vmax.xlane.f32.xlu0 %v1955
          %v1957 = vpop.xlane.xlu0 %1956
          %v1958 = vsel %vm583, %v1936, -inf
          %1959 = vmax.xlane.f32.xlu0 %v1958
          %v1960 = vpop.xlane.xlu0 %1959
          %v1961 = vsub.f32 %v1929, %v1939
          %v1962 = vsub.f32 %v1930, %v1942
          %v1963 = vsub.f32 %v1931, %v1945
          %v1964 = vsub.f32 %v1932, %v1948
          %v1965 = vsub.f32 %v1933, %v1951
          %v1966 = vsub.f32 %v1934, %v1954
          %v1967 = vsub.f32 %v1935, %v1957
          %v1968 = vsub.f32 %v1936, %v1960
          %v1969 = vmul.f32 %v1961, 1.442695
          %v1970 = vpow.pop %v1969
          %v1971 = vmul.f32 %v1962, 1.442695
          %v1972 = vpow.pop %v1971
          %v1973 = vmul.f32 %v1963, 1.442695
          %v1974 = vpow.pop %v1973
          %v1975 = vmul.f32 %v1964, 1.442695
          %v1976 = vpow.pop %v1975
          %v1977 = vmul.f32 %v1965, 1.442695
          %v1978 = vpow.pop %v1977
          %v1979 = vmul.f32 %v1966, 1.442695
          %v1980 = vpow.pop %v1979
          %v1981 = vmul.f32 %v1967, 1.442695
          %v1982 = vpow.pop %v1981
          %v1983 = vmul.f32 %v1968, 1.442695
          %v1984 = vpow.pop %v1983
          %v1985 = vsel %vm583, %v1970, 0.0
          %1986 = vadd.xlane.f32.xlu0 %v1985
          %v1987 = vpop.xlane.xlu0 %1986
          %v1988 = vsel %vm583, %v1972, 0.0
          %1989 = vadd.xlane.f32.xlu0 %v1988
          %v1990 = vpop.xlane.xlu0 %1989
          %v1991 = vsel %vm583, %v1974, 0.0
          %1992 = vadd.xlane.f32.xlu0 %v1991
          %v1993 = vpop.xlane.xlu0 %1992
          %v1994 = vsel %vm583, %v1976, 0.0
          %1995 = vadd.xlane.f32.xlu0 %v1994
          %v1996 = vpop.xlane.xlu0 %1995
          %v1997 = vsel %vm583, %v1978, 0.0
          %1998 = vadd.xlane.f32.xlu0 %v1997
          %v1999 = vpop.xlane.xlu0 %1998
          %v2000 = vsel %vm583, %v1980, 0.0
          %2001 = vadd.xlane.f32.xlu0 %v2000
          %v2002 = vpop.xlane.xlu0 %2001
          %v2003 = vsel %vm583, %v1982, 0.0
          %2004 = vadd.xlane.f32.xlu0 %v2003
          %v2005 = vpop.xlane.xlu0 %2004
          %v2006 = vsel %vm583, %v1984, 0.0
          %2007 = vadd.xlane.f32.xlu0 %v2006
          %v2008 = vpop.xlane.xlu0 %2007
          %v2009 = vlog2.pop %v1987
          %v2010 = vmul.f32 %v2009, 0.6931472
          %v2011 = vlog2.pop %v1990
          %v2012 = vmul.f32 %v2011, 0.6931472
          %v2013 = vlog2.pop %v1993
          %v2014 = vmul.f32 %v2013, 0.6931472
          %v2015 = vlog2.pop %v1996
          %v2016 = vmul.f32 %v2015, 0.6931472
          %v2017 = vlog2.pop %v1999
          %v2018 = vmul.f32 %v2017, 0.6931472
          %v2019 = vlog2.pop %v2002
          %v2020 = vmul.f32 %v2019, 0.6931472
          %v2021 = vlog2.pop %v2005
          %v2022 = vmul.f32 %v2021, 0.6931472
          %v2023 = vlog2.pop %v2008
          %v2024 = vmul.f32 %v2023, 0.6931472
          %v2025 = vadd.f32 %v1939, %v2010
          %v2026 = vadd.f32 %v1942, %v2012
          %v2027 = vadd.f32 %v1945, %v2014
          %v2028 = vadd.f32 %v1948, %v2016
          %v2029 = vadd.f32 %v1951, %v2018
          %v2030 = vadd.f32 %v1954, %v2020
          %v2031 = vadd.f32 %v1957, %v2022
          %v2032 = vadd.f32 %v1960, %v2024
          %v2033 = vmul.f32 %v1866, %v2025
          %v2034 = vmul.f32 %v1866, %v2026
          %v2035 = vmul.f32 %v1866, %v2027
          %v2036 = vmul.f32 %v1866, %v2028
          %v2037 = vmul.f32 %v1866, %v2029
          %v2038 = vmul.f32 %v1866, %v2030
          %v2039 = vmul.f32 %v1866, %v2031
          %v2040 = vmul.f32 %v1866, %v2032
          %2041 = vxpose.xlu0.b32.start [1/16] %v2033, 128
          %2042 = vxpose.xlu0.b32.cont [2/16] %v2034, 128
          %2043 = vxpose.xlu0.b32.cont [3/16] %v2035, 128
          %2044 = vxpose.xlu0.b32.cont [4/16] %v2036, 128
          %2045 = vxpose.xlu0.b32.cont [5/16] %v2037, 128
          %2046 = vxpose.xlu0.b32.cont [6/16] %v2038, 128
          %2047 = vxpose.xlu0.b32.cont [7/16] %v2039, 128
          %2048 = vxpose.xlu0.b32.cont [8/16] %v2040, 128
          %2049 = vxpose.xlu0.b32.cont [9/16] 0.0, 128
          %2050 = vxpose.xlu0.b32.cont [10/16] 0.0, 128
          %2051 = vxpose.xlu0.b32.cont [11/16] 0.0, 128
          %2052 = vxpose.xlu0.b32.cont [12/16] 0.0, 128
          %2053 = vxpose.xlu0.b32.cont [13/16] 0.0, 128
          %2054 = vxpose.xlu0.b32.cont [14/16] 0.0, 128
          %2055 = vxpose.xlu0.b32.cont [15/16] 0.0, 128
          %2056 = vxpose.xlu0.b32.end [16/16] 0.0, 128
          %v2057 = vpop.trf.xlu0
          %v2058 = vpop.trf.xlu0
          %v2059 = vpop.trf.xlu0
          %v2060 = vpop.trf.xlu0
          %v2061 = vpop.trf.xlu0
          %v2062 = vpop.trf.xlu0
          %v2063 = vpop.trf.xlu0
          %v2064 = vpop.trf.xlu0
          %v2065 = vpop.trf.xlu0
          %v2066 = vpop.trf.xlu0
          %v2067 = vpop.trf.xlu0
          %v2068 = vpop.trf.xlu0
          %v2069 = vpop.trf.xlu0
          %v2070 = vpop.trf.xlu0
          %v2071 = vpop.trf.xlu0
          %v2072 = vpop.trf.xlu0
          %v2073 = vmul.f32 %v1734, %v1738
          %v2074 = vadd.f32 %v2073, -4.158883
          %v2075 = vld [vmem:[#allocation4] sm:$0xff]
          %v2076 = vld [vmem:[#allocation4 + $0x8] sm:$0xff]
          %v2077 = vld [vmem:[#allocation4 + $0x10] sm:$0xff]
          %v2078 = vld [vmem:[#allocation4 + $0x18] sm:$0xff]
          %v2079 = vld [vmem:[#allocation4 + $0x20] sm:$0xff]
          %v2080 = vld [vmem:[#allocation4 + $0x28] sm:$0xff]
          %v2081 = vld [vmem:[#allocation4 + $0x30] sm:$0xff]
          %v2082 = vld [vmem:[#allocation4 + $0x38] sm:$0xff]
          %v2083 = vmul.f32 %v2075, %v1738
          %v2084 = vmul.f32 %v2076, %v1738
          %v2085 = vmul.f32 %v2077, %v1738
          %v2086 = vmul.f32 %v2078, %v1738
          %v2087 = vmul.f32 %v2079, %v1738
          %v2088 = vmul.f32 %v2080, %v1738
          %v2089 = vmul.f32 %v2081, %v1738
          %v2090 = vmul.f32 %v2082, %v1738
          %v2091 = vlaneseq
          %v2092 = vshrl.u32 %v2091, 7
          %v2093 = vsub.s32 0, %v2092
          %v2094 = vrot.slane %v2074, %v2093
          %v2095 = vsub.f32 %v2094, %v2083
          %v2096 = vsub.f32 %v2094, %v2084
          %v2097 = vsub.f32 %v2094, %v2085
          %v2098 = vsub.f32 %v2094, %v2086
          %v2099 = vsub.f32 %v2094, %v2087
          %v2100 = vsub.f32 %v2094, %v2088
          %v2101 = vsub.f32 %v2094, %v2089
          %v2102 = vsub.f32 %v2094, %v2090
          %v2103 = vsel %vm583, %v2095, -inf
          %2104 = vmax.xlane.f32.xlu0 %v2103
          %v2105 = vpop.xlane.xlu0 %2104
          %v2106 = vsel %vm583, %v2096, -inf
          %2107 = vmax.xlane.f32.xlu0 %v2106
          %v2108 = vpop.xlane.xlu0 %2107
          %v2109 = vsel %vm583, %v2097, -inf
          %2110 = vmax.xlane.f32.xlu0 %v2109
          %v2111 = vpop.xlane.xlu0 %2110
          %v2112 = vsel %vm583, %v2098, -inf
          %2113 = vmax.xlane.f32.xlu0 %v2112
          %v2114 = vpop.xlane.xlu0 %2113
          %v2115 = vsel %vm583, %v2099, -inf
          %2116 = vmax.xlane.f32.xlu0 %v2115
          %v2117 = vpop.xlane.xlu0 %2116
          %v2118 = vsel %vm583, %v2100, -inf
          %2119 = vmax.xlane.f32.xlu0 %v2118
          %v2120 = vpop.xlane.xlu0 %2119
          %v2121 = vsel %vm583, %v2101, -inf
          %2122 = vmax.xlane.f32.xlu0 %v2121
          %v2123 = vpop.xlane.xlu0 %2122
          %v2124 = vsel %vm583, %v2102, -inf
          %2125 = vmax.xlane.f32.xlu0 %v2124
          %v2126 = vpop.xlane.xlu0 %2125
          %v2127 = vsub.f32 %v2095, %v2105
          %v2128 = vsub.f32 %v2096, %v2108
          %v2129 = vsub.f32 %v2097, %v2111
          %v2130 = vsub.f32 %v2098, %v2114
          %v2131 = vsub.f32 %v2099, %v2117
          %v2132 = vsub.f32 %v2100, %v2120
          %v2133 = vsub.f32 %v2101, %v2123
          %v2134 = vsub.f32 %v2102, %v2126
          %v2135 = vmul.f32 %v2127, 1.442695
          %v2136 = vpow.pop %v2135
          %v2137 = vmul.f32 %v2128, 1.442695
          %v2138 = vpow.pop %v2137
          %v2139 = vmul.f32 %v2129, 1.442695
          %v2140 = vpow.pop %v2139
          %v2141 = vmul.f32 %v2130, 1.442695
          %v2142 = vpow.pop %v2141
          %v2143 = vmul.f32 %v2131, 1.442695
          %v2144 = vpow.pop %v2143
          %v2145 = vmul.f32 %v2132, 1.442695
          %v2146 = vpow.pop %v2145
          %v2147 = vmul.f32 %v2133, 1.442695
          %v2148 = vpow.pop %v2147
          %v2149 = vmul.f32 %v2134, 1.442695
          %v2150 = vpow.pop %v2149
          %v2151 = vsel %vm583, %v2136, 0.0
          %2152 = vadd.xlane.f32.xlu0 %v2151
          %v2153 = vpop.xlane.xlu0 %2152
          %v2154 = vsel %vm583, %v2138, 0.0
          %2155 = vadd.xlane.f32.xlu0 %v2154
          %v2156 = vpop.xlane.xlu0 %2155
          %v2157 = vsel %vm583, %v2140, 0.0
          %2158 = vadd.xlane.f32.xlu0 %v2157
          %v2159 = vpop.xlane.xlu0 %2158
          %v2160 = vsel %vm583, %v2142, 0.0
          %2161 = vadd.xlane.f32.xlu0 %v2160
          %v2162 = vpop.xlane.xlu0 %2161
          %v2163 = vsel %vm583, %v2144, 0.0
          %2164 = vadd.xlane.f32.xlu0 %v2163
          %v2165 = vpop.xlane.xlu0 %2164
          %v2166 = vsel %vm583, %v2146, 0.0
          %2167 = vadd.xlane.f32.xlu0 %v2166
          %v2168 = vpop.xlane.xlu0 %2167
          %v2169 = vsel %vm583, %v2148, 0.0
          %2170 = vadd.xlane.f32.xlu0 %v2169
          %v2171 = vpop.xlane.xlu0 %2170
          %v2172 = vsel %vm583, %v2150, 0.0
          %2173 = vadd.xlane.f32.xlu0 %v2172
          %v2174 = vpop.xlane.xlu0 %2173
          %v2175 = vlog2.pop %v2153
          %v2176 = vmul.f32 %v2175, 0.6931472
          %v2177 = vlog2.pop %v2156
          %v2178 = vmul.f32 %v2177, 0.6931472
          %v2179 = vlog2.pop %v2159
          %v2180 = vmul.f32 %v2179, 0.6931472
          %v2181 = vlog2.pop %v2162
          %v2182 = vmul.f32 %v2181, 0.6931472
          %v2183 = vlog2.pop %v2165
          %v2184 = vmul.f32 %v2183, 0.6931472
          %v2185 = vlog2.pop %v2168
          %v2186 = vmul.f32 %v2185, 0.6931472
          %v2187 = vlog2.pop %v2171
          %v2188 = vmul.f32 %v2187, 0.6931472
          %v2189 = vlog2.pop %v2174
          %v2190 = vmul.f32 %v2189, 0.6931472
          %v2191 = vadd.f32 %v2105, %v2176
          %v2192 = vadd.f32 %v2108, %v2178
          %v2193 = vadd.f32 %v2111, %v2180
          %v2194 = vadd.f32 %v2114, %v2182
          %v2195 = vadd.f32 %v2117, %v2184
          %v2196 = vadd.f32 %v2120, %v2186
          %v2197 = vadd.f32 %v2123, %v2188
          %v2198 = vadd.f32 %v2126, %v2190
          %v2199 = vmul.f32 %v1866, %v2191
          %v2200 = vmul.f32 %v1866, %v2192
          %v2201 = vmul.f32 %v1866, %v2193
          %v2202 = vmul.f32 %v1866, %v2194
          %v2203 = vmul.f32 %v1866, %v2195
          %v2204 = vmul.f32 %v1866, %v2196
          %v2205 = vmul.f32 %v1866, %v2197
          %v2206 = vmul.f32 %v1866, %v2198
          %2207 = vxpose.xlu0.b32.start [1/16] %v2199, 128
          %2208 = vxpose.xlu0.b32.cont [2/16] %v2200, 128
          %2209 = vxpose.xlu0.b32.cont [3/16] %v2201, 128
          %2210 = vxpose.xlu0.b32.cont [4/16] %v2202, 128
          %2211 = vxpose.xlu0.b32.cont [5/16] %v2203, 128
          %2212 = vxpose.xlu0.b32.cont [6/16] %v2204, 128
          %2213 = vxpose.xlu0.b32.cont [7/16] %v2205, 128
          %2214 = vxpose.xlu0.b32.cont [8/16] %v2206, 128
          %2215 = vxpose.xlu0.b32.cont [9/16] 0.0, 128
          %2216 = vxpose.xlu0.b32.cont [10/16] 0.0, 128
          %2217 = vxpose.xlu0.b32.cont [11/16] 0.0, 128
          %2218 = vxpose.xlu0.b32.cont [12/16] 0.0, 128
          %2219 = vxpose.xlu0.b32.cont [13/16] 0.0, 128
          %2220 = vxpose.xlu0.b32.cont [14/16] 0.0, 128
          %2221 = vxpose.xlu0.b32.cont [15/16] 0.0, 128
          %2222 = vxpose.xlu0.b32.end [16/16] 0.0, 128
          %v2223 = vpop.trf.xlu0
          %v2224 = vpop.trf.xlu0
          %v2225 = vpop.trf.xlu0
          %v2226 = vpop.trf.xlu0
          %v2227 = vpop.trf.xlu0
          %v2228 = vpop.trf.xlu0
          %v2229 = vpop.trf.xlu0
          %v2230 = vpop.trf.xlu0
          %v2231 = vpop.trf.xlu0
          %v2232 = vpop.trf.xlu0
          %v2233 = vpop.trf.xlu0
          %v2234 = vpop.trf.xlu0
          %v2235 = vpop.trf.xlu0
          %v2236 = vpop.trf.xlu0
          %v2237 = vpop.trf.xlu0
          %v2238 = vpop.trf.xlu0
          %v2239 = vmul.f32 %v1735, %v1738
          %v2240 = vadd.f32 %v2239, -4.158883
          %v2241 = vld [vmem:[#allocation5] sm:$0xff]
          %v2242 = vld [vmem:[#allocation5 + $0x8] sm:$0xff]
          %v2243 = vld [vmem:[#allocation5 + $0x10] sm:$0xff]
          %v2244 = vld [vmem:[#allocation5 + $0x18] sm:$0xff]
          %v2245 = vld [vmem:[#allocation5 + $0x20] sm:$0xff]
          %v2246 = vld [vmem:[#allocation5 + $0x28] sm:$0xff]
          %v2247 = vld [vmem:[#allocation5 + $0x30] sm:$0xff]
          %v2248 = vld [vmem:[#allocation5 + $0x38] sm:$0xff]
          %v2249 = vmul.f32 %v2241, %v1738
          %v2250 = vmul.f32 %v2242, %v1738
          %v2251 = vmul.f32 %v2243, %v1738
          %v2252 = vmul.f32 %v2244, %v1738
          %v2253 = vmul.f32 %v2245, %v1738
          %v2254 = vmul.f32 %v2246, %v1738
          %v2255 = vmul.f32 %v2247, %v1738
          %v2256 = vmul.f32 %v2248, %v1738
          %v2257 = vlaneseq
          %v2258 = vshrl.u32 %v2257, 7
          %v2259 = vsub.s32 0, %v2258
          %v2260 = vrot.slane %v2240, %v2259
          %v2261 = vsub.f32 %v2260, %v2249
          %v2262 = vsub.f32 %v2260, %v2250
          %v2263 = vsub.f32 %v2260, %v2251
          %v2264 = vsub.f32 %v2260, %v2252
          %v2265 = vsub.f32 %v2260, %v2253
          %v2266 = vsub.f32 %v2260, %v2254
          %v2267 = vsub.f32 %v2260, %v2255
          %v2268 = vsub.f32 %v2260, %v2256
          %v2269 = vsel %vm583, %v2261, -inf
          %2270 = vmax.xlane.f32.xlu0 %v2269
          %v2271 = vpop.xlane.xlu0 %2270
          %v2272 = vsel %vm583, %v2262, -inf
          %2273 = vmax.xlane.f32.xlu0 %v2272
          %v2274 = vpop.xlane.xlu0 %2273
          %v2275 = vsel %vm583, %v2263, -inf
          %2276 = vmax.xlane.f32.xlu0 %v2275
          %v2277 = vpop.xlane.xlu0 %2276
          %v2278 = vsel %vm583, %v2264, -inf
          %2279 = vmax.xlane.f32.xlu0 %v2278
          %v2280 = vpop.xlane.xlu0 %2279
          %v2281 = vsel %vm583, %v2265, -inf
          %2282 = vmax.xlane.f32.xlu0 %v2281
          %v2283 = vpop.xlane.xlu0 %2282
          %v2284 = vsel %vm583, %v2266, -inf
          %2285 = vmax.xlane.f32.xlu0 %v2284
          %v2286 = vpop.xlane.xlu0 %2285
          %v2287 = vsel %vm583, %v2267, -inf
          %2288 = vmax.xlane.f32.xlu0 %v2287
          %v2289 = vpop.xlane.xlu0 %2288
          %v2290 = vsel %vm583, %v2268, -inf
          %2291 = vmax.xlane.f32.xlu0 %v2290
          %v2292 = vpop.xlane.xlu0 %2291
          %v2293 = vsub.f32 %v2261, %v2271
          %v2294 = vsub.f32 %v2262, %v2274
          %v2295 = vsub.f32 %v2263, %v2277
          %v2296 = vsub.f32 %v2264, %v2280
          %v2297 = vsub.f32 %v2265, %v2283
          %v2298 = vsub.f32 %v2266, %v2286
          %v2299 = vsub.f32 %v2267, %v2289
          %v2300 = vsub.f32 %v2268, %v2292
          %v2301 = vmul.f32 %v2293, 1.442695
          %v2302 = vpow.pop %v2301
          %v2303 = vmul.f32 %v2294, 1.442695
          %v2304 = vpow.pop %v2303
          %v2305 = vmul.f32 %v2295, 1.442695
          %v2306 = vpow.pop %v2305
          %v2307 = vmul.f32 %v2296, 1.442695
          %v2308 = vpow.pop %v2307
          %v2309 = vmul.f32 %v2297, 1.442695
          %v2310 = vpow.pop %v2309
          %v2311 = vmul.f32 %v2298, 1.442695
          %v2312 = vpow.pop %v2311
          %v2313 = vmul.f32 %v2299, 1.442695
          %v2314 = vpow.pop %v2313
          %v2315 = vmul.f32 %v2300, 1.442695
          %v2316 = vpow.pop %v2315
          %v2317 = vsel %vm583, %v2302, 0.0
          %2318 = vadd.xlane.f32.xlu0 %v2317
          %v2319 = vpop.xlane.xlu0 %2318
          %v2320 = vsel %vm583, %v2304, 0.0
          %2321 = vadd.xlane.f32.xlu0 %v2320
          %v2322 = vpop.xlane.xlu0 %2321
          %v2323 = vsel %vm583, %v2306, 0.0
          %2324 = vadd.xlane.f32.xlu0 %v2323
          %v2325 = vpop.xlane.xlu0 %2324
          %v2326 = vsel %vm583, %v2308, 0.0
          %2327 = vadd.xlane.f32.xlu0 %v2326
          %v2328 = vpop.xlane.xlu0 %2327
          %v2329 = vsel %vm583, %v2310, 0.0
          %2330 = vadd.xlane.f32.xlu0 %v2329
          %v2331 = vpop.xlane.xlu0 %2330
          %v2332 = vsel %vm583, %v2312, 0.0
          %2333 = vadd.xlane.f32.xlu0 %v2332
          %v2334 = vpop.xlane.xlu0 %2333
          %v2335 = vsel %vm583, %v2314, 0.0
          %2336 = vadd.xlane.f32.xlu0 %v2335
          %v2337 = vpop.xlane.xlu0 %2336
          %v2338 = vsel %vm583, %v2316, 0.0
          %2339 = vadd.xlane.f32.xlu0 %v2338
          %v2340 = vpop.xlane.xlu0 %2339
          %v2341 = vlog2.pop %v2319
          %v2342 = vmul.f32 %v2341, 0.6931472
          %v2343 = vlog2.pop %v2322
          %v2344 = vmul.f32 %v2343, 0.6931472
          %v2345 = vlog2.pop %v2325
          %v2346 = vmul.f32 %v2345, 0.6931472
          %v2347 = vlog2.pop %v2328
          %v2348 = vmul.f32 %v2347, 0.6931472
          %v2349 = vlog2.pop %v2331
          %v2350 = vmul.f32 %v2349, 0.6931472
          %v2351 = vlog2.pop %v2334
          %v2352 = vmul.f32 %v2351, 0.6931472
          %v2353 = vlog2.pop %v2337
          %v2354 = vmul.f32 %v2353, 0.6931472
          %v2355 = vlog2.pop %v2340
          %v2356 = vmul.f32 %v2355, 0.6931472
          %v2357 = vadd.f32 %v2271, %v2342
          %v2358 = vadd.f32 %v2274, %v2344
          %v2359 = vadd.f32 %v2277, %v2346
          %v2360 = vadd.f32 %v2280, %v2348
          %v2361 = vadd.f32 %v2283, %v2350
          %v2362 = vadd.f32 %v2286, %v2352
          %v2363 = vadd.f32 %v2289, %v2354
          %v2364 = vadd.f32 %v2292, %v2356
          %v2365 = vmul.f32 %v1866, %v2357
          %v2366 = vmul.f32 %v1866, %v2358
          %v2367 = vmul.f32 %v1866, %v2359
          %v2368 = vmul.f32 %v1866, %v2360
          %v2369 = vmul.f32 %v1866, %v2361
          %v2370 = vmul.f32 %v1866, %v2362
          %v2371 = vmul.f32 %v1866, %v2363
          %v2372 = vmul.f32 %v1866, %v2364
          %2373 = vxpose.xlu0.b32.start [1/16] %v2365, 128
          %2374 = vxpose.xlu0.b32.cont [2/16] %v2366, 128
          %2375 = vxpose.xlu0.b32.cont [3/16] %v2367, 128
          %2376 = vxpose.xlu0.b32.cont [4/16] %v2368, 128
          %2377 = vxpose.xlu0.b32.cont [5/16] %v2369, 128
          %2378 = vxpose.xlu0.b32.cont [6/16] %v2370, 128
          %2379 = vxpose.xlu0.b32.cont [7/16] %v2371, 128
          %2380 = vxpose.xlu0.b32.cont [8/16] %v2372, 128
          %2381 = vxpose.xlu0.b32.cont [9/16] 0.0, 128
          %2382 = vxpose.xlu0.b32.cont [10/16] 0.0, 128
          %2383 = vxpose.xlu0.b32.cont [11/16] 0.0, 128
          %2384 = vxpose.xlu0.b32.cont [12/16] 0.0, 128
          %2385 = vxpose.xlu0.b32.cont [13/16] 0.0, 128
          %2386 = vxpose.xlu0.b32.cont [14/16] 0.0, 128
          %2387 = vxpose.xlu0.b32.cont [15/16] 0.0, 128
          %2388 = vxpose.xlu0.b32.end [16/16] 0.0, 128
          %v2389 = vpop.trf.xlu0
          %v2390 = vpop.trf.xlu0
          %v2391 = vpop.trf.xlu0
          %v2392 = vpop.trf.xlu0
          %v2393 = vpop.trf.xlu0
          %v2394 = vpop.trf.xlu0
          %v2395 = vpop.trf.xlu0
          %v2396 = vpop.trf.xlu0
          %v2397 = vpop.trf.xlu0
          %v2398 = vpop.trf.xlu0
          %v2399 = vpop.trf.xlu0
          %v2400 = vpop.trf.xlu0
          %v2401 = vpop.trf.xlu0
          %v2402 = vpop.trf.xlu0
          %v2403 = vpop.trf.xlu0
          %v2404 = vpop.trf.xlu0
          %v2405 = vadd.f32 %v1732, %v1891
          %v2406 = vmul.f32 %v2405, 0.5
          %v2407 = vadd.f32 %v1733, %v2057
          %v2408 = vmul.f32 %v2407, 0.5
          %v2409 = vadd.f32 %v1734, %v2223
          %v2410 = vmul.f32 %v2409, 0.5
          %v2411 = vadd.f32 %v1735, %v2389
          %v2412 = vmul.f32 %v2411, 0.5
        $region49: #{_sinkhorn_pallas.1} parent=35 // loop_footer
          %s1731 = sadd.s32 1, %s1727
        $region50: #{_sinkhorn_pallas.1} parent=35 // loop_footer_branch
          %1726 = sbr.rel target = $region46
        $region51: #{_sinkhorn_pallas.1} parent=35 // loop_exit
          _
        %s2413 = sld [smem:[#allocation6 + $0x9]]
        %s2414 = sld [smem:[#allocation8 + $0x9]]
        %v2415 = vstv %s2414
        %v2416 = vmul.f32 %v1733, %v2415
        %v2417 = vadd.f32 %v2416, -4.158883
        %v2418 = vmul.f32 %v1083, %v2415
        %v2419 = vmul.f32 %v1084, %v2415
        %v2420 = vmul.f32 %v1085, %v2415
        %v2421 = vmul.f32 %v1086, %v2415
        %v2422 = vmul.f32 %v1087, %v2415
        %v2423 = vmul.f32 %v1088, %v2415
        %v2424 = vmul.f32 %v1089, %v2415
        %v2425 = vmul.f32 %v1090, %v2415
        %v2426 = vlaneseq
        %v2427 = vshrl.u32 %v2426, 7
        %v2428 = vsub.s32 0, %v2427
        %v2429 = vrot.slane %v2417, %v2428
        %v2430 = vsub.f32 %v2429, %v2418
        %v2431 = vsub.f32 %v2429, %v2419
        %v2432 = vsub.f32 %v2429, %v2420
        %v2433 = vsub.f32 %v2429, %v2421
        %v2434 = vsub.f32 %v2429, %v2422
        %v2435 = vsub.f32 %v2429, %v2423
        %v2436 = vsub.f32 %v2429, %v2424
        %v2437 = vsub.f32 %v2429, %v2425
        %v2438 = vsel %vm583, %v2430, -inf
        %2439 = vmax.xlane.f32.xlu0 %v2438
        %v2440 = vpop.xlane.xlu0 %2439
        %v2441 = vsel %vm583, %v2431, -inf
        %2442 = vmax.xlane.f32.xlu0 %v2441
        %v2443 = vpop.xlane.xlu0 %2442
        %v2444 = vsel %vm583, %v2432, -inf
        %2445 = vmax.xlane.f32.xlu0 %v2444
        %v2446 = vpop.xlane.xlu0 %2445
        %v2447 = vsel %vm583, %v2433, -inf
        %2448 = vmax.xlane.f32.xlu0 %v2447
        %v2449 = vpop.xlane.xlu0 %2448
        %v2450 = vsel %vm583, %v2434, -inf
        %2451 = vmax.xlane.f32.xlu0 %v2450
        %v2452 = vpop.xlane.xlu0 %2451
        %v2453 = vsel %vm583, %v2435, -inf
        %2454 = vmax.xlane.f32.xlu0 %v2453
        %v2455 = vpop.xlane.xlu0 %2454
        %v2456 = vsel %vm583, %v2436, -inf
        %2457 = vmax.xlane.f32.xlu0 %v2456
        %v2458 = vpop.xlane.xlu0 %2457
        %v2459 = vsel %vm583, %v2437, -inf
        %2460 = vmax.xlane.f32.xlu0 %v2459
        %v2461 = vpop.xlane.xlu0 %2460
        %v2462 = vsub.f32 %v2430, %v2440
        %v2463 = vsub.f32 %v2431, %v2443
        %v2464 = vsub.f32 %v2432, %v2446
        %v2465 = vsub.f32 %v2433, %v2449
        %v2466 = vsub.f32 %v2434, %v2452
        %v2467 = vsub.f32 %v2435, %v2455
        %v2468 = vsub.f32 %v2436, %v2458
        %v2469 = vsub.f32 %v2437, %v2461
        %v2470 = vmul.f32 %v2462, 1.442695
        %v2471 = vpow.pop %v2470
        %v2472 = vmul.f32 %v2463, 1.442695
        %v2473 = vpow.pop %v2472
        %v2474 = vmul.f32 %v2464, 1.442695
        %v2475 = vpow.pop %v2474
        %v2476 = vmul.f32 %v2465, 1.442695
        %v2477 = vpow.pop %v2476
        %v2478 = vmul.f32 %v2466, 1.442695
        %v2479 = vpow.pop %v2478
        %v2480 = vmul.f32 %v2467, 1.442695
        %v2481 = vpow.pop %v2480
        %v2482 = vmul.f32 %v2468, 1.442695
        %v2483 = vpow.pop %v2482
        %v2484 = vmul.f32 %v2469, 1.442695
        %v2485 = vpow.pop %v2484
        %v2486 = vsel %vm583, %v2471, 0.0
        %2487 = vadd.xlane.f32.xlu0 %v2486
        %v2488 = vpop.xlane.xlu0 %2487
        %v2489 = vsel %vm583, %v2473, 0.0
        %2490 = vadd.xlane.f32.xlu0 %v2489
        %v2491 = vpop.xlane.xlu0 %2490
        %v2492 = vsel %vm583, %v2475, 0.0
        %2493 = vadd.xlane.f32.xlu0 %v2492
        %v2494 = vpop.xlane.xlu0 %2493
        %v2495 = vsel %vm583, %v2477, 0.0
        %2496 = vadd.xlane.f32.xlu0 %v2495
        %v2497 = vpop.xlane.xlu0 %2496
        %v2498 = vsel %vm583, %v2479, 0.0
        %2499 = vadd.xlane.f32.xlu0 %v2498
        %v2500 = vpop.xlane.xlu0 %2499
        %v2501 = vsel %vm583, %v2481, 0.0
        %2502 = vadd.xlane.f32.xlu0 %v2501
        %v2503 = vpop.xlane.xlu0 %2502
        %v2504 = vsel %vm583, %v2483, 0.0
        %2505 = vadd.xlane.f32.xlu0 %v2504
        %v2506 = vpop.xlane.xlu0 %2505
        %v2507 = vsel %vm583, %v2485, 0.0
        %2508 = vadd.xlane.f32.xlu0 %v2507
        %v2509 = vpop.xlane.xlu0 %2508
        %v2510 = vlog2.pop %v2488
        %v2511 = vmul.f32 %v2510, 0.6931472
        %v2512 = vlog2.pop %v2491
        %v2513 = vmul.f32 %v2512, 0.6931472
        %v2514 = vlog2.pop %v2494
        %v2515 = vmul.f32 %v2514, 0.6931472
        %v2516 = vlog2.pop %v2497
        %v2517 = vmul.f32 %v2516, 0.6931472
        %v2518 = vlog2.pop %v2500
        %v2519 = vmul.f32 %v2518, 0.6931472
        %v2520 = vlog2.pop %v2503
        %v2521 = vmul.f32 %v2520, 0.6931472
        %v2522 = vlog2.pop %v2506
        %v2523 = vmul.f32 %v2522, 0.6931472
        %v2524 = vlog2.pop %v2509
        %v2525 = vmul.f32 %v2524, 0.6931472
        %v2526 = vadd.f32 %v2440, %v2511
        %v2527 = vadd.f32 %v2443, %v2513
        %v2528 = vadd.f32 %v2446, %v2515
        %v2529 = vadd.f32 %v2449, %v2517
        %v2530 = vadd.f32 %v2452, %v2519
        %v2531 = vadd.f32 %v2455, %v2521
        %v2532 = vadd.f32 %v2458, %v2523
        %v2533 = vadd.f32 %v2461, %v2525
        %s2534 = ssub.f32 0.0, %s2413
        %v2535 = vstv %s2534
        %v2536 = vmul.f32 %v2535, %v2526
        %v2537 = vmul.f32 %v2535, %v2527
        %v2538 = vmul.f32 %v2535, %v2528
        %v2539 = vmul.f32 %v2535, %v2529
        %v2540 = vmul.f32 %v2535, %v2530
        %v2541 = vmul.f32 %v2535, %v2531
        %v2542 = vmul.f32 %v2535, %v2532
        %v2543 = vmul.f32 %v2535, %v2533
        %2544 = vxpose.xlu0.b32.start [1/16] %v2536, 128
        %2545 = vxpose.xlu0.b32.cont [2/16] %v2537, 128
        %2546 = vxpose.xlu0.b32.cont [3/16] %v2538, 128
        %2547 = vxpose.xlu0.b32.cont [4/16] %v2539, 128
        %2548 = vxpose.xlu0.b32.cont [5/16] %v2540, 128
        %2549 = vxpose.xlu0.b32.cont [6/16] %v2541, 128
        %2550 = vxpose.xlu0.b32.cont [7/16] %v2542, 128
        %2551 = vxpose.xlu0.b32.cont [8/16] %v2543, 128
        %2552 = vxpose.xlu0.b32.cont [9/16] 0.0, 128
        %2553 = vxpose.xlu0.b32.cont [10/16] 0.0, 128
        %2554 = vxpose.xlu0.b32.cont [11/16] 0.0, 128
        %2555 = vxpose.xlu0.b32.cont [12/16] 0.0, 128
        %2556 = vxpose.xlu0.b32.cont [13/16] 0.0, 128
        %2557 = vxpose.xlu0.b32.cont [14/16] 0.0, 128
        %2558 = vxpose.xlu0.b32.cont [15/16] 0.0, 128
        %2559 = vxpose.xlu0.b32.end [16/16] 0.0, 128
        %v2560 = vpop.trf.xlu0
        %v2561 = vpop.trf.xlu0
        %v2562 = vpop.trf.xlu0
        %v2563 = vpop.trf.xlu0
        %v2564 = vpop.trf.xlu0
        %v2565 = vpop.trf.xlu0
        %v2566 = vpop.trf.xlu0
        %v2567 = vpop.trf.xlu0
        %v2568 = vpop.trf.xlu0
        %v2569 = vpop.trf.xlu0
        %v2570 = vpop.trf.xlu0
        %v2571 = vpop.trf.xlu0
        %v2572 = vpop.trf.xlu0
        %v2573 = vpop.trf.xlu0
        %v2574 = vpop.trf.xlu0
        %v2575 = vpop.trf.xlu0
        %v2576 = vmul.f32 %v1732, %v2415
        %v2577 = vadd.f32 %v2576, -4.158883
        %v2578 = vmul.f32 %v1246, %v2415
        %v2579 = vmul.f32 %v1247, %v2415
        %v2580 = vmul.f32 %v1248, %v2415
        %v2581 = vmul.f32 %v1249, %v2415
        %v2582 = vmul.f32 %v1250, %v2415
        %v2583 = vmul.f32 %v1251, %v2415
        %v2584 = vmul.f32 %v1252, %v2415
        %v2585 = vmul.f32 %v1253, %v2415
        %v2586 = vlaneseq
        %v2587 = vshrl.u32 %v2586, 7
        %v2588 = vsub.s32 0, %v2587
        %v2589 = vrot.slane %v2577, %v2588
        %v2590 = vsub.f32 %v2589, %v2578
        %v2591 = vsub.f32 %v2589, %v2579
        %v2592 = vsub.f32 %v2589, %v2580
        %v2593 = vsub.f32 %v2589, %v2581
        %v2594 = vsub.f32 %v2589, %v2582
        %v2595 = vsub.f32 %v2589, %v2583
        %v2596 = vsub.f32 %v2589, %v2584
        %v2597 = vsub.f32 %v2589, %v2585
        %v2598 = vsel %vm583, %v2590, -inf
        %2599 = vmax.xlane.f32.xlu0 %v2598
        %v2600 = vpop.xlane.xlu0 %2599
        %v2601 = vsel %vm583, %v2591, -inf
        %2602 = vmax.xlane.f32.xlu0 %v2601
        %v2603 = vpop.xlane.xlu0 %2602
        %v2604 = vsel %vm583, %v2592, -inf
        %2605 = vmax.xlane.f32.xlu0 %v2604
        %v2606 = vpop.xlane.xlu0 %2605
        %v2607 = vsel %vm583, %v2593, -inf
        %2608 = vmax.xlane.f32.xlu0 %v2607
        %v2609 = vpop.xlane.xlu0 %2608
        %v2610 = vsel %vm583, %v2594, -inf
        %2611 = vmax.xlane.f32.xlu0 %v2610
        %v2612 = vpop.xlane.xlu0 %2611
        %v2613 = vsel %vm583, %v2595, -inf
        %2614 = vmax.xlane.f32.xlu0 %v2613
        %v2615 = vpop.xlane.xlu0 %2614
        %v2616 = vsel %vm583, %v2596, -inf
        %2617 = vmax.xlane.f32.xlu0 %v2616
        %v2618 = vpop.xlane.xlu0 %2617
        %v2619 = vsel %vm583, %v2597, -inf
        %2620 = vmax.xlane.f32.xlu0 %v2619
        %v2621 = vpop.xlane.xlu0 %2620
        %v2622 = vsub.f32 %v2590, %v2600
        %v2623 = vsub.f32 %v2591, %v2603
        %v2624 = vsub.f32 %v2592, %v2606
        %v2625 = vsub.f32 %v2593, %v2609
        %v2626 = vsub.f32 %v2594, %v2612
        %v2627 = vsub.f32 %v2595, %v2615
        %v2628 = vsub.f32 %v2596, %v2618
        %v2629 = vsub.f32 %v2597, %v2621
        %v2630 = vmul.f32 %v2622, 1.442695
        %v2631 = vpow.pop %v2630
        %v2632 = vmul.f32 %v2623, 1.442695
        %v2633 = vpow.pop %v2632
        %v2634 = vmul.f32 %v2624, 1.442695
        %v2635 = vpow.pop %v2634
        %v2636 = vmul.f32 %v2625, 1.442695
        %v2637 = vpow.pop %v2636
        %v2638 = vmul.f32 %v2626, 1.442695
        %v2639 = vpow.pop %v2638
        %v2640 = vmul.f32 %v2627, 1.442695
        %v2641 = vpow.pop %v2640
        %v2642 = vmul.f32 %v2628, 1.442695
        %v2643 = vpow.pop %v2642
        %v2644 = vmul.f32 %v2629, 1.442695
        %v2645 = vpow.pop %v2644
        %v2646 = vsel %vm583, %v2631, 0.0
        %2647 = vadd.xlane.f32.xlu0 %v2646
        %v2648 = vpop.xlane.xlu0 %2647
        %v2649 = vsel %vm583, %v2633, 0.0
        %2650 = vadd.xlane.f32.xlu0 %v2649
        %v2651 = vpop.xlane.xlu0 %2650
        %v2652 = vsel %vm583, %v2635, 0.0
        %2653 = vadd.xlane.f32.xlu0 %v2652
        %v2654 = vpop.xlane.xlu0 %2653
        %v2655 = vsel %vm583, %v2637, 0.0
        %2656 = vadd.xlane.f32.xlu0 %v2655
        %v2657 = vpop.xlane.xlu0 %2656
        %v2658 = vsel %vm583, %v2639, 0.0
        %2659 = vadd.xlane.f32.xlu0 %v2658
        %v2660 = vpop.xlane.xlu0 %2659
        %v2661 = vsel %vm583, %v2641, 0.0
        %2662 = vadd.xlane.f32.xlu0 %v2661
        %v2663 = vpop.xlane.xlu0 %2662
        %v2664 = vsel %vm583, %v2643, 0.0
        %2665 = vadd.xlane.f32.xlu0 %v2664
        %v2666 = vpop.xlane.xlu0 %2665
        %v2667 = vsel %vm583, %v2645, 0.0
        %2668 = vadd.xlane.f32.xlu0 %v2667
        %v2669 = vpop.xlane.xlu0 %2668
        %v2670 = vlog2.pop %v2648
        %v2671 = vmul.f32 %v2670, 0.6931472
        %v2672 = vlog2.pop %v2651
        %v2673 = vmul.f32 %v2672, 0.6931472
        %v2674 = vlog2.pop %v2654
        %v2675 = vmul.f32 %v2674, 0.6931472
        %v2676 = vlog2.pop %v2657
        %v2677 = vmul.f32 %v2676, 0.6931472
        %v2678 = vlog2.pop %v2660
        %v2679 = vmul.f32 %v2678, 0.6931472
        %v2680 = vlog2.pop %v2663
        %v2681 = vmul.f32 %v2680, 0.6931472
        %v2682 = vlog2.pop %v2666
        %v2683 = vmul.f32 %v2682, 0.6931472
        %v2684 = vlog2.pop %v2669
        %v2685 = vmul.f32 %v2684, 0.6931472
        %v2686 = vadd.f32 %v2600, %v2671
        %v2687 = vadd.f32 %v2603, %v2673
        %v2688 = vadd.f32 %v2606, %v2675
        %v2689 = vadd.f32 %v2609, %v2677
        %v2690 = vadd.f32 %v2612, %v2679
        %v2691 = vadd.f32 %v2615, %v2681
        %v2692 = vadd.f32 %v2618, %v2683
        %v2693 = vadd.f32 %v2621, %v2685
        %v2694 = vmul.f32 %v2535, %v2686
        %v2695 = vmul.f32 %v2535, %v2687
        %v2696 = vmul.f32 %v2535, %v2688
        %v2697 = vmul.f32 %v2535, %v2689
        %v2698 = vmul.f32 %v2535, %v2690
        %v2699 = vmul.f32 %v2535, %v2691
        %v2700 = vmul.f32 %v2535, %v2692
        %v2701 = vmul.f32 %v2535, %v2693
        %2702 = vxpose.xlu0.b32.start [1/16] %v2694, 128
        %2703 = vxpose.xlu0.b32.cont [2/16] %v2695, 128
        %2704 = vxpose.xlu0.b32.cont [3/16] %v2696, 128
        %2705 = vxpose.xlu0.b32.cont [4/16] %v2697, 128
        %2706 = vxpose.xlu0.b32.cont [5/16] %v2698, 128
        %2707 = vxpose.xlu0.b32.cont [6/16] %v2699, 128
        %2708 = vxpose.xlu0.b32.cont [7/16] %v2700, 128
        %2709 = vxpose.xlu0.b32.cont [8/16] %v2701, 128
        %2710 = vxpose.xlu0.b32.cont [9/16] 0.0, 128
        %2711 = vxpose.xlu0.b32.cont [10/16] 0.0, 128
        %2712 = vxpose.xlu0.b32.cont [11/16] 0.0, 128
        %2713 = vxpose.xlu0.b32.cont [12/16] 0.0, 128
        %2714 = vxpose.xlu0.b32.cont [13/16] 0.0, 128
        %2715 = vxpose.xlu0.b32.cont [14/16] 0.0, 128
        %2716 = vxpose.xlu0.b32.cont [15/16] 0.0, 128
        %2717 = vxpose.xlu0.b32.end [16/16] 0.0, 128
        %v2718 = vpop.trf.xlu0
        %v2719 = vpop.trf.xlu0
        %v2720 = vpop.trf.xlu0
        %v2721 = vpop.trf.xlu0
        %v2722 = vpop.trf.xlu0
        %v2723 = vpop.trf.xlu0
        %v2724 = vpop.trf.xlu0
        %v2725 = vpop.trf.xlu0
        %v2726 = vpop.trf.xlu0
        %v2727 = vpop.trf.xlu0
        %v2728 = vpop.trf.xlu0
        %v2729 = vpop.trf.xlu0
        %v2730 = vpop.trf.xlu0
        %v2731 = vpop.trf.xlu0
        %v2732 = vpop.trf.xlu0
        %v2733 = vpop.trf.xlu0
        %v2734 = vmul.f32 %v1734, %v2415
        %v2735 = vadd.f32 %v2734, -4.158883
        %v2736 = vmul.f32 %v1406, %v2415
        %v2737 = vmul.f32 %v1407, %v2415
        %v2738 = vmul.f32 %v1408, %v2415
        %v2739 = vmul.f32 %v1409, %v2415
        %v2740 = vmul.f32 %v1410, %v2415
        %v2741 = vmul.f32 %v1411, %v2415
        %v2742 = vmul.f32 %v1412, %v2415
        %v2743 = vmul.f32 %v1413, %v2415
        %v2744 = vlaneseq
        %v2745 = vshrl.u32 %v2744, 7
        %v2746 = vsub.s32 0, %v2745
        %v2747 = vrot.slane %v2735, %v2746
        %v2748 = vsub.f32 %v2747, %v2736
        %v2749 = vsub.f32 %v2747, %v2737
        %v2750 = vsub.f32 %v2747, %v2738
        %v2751 = vsub.f32 %v2747, %v2739
        %v2752 = vsub.f32 %v2747, %v2740
        %v2753 = vsub.f32 %v2747, %v2741
        %v2754 = vsub.f32 %v2747, %v2742
        %v2755 = vsub.f32 %v2747, %v2743
        %v2756 = vsel %vm583, %v2748, -inf
        %2757 = vmax.xlane.f32.xlu0 %v2756
        %v2758 = vpop.xlane.xlu0 %2757
        %v2759 = vsel %vm583, %v2749, -inf
        %2760 = vmax.xlane.f32.xlu0 %v2759
        %v2761 = vpop.xlane.xlu0 %2760
        %v2762 = vsel %vm583, %v2750, -inf
        %2763 = vmax.xlane.f32.xlu0 %v2762
        %v2764 = vpop.xlane.xlu0 %2763
        %v2765 = vsel %vm583, %v2751, -inf
        %2766 = vmax.xlane.f32.xlu0 %v2765
        %v2767 = vpop.xlane.xlu0 %2766
        %v2768 = vsel %vm583, %v2752, -inf
        %2769 = vmax.xlane.f32.xlu0 %v2768
        %v2770 = vpop.xlane.xlu0 %2769
        %v2771 = vsel %vm583, %v2753, -inf
        %2772 = vmax.xlane.f32.xlu0 %v2771
        %v2773 = vpop.xlane.xlu0 %2772
        %v2774 = vsel %vm583, %v2754, -inf
        %2775 = vmax.xlane.f32.xlu0 %v2774
        %v2776 = vpop.xlane.xlu0 %2775
        %v2777 = vsel %vm583, %v2755, -inf
        %2778 = vmax.xlane.f32.xlu0 %v2777
        %v2779 = vpop.xlane.xlu0 %2778
        %v2780 = vsub.f32 %v2748, %v2758
        %v2781 = vsub.f32 %v2749, %v2761
        %v2782 = vsub.f32 %v2750, %v2764
        %v2783 = vsub.f32 %v2751, %v2767
        %v2784 = vsub.f32 %v2752, %v2770
        %v2785 = vsub.f32 %v2753, %v2773
        %v2786 = vsub.f32 %v2754, %v2776
        %v2787 = vsub.f32 %v2755, %v2779
        %v2788 = vmul.f32 %v2780, 1.442695
        %v2789 = vpow.pop %v2788
        %v2790 = vmul.f32 %v2781, 1.442695
        %v2791 = vpow.pop %v2790
        %v2792 = vmul.f32 %v2782, 1.442695
        %v2793 = vpow.pop %v2792
        %v2794 = vmul.f32 %v2783, 1.442695
        %v2795 = vpow.pop %v2794
        %v2796 = vmul.f32 %v2784, 1.442695
        %v2797 = vpow.pop %v2796
        %v2798 = vmul.f32 %v2785, 1.442695
        %v2799 = vpow.pop %v2798
        %v2800 = vmul.f32 %v2786, 1.442695
        %v2801 = vpow.pop %v2800
        %v2802 = vmul.f32 %v2787, 1.442695
        %v2803 = vpow.pop %v2802
        %v2804 = vsel %vm583, %v2789, 0.0
        %2805 = vadd.xlane.f32.xlu0 %v2804
        %v2806 = vpop.xlane.xlu0 %2805
        %v2807 = vsel %vm583, %v2791, 0.0
        %2808 = vadd.xlane.f32.xlu0 %v2807
        %v2809 = vpop.xlane.xlu0 %2808
        %v2810 = vsel %vm583, %v2793, 0.0
        %2811 = vadd.xlane.f32.xlu0 %v2810
        %v2812 = vpop.xlane.xlu0 %2811
        %v2813 = vsel %vm583, %v2795, 0.0
        %2814 = vadd.xlane.f32.xlu0 %v2813
        %v2815 = vpop.xlane.xlu0 %2814
        %v2816 = vsel %vm583, %v2797, 0.0
        %2817 = vadd.xlane.f32.xlu0 %v2816
        %v2818 = vpop.xlane.xlu0 %2817
        %v2819 = vsel %vm583, %v2799, 0.0
        %2820 = vadd.xlane.f32.xlu0 %v2819
        %v2821 = vpop.xlane.xlu0 %2820
        %v2822 = vsel %vm583, %v2801, 0.0
        %2823 = vadd.xlane.f32.xlu0 %v2822
        %v2824 = vpop.xlane.xlu0 %2823
        %v2825 = vsel %vm583, %v2803, 0.0
        %2826 = vadd.xlane.f32.xlu0 %v2825
        %v2827 = vpop.xlane.xlu0 %2826
        %v2828 = vlog2.pop %v2806
        %v2829 = vmul.f32 %v2828, 0.6931472
        %v2830 = vlog2.pop %v2809
        %v2831 = vmul.f32 %v2830, 0.6931472
        %v2832 = vlog2.pop %v2812
        %v2833 = vmul.f32 %v2832, 0.6931472
        %v2834 = vlog2.pop %v2815
        %v2835 = vmul.f32 %v2834, 0.6931472
        %v2836 = vlog2.pop %v2818
        %v2837 = vmul.f32 %v2836, 0.6931472
        %v2838 = vlog2.pop %v2821
        %v2839 = vmul.f32 %v2838, 0.6931472
        %v2840 = vlog2.pop %v2824
        %v2841 = vmul.f32 %v2840, 0.6931472
        %v2842 = vlog2.pop %v2827
        %v2843 = vmul.f32 %v2842, 0.6931472
        %v2844 = vadd.f32 %v2758, %v2829
        %v2845 = vadd.f32 %v2761, %v2831
        %v2846 = vadd.f32 %v2764, %v2833
        %v2847 = vadd.f32 %v2767, %v2835
        %v2848 = vadd.f32 %v2770, %v2837
        %v2849 = vadd.f32 %v2773, %v2839
        %v2850 = vadd.f32 %v2776, %v2841
        %v2851 = vadd.f32 %v2779, %v2843
        %v2852 = vmul.f32 %v2535, %v2844
        %v2853 = vmul.f32 %v2535, %v2845
        %v2854 = vmul.f32 %v2535, %v2846
        %v2855 = vmul.f32 %v2535, %v2847
        %v2856 = vmul.f32 %v2535, %v2848
        %v2857 = vmul.f32 %v2535, %v2849
        %v2858 = vmul.f32 %v2535, %v2850
        %v2859 = vmul.f32 %v2535, %v2851
        %2860 = vxpose.xlu0.b32.start [1/16] %v2852, 128
        %2861 = vxpose.xlu0.b32.cont [2/16] %v2853, 128
        %2862 = vxpose.xlu0.b32.cont [3/16] %v2854, 128
        %2863 = vxpose.xlu0.b32.cont [4/16] %v2855, 128
        %2864 = vxpose.xlu0.b32.cont [5/16] %v2856, 128
        %2865 = vxpose.xlu0.b32.cont [6/16] %v2857, 128
        %2866 = vxpose.xlu0.b32.cont [7/16] %v2858, 128
        %2867 = vxpose.xlu0.b32.cont [8/16] %v2859, 128
        %2868 = vxpose.xlu0.b32.cont [9/16] 0.0, 128
        %2869 = vxpose.xlu0.b32.cont [10/16] 0.0, 128
        %2870 = vxpose.xlu0.b32.cont [11/16] 0.0, 128
        %2871 = vxpose.xlu0.b32.cont [12/16] 0.0, 128
        %2872 = vxpose.xlu0.b32.cont [13/16] 0.0, 128
        %2873 = vxpose.xlu0.b32.cont [14/16] 0.0, 128
        %2874 = vxpose.xlu0.b32.cont [15/16] 0.0, 128
        %2875 = vxpose.xlu0.b32.end [16/16] 0.0, 128
        %v2876 = vpop.trf.xlu0
        %v2877 = vpop.trf.xlu0
        %v2878 = vpop.trf.xlu0
        %v2879 = vpop.trf.xlu0
        %v2880 = vpop.trf.xlu0
        %v2881 = vpop.trf.xlu0
        %v2882 = vpop.trf.xlu0
        %v2883 = vpop.trf.xlu0
        %v2884 = vpop.trf.xlu0
        %v2885 = vpop.trf.xlu0
        %v2886 = vpop.trf.xlu0
        %v2887 = vpop.trf.xlu0
        %v2888 = vpop.trf.xlu0
        %v2889 = vpop.trf.xlu0
        %v2890 = vpop.trf.xlu0
        %v2891 = vpop.trf.xlu0
        %v2892 = vmul.f32 %v1735, %v2415
        %v2893 = vadd.f32 %v2892, -4.158883
        %v2894 = vmul.f32 %v1566, %v2415
        %v2895 = vmul.f32 %v1567, %v2415
        %v2896 = vmul.f32 %v1568, %v2415
        %v2897 = vmul.f32 %v1569, %v2415
        %v2898 = vmul.f32 %v1570, %v2415
        %v2899 = vmul.f32 %v1571, %v2415
        %v2900 = vmul.f32 %v1572, %v2415
        %v2901 = vmul.f32 %v1573, %v2415
        %v2902 = vlaneseq
        %v2903 = vshrl.u32 %v2902, 7
        %v2904 = vsub.s32 0, %v2903
        %v2905 = vrot.slane %v2893, %v2904
        %v2906 = vsub.f32 %v2905, %v2894
        %v2907 = vsub.f32 %v2905, %v2895
        %v2908 = vsub.f32 %v2905, %v2896
        %v2909 = vsub.f32 %v2905, %v2897
        %v2910 = vsub.f32 %v2905, %v2898
        %v2911 = vsub.f32 %v2905, %v2899
        %v2912 = vsub.f32 %v2905, %v2900
        %v2913 = vsub.f32 %v2905, %v2901
        %v2914 = vsel %vm583, %v2906, -inf
        %2915 = vmax.xlane.f32.xlu0 %v2914
        %v2916 = vpop.xlane.xlu0 %2915
        %v2917 = vsel %vm583, %v2907, -inf
        %2918 = vmax.xlane.f32.xlu0 %v2917
        %v2919 = vpop.xlane.xlu0 %2918
        %v2920 = vsel %vm583, %v2908, -inf
        %2921 = vmax.xlane.f32.xlu0 %v2920
        %v2922 = vpop.xlane.xlu0 %2921
        %v2923 = vsel %vm583, %v2909, -inf
        %2924 = vmax.xlane.f32.xlu0 %v2923
        %v2925 = vpop.xlane.xlu0 %2924
        %v2926 = vsel %vm583, %v2910, -inf
        %2927 = vmax.xlane.f32.xlu0 %v2926
        %v2928 = vpop.xlane.xlu0 %2927
        %v2929 = vsel %vm583, %v2911, -inf
        %2930 = vmax.xlane.f32.xlu0 %v2929
        %v2931 = vpop.xlane.xlu0 %2930
        %v2932 = vsel %vm583, %v2912, -inf
        %2933 = vmax.xlane.f32.xlu0 %v2932
        %v2934 = vpop.xlane.xlu0 %2933
        %v2935 = vsel %vm583, %v2913, -inf
        %2936 = vmax.xlane.f32.xlu0 %v2935
        %v2937 = vpop.xlane.xlu0 %2936
        %v2938 = vsub.f32 %v2906, %v2916
        %v2939 = vsub.f32 %v2907, %v2919
        %v2940 = vsub.f32 %v2908, %v2922
        %v2941 = vsub.f32 %v2909, %v2925
        %v2942 = vsub.f32 %v2910, %v2928
        %v2943 = vsub.f32 %v2911, %v2931
        %v2944 = vsub.f32 %v2912, %v2934
        %v2945 = vsub.f32 %v2913, %v2937
        %v2946 = vmul.f32 %v2938, 1.442695
        %v2947 = vpow.pop %v2946
        %v2948 = vmul.f32 %v2939, 1.442695
        %v2949 = vpow.pop %v2948
        %v2950 = vmul.f32 %v2940, 1.442695
        %v2951 = vpow.pop %v2950
        %v2952 = vmul.f32 %v2941, 1.442695
        %v2953 = vpow.pop %v2952
        %v2954 = vmul.f32 %v2942, 1.442695
        %v2955 = vpow.pop %v2954
        %v2956 = vmul.f32 %v2943, 1.442695
        %v2957 = vpow.pop %v2956
        %v2958 = vmul.f32 %v2944, 1.442695
        %v2959 = vpow.pop %v2958
        %v2960 = vmul.f32 %v2945, 1.442695
        %v2961 = vpow.pop %v2960
        %v2962 = vsel %vm583, %v2947, 0.0
        %2963 = vadd.xlane.f32.xlu0 %v2962
        %v2964 = vpop.xlane.xlu0 %2963
        %v2965 = vsel %vm583, %v2949, 0.0
        %2966 = vadd.xlane.f32.xlu0 %v2965
        %v2967 = vpop.xlane.xlu0 %2966
        %v2968 = vsel %vm583, %v2951, 0.0
        %2969 = vadd.xlane.f32.xlu0 %v2968
        %v2970 = vpop.xlane.xlu0 %2969
        %v2971 = vsel %vm583, %v2953, 0.0
        %2972 = vadd.xlane.f32.xlu0 %v2971
        %v2973 = vpop.xlane.xlu0 %2972
        %v2974 = vsel %vm583, %v2955, 0.0
        %2975 = vadd.xlane.f32.xlu0 %v2974
        %v2976 = vpop.xlane.xlu0 %2975
        %v2977 = vsel %vm583, %v2957, 0.0
        %2978 = vadd.xlane.f32.xlu0 %v2977
        %v2979 = vpop.xlane.xlu0 %2978
        %v2980 = vsel %vm583, %v2959, 0.0
        %2981 = vadd.xlane.f32.xlu0 %v2980
        %v2982 = vpop.xlane.xlu0 %2981
        %v2983 = vsel %vm583, %v2961, 0.0
        %2984 = vadd.xlane.f32.xlu0 %v2983
        %v2985 = vpop.xlane.xlu0 %2984
        %v2986 = vlog2.pop %v2964
        %v2987 = vmul.f32 %v2986, 0.6931472
        %v2988 = vlog2.pop %v2967
        %v2989 = vmul.f32 %v2988, 0.6931472
        %v2990 = vlog2.pop %v2970
        %v2991 = vmul.f32 %v2990, 0.6931472
        %v2992 = vlog2.pop %v2973
        %v2993 = vmul.f32 %v2992, 0.6931472
        %v2994 = vlog2.pop %v2976
        %v2995 = vmul.f32 %v2994, 0.6931472
        %v2996 = vlog2.pop %v2979
        %v2997 = vmul.f32 %v2996, 0.6931472
        %v2998 = vlog2.pop %v2982
        %v2999 = vmul.f32 %v2998, 0.6931472
        %v3000 = vlog2.pop %v2985
        %v3001 = vmul.f32 %v3000, 0.6931472
        %v3002 = vadd.f32 %v2916, %v2987
        %v3003 = vadd.f32 %v2919, %v2989
        %v3004 = vadd.f32 %v2922, %v2991
        %v3005 = vadd.f32 %v2925, %v2993
        %v3006 = vadd.f32 %v2928, %v2995
        %v3007 = vadd.f32 %v2931, %v2997
        %v3008 = vadd.f32 %v2934, %v2999
        %v3009 = vadd.f32 %v2937, %v3001
        %v3010 = vmul.f32 %v2535, %v3002
        %v3011 = vmul.f32 %v2535, %v3003
        %v3012 = vmul.f32 %v2535, %v3004
        %v3013 = vmul.f32 %v2535, %v3005
        %v3014 = vmul.f32 %v2535, %v3006
        %v3015 = vmul.f32 %v2535, %v3007
        %v3016 = vmul.f32 %v2535, %v3008
        %v3017 = vmul.f32 %v2535, %v3009
        %3018 = vxpose.xlu0.b32.start [1/16] %v3010, 128
        %3019 = vxpose.xlu0.b32.cont [2/16] %v3011, 128
        %3020 = vxpose.xlu0.b32.cont [3/16] %v3012, 128
        %3021 = vxpose.xlu0.b32.cont [4/16] %v3013, 128
        %3022 = vxpose.xlu0.b32.cont [5/16] %v3014, 128
        %3023 = vxpose.xlu0.b32.cont [6/16] %v3015, 128
        %3024 = vxpose.xlu0.b32.cont [7/16] %v3016, 128
        %3025 = vxpose.xlu0.b32.cont [8/16] %v3017, 128
        %3026 = vxpose.xlu0.b32.cont [9/16] 0.0, 128
        %3027 = vxpose.xlu0.b32.cont [10/16] 0.0, 128
        %3028 = vxpose.xlu0.b32.cont [11/16] 0.0, 128
        %3029 = vxpose.xlu0.b32.cont [12/16] 0.0, 128
        %3030 = vxpose.xlu0.b32.cont [13/16] 0.0, 128
        %3031 = vxpose.xlu0.b32.cont [14/16] 0.0, 128
        %3032 = vxpose.xlu0.b32.cont [15/16] 0.0, 128
        %3033 = vxpose.xlu0.b32.end [16/16] 0.0, 128
        %v3034 = vpop.trf.xlu0
        %v3035 = vpop.trf.xlu0
        %v3036 = vpop.trf.xlu0
        %v3037 = vpop.trf.xlu0
        %v3038 = vpop.trf.xlu0
        %v3039 = vpop.trf.xlu0
        %v3040 = vpop.trf.xlu0
        %v3041 = vpop.trf.xlu0
        %v3042 = vpop.trf.xlu0
        %v3043 = vpop.trf.xlu0
        %v3044 = vpop.trf.xlu0
        %v3045 = vpop.trf.xlu0
        %v3046 = vpop.trf.xlu0
        %v3047 = vpop.trf.xlu0
        %v3048 = vpop.trf.xlu0
        %v3049 = vpop.trf.xlu0
        %v3050 = vsub.f32 %v2560, %v2876
        %vm3051 = vcmask 516096
        %v3052 = vsel %vm3051, %v3050, 0.0
        %3053 = vadd.xlane.f32.xlu0 %v3052
        %v3054 = vpop.xlane.xlu0 %3053
        %v3055 = vmul.f32 %v3054, 0.015625
        %v3056 = vsub.f32 %v2718, %v3034
        %v3057 = vsel %vm3051, %v3056, 0.0
        %3058 = vadd.xlane.f32.xlu0 %v3057
        %v3059 = vpop.xlane.xlu0 %3058
        %v3060 = vmul.f32 %v3059, 0.015625
        %v3061 = vadd.f32 %v3055, %v3060
        %vm3062 = vcmask 0
        %3063 = vst.msk [vmem:[%s240] sm:$0x1] %vm3062, %v3061
        %p3064 = scmp.lt.s32.totalorder %s17, 1
        %s3065 = scalar_select %p3064, %s17, 1
        %s3066 = scalar_lea.vmem %s4, %s3065
        // Predicated region
        $region52: #{_sinkhorn_pallas.1} parent=35 // pred_check
          %p3067 = pneg %p129
        $region53: #{_sinkhorn_pallas.1} parent=35 // pred_check_branch
          %3069 = sbr.rel (%p3067) target = $region55
        $region54: #{_sinkhorn_pallas.1} parent=35 // pred_region
          _
        $region55: #{_sinkhorn_pallas.1} parent=35 // pred_fallthru
          _
      $region36: #{_sinkhorn_pallas.1} parent=5 // pred_fallthru
        _
      %p3070 = scmp.le.s32.totalorder 2, %s12
      // Predicated region
      $region56: #{_sinkhorn_pallas.1} parent=5 // pred_check
        %p3071 = pneg %p3070
      $region57: #{_sinkhorn_pallas.1} parent=5 // pred_check_branch
        %3073 = sbr.rel (%p3071) target = $region59
      $region58: #{_sinkhorn_pallas.1} parent=5 // pred_region
        %s3074 = ssub.s32 %s12, 2
        // Predicated region
        $region60: #{_sinkhorn_pallas.1} parent=58 // pred_check
          %p3075 = pneg %p135
        $region61: #{_sinkhorn_pallas.1} parent=58 // pred_check_branch
          %3077 = sbr.rel (%p3075) target = $region63
        $region62: #{_sinkhorn_pallas.1} parent=58 // pred_region
          %p3078 = scmp.lt.s32.totalorder %s18, 1
          %s3079 = scalar_select %p3078, %s18, 1
          %s3080 = scalar_lea.vmem %s4, %s3079
        $region63: #{_sinkhorn_pallas.1} parent=58 // pred_fallthru
          _
      $region59: #{_sinkhorn_pallas.1} parent=5 // pred_fallthru
        _
    $region6: #{_sinkhorn_pallas.1} parent=1 // loop_footer
      %s16 = sadd.s32 1, %s12
    $region7: #{_sinkhorn_pallas.1} parent=1 // loop_footer_branch
      %11 = sbr.rel target = $region3
    $region8: #{_sinkhorn_pallas.1} parent=1 // loop_exit
      _
    %3081 = vsyncpa [#allocation7], 1
    %s3082 = scalar_lea.sflag [#allocation7], 1
    %3083 = vsyncpa %s3082, 1
    %3084 = vsyncpa [#allocation9], 1

</llo_original>
